<compile_context>
chip_gen: v6e
topology: v6e:2x2x1
jax: 0.10.0
libtpu: 0.0.40
codegen_flags: <defaults>
</compile_context>

<pallas_src>
import functools
import numpy as np
import jax
import jax.numpy as jnp
from jax import lax
from jax.experimental import pallas as pl
from jax.experimental.pallas import tpu as pltpu

EPS = 1e-5  # PyTorch BatchNorm2d default eps


# --------------------------------------------------------------------------- kernel 1
def upsample_stats_kernel(x_ref, ups_ref, u_ref, s1_ref):
    """One image: u_flat = x_flat @ kron(ah, aw) (bf16 in, f32 acc) + BN1 sum/sumsq."""
    u = jnp.dot(x_ref[...], ups_ref[...], preferred_element_type=jnp.float32)
    u_ref[...] = u
    s1_ref[:, 0:1] = jnp.sum(u, axis=1, keepdims=True)
    s1_ref[:, 1:2] = jnp.sum(u * u, axis=1, keepdims=True)


# --------------------------------------------------------------------------- kernel 2
def bn1_conv_stats_kernel(u_ref, a1_ref, c1_ref, w_ref, z_ref, s2_ref, *, h2, w2):
    """One image: BN1 affine -> 2x2 'same' conv (roll+mask taps, MXU channel mix)
    -> BN2 sum/sumsq.  Conv bias omitted: cancelled by training-mode BN2."""
    L = h2 * w2
    y = u_ref[...] * a1_ref[...] + c1_ref[...]                        # (Cin, L) f32

    idx = lax.broadcasted_iota(jnp.int32, y.shape, 1)
    col_ok = (idx % w2) != (w2 - 1)          # kw=1 taps: zero at the right border
    row_ok = idx < (h2 - 1) * w2             # kh=1 taps: zero at the bottom border

    t01 = jnp.where(col_ok, pltpu.roll(y, L - 1, 1), 0.0)             # y[p + 1]
    t10 = jnp.where(row_ok, pltpu.roll(y, L - w2, 1), 0.0)            # y[p + W2]
    t11 = jnp.where(col_ok & row_ok, pltpu.roll(y, L - w2 - 1, 1), 0.0)

    z = (jnp.dot(w_ref[0], y, preferred_element_type=jnp.float32)
         + jnp.dot(w_ref[1], t01, preferred_element_type=jnp.float32)
         + jnp.dot(w_ref[2], t10, preferred_element_type=jnp.float32)
         + jnp.dot(w_ref[3], t11, preferred_element_type=jnp.float32))
    z_ref[...] = z
    s2_ref[:, 0:1] = jnp.sum(z, axis=1, keepdims=True)
    s2_ref[:, 1:2] = jnp.sum(z * z, axis=1, keepdims=True)


# --------------------------------------------------------------------------- kernel 3
def bn2_apply_kernel(z_ref, a2_ref, c2_ref, o_ref):
    o_ref[...] = z_ref[...] * a2_ref[...] + c2_ref[...]


# --------------------------------------------------------------------------- wrapper
def upconv_forward(x_nchw, params):
    N, Cin, H, W = x_nchw.shape
    H2, W2 = 2 * H, 2 * W
    L = H2 * W2
    Cout = params["g2"].shape[0]

    cp = pltpu.CompilerParams(dimension_semantics=("parallel",),
                              vmem_limit_bytes=32 * 1024 * 1024)

    x_flat = x_nchw.reshape(N, Cin, H * W).astype(jnp.bfloat16)
    ups = params["upsample_mat"].astype(jnp.bfloat16)                 # (H*W, L)

    # ---- stage 1: bilinear upsample (single MXU matmul / image) + BN1 batch stats --
    u, s1 = pl.pallas_call(
        upsample_stats_kernel,
        grid=(N,),
        in_specs=[
            pl.BlockSpec((None, Cin, H * W), lambda n: (n, 0, 0)),    # x (bf16, flat)
            pl.BlockSpec((H * W, L), lambda n: (0, 0)),               # kron(ah, aw)
        ],
        out_specs=[
            pl.BlockSpec((None, Cin, L), lambda n: (n, 0, 0)),        # u (lane-dense)
            pl.BlockSpec((None, Cin, 2), lambda n: (n, 0, 0)),        # per-image stats
        ],
        out_shape=[
            jax.ShapeDtypeStruct((N, Cin, L), jnp.float32),
            jax.ShapeDtypeStruct((N, Cin, 2), jnp.float32),
        ],
        compiler_params=cp,
    )(x_flat, ups)

    cnt = jnp.float32(N * L)
    # TODO(synk): E[x^2]-E[x]^2 in f32 can cancel badly when |mean| >> std; switch to
    # a shifted / Welford accumulation if that regime ever matters.
    s1t = jnp.sum(s1, axis=0)                                         # (Cin, 2)
    mean1 = s1t[:, 0] / cnt
    var1 = s1t[:, 1] / cnt - mean1 * mean1
    scale1 = params["g1"] * lax.rsqrt(var1 + EPS)
    a1 = scale1.reshape(Cin, 1)
    c1 = (params["b1"] - mean1 * scale1).reshape(Cin, 1)

    # ---- stage 2: BN1 affine + 2x2 'same' conv + BN2 batch stats --------------------
    z, s2 = pl.pallas_call(
        functools.partial(bn1_conv_stats_kernel, h2=H2, w2=W2),
        grid=(N,),
        in_specs=[
            pl.BlockSpec((None, Cin, L), lambda n: (n, 0, 0)),        # u
            pl.BlockSpec((Cin, 1), lambda n: (0, 0)),                 # BN1 scale
            pl.BlockSpec((Cin, 1), lambda n: (0, 0)),                 # BN1 shift
            pl.BlockSpec((4, Cout, Cin), lambda n: (0, 0, 0)),        # conv taps
        ],
        out_specs=[
            pl.BlockSpec((None, Cout, L), lambda n: (n, 0, 0)),       # z (lane-dense)
            pl.BlockSpec((None, Cout, 2), lambda n: (n, 0, 0)),       # per-image stats
        ],
        out_shape=[
            jax.ShapeDtypeStruct((N, Cout, L), jnp.float32),
            jax.ShapeDtypeStruct((N, Cout, 2), jnp.float32),
        ],
        compiler_params=cp,
    )(u, a1, c1, params["w_taps"])

    s2t = jnp.sum(s2, axis=0)                                         # (Cout, 2)
    mean2 = s2t[:, 0] / cnt
    var2 = s2t[:, 1] / cnt - mean2 * mean2
    scale2 = params["g2"] * lax.rsqrt(var2 + EPS)
    a2 = scale2.reshape(Cout, 1)
    c2 = (params["b2"] - mean2 * scale2).reshape(Cout, 1)

    # ---- stage 3: BN2 affine, lane-dense write --------------------------------------
    out_flat = pl.pallas_call(
        bn2_apply_kernel,
        grid=(N,),
        in_specs=[
            pl.BlockSpec((None, Cout, L), lambda n: (n, 0, 0)),
            pl.BlockSpec((Cout, 1), lambda n: (0, 0)),
            pl.BlockSpec((Cout, 1), lambda n: (0, 0)),
        ],
        out_specs=pl.BlockSpec((None, Cout, L), lambda n: (n, 0, 0)),
        out_shape=jax.ShapeDtypeStruct((N, Cout, L), jnp.float32),
        compiler_params=cp,
    )(z, a2, c2)
    # TODO(synk): at larger shapes, stages 2+3 could skip storing z (recompute the
    # cheap conv with a2/c2 folded in) to cut HBM traffic further.
    return out_flat.reshape(N, Cout, H2, W2)


# --------------------------------------------------------------------------- params
def bilinear_matrix(n_in, n_out):
    """Row-stochastic interpolation matrix for align_corners=True bilinear resize."""
    p = np.arange(n_out, dtype=np.float64)
    src = p * (n_in - 1) / (n_out - 1) if n_out > 1 else np.zeros_like(p)
    i0 = np.clip(np.floor(src).astype(np.int64), 0, n_in - 1)
    i1 = np.minimum(i0 + 1, n_in - 1)
    frac = src - i0
    A = np.zeros((n_out, n_in), np.float64)
    A[np.arange(n_out), i0] += (1.0 - frac)
    A[np.arange(n_out), i1] += frac
    return A


def init_params(key, in_channels, out_channels, H, W):
    k1, k2, k3, k4, k5, k6 = jax.random.split(key, 6)
    fan_in = in_channels * 2 * 2
    bound = 1.0 / np.sqrt(fan_in)
    w_oihw = jax.random.uniform(k1, (out_channels, in_channels, 2, 2),
                                jnp.float32, -bound, bound)
    cb = jax.random.uniform(k2, (out_channels,), jnp.float32, -bound, bound)
    g1 = 1.0 + 0.1 * jax.random.normal(k3, (in_channels,), dtype=jnp.float32)
    b1 = 0.1 * jax.random.normal(k4, (in_channels,), dtype=jnp.float32)
    g2 = 1.0 + 0.1 * jax.random.normal(k5, (out_channels,), dtype=jnp.float32)
    b2 = 0.1 * jax.random.normal(k6, (out_channels,), dtype=jnp.float32)

    ah = bilinear_matrix(H, 2 * H)                                    # (H2, H)
    aw = bilinear_matrix(W, 2 * W)                                    # (W2, W)
    # Combined (kron) upsample matrix: ups[h*W + w, i*W2 + j] = ah[i, h] * aw[j, w]
    ups = np.einsum("ih,jw->hwij", ah, aw).reshape(H * W, 4 * H * W)
    # Conv taps, tap-major: w_taps[kh*2 + kw, co, ci] = w[co, ci, kh, kw]
    w_taps = jnp.transpose(w_oihw, (2, 3, 0, 1)).reshape(4, out_channels, in_channels)

    return dict(w_oihw=w_oihw, w_taps=w_taps, cb=cb,
                g1=g1, b1=b1, g2=g2, b2=b2,
                ah=jnp.asarray(ah, jnp.float32), aw=jnp.asarray(aw, jnp.float32),
                upsample_mat=jnp.asarray(ups, jnp.float32))


# Pure-JAX reference (same semantics, keeps the conv bias) — sanity check only.
def reference_forward(x_nchw, params):
    u = jnp.einsum("ph,nchw->ncpw", params["ah"], x_nchw)
    u = jnp.einsum("qw,ncpw->ncpq", params["aw"], u)

    def bn(z, g, b):
        m = jnp.mean(z, axis=(0, 2, 3), keepdims=True)
        v = jnp.mean((z - m) ** 2, axis=(0, 2, 3), keepdims=True)
        return (z - m) / jnp.sqrt(v + EPS) * g.reshape(1, -1, 1, 1) + b.reshape(1, -1, 1, 1)

    y = bn(u, params["g1"], params["b1"])
    z = lax.conv_general_dilated(y, params["w_oihw"], (1, 1),
                                 padding=((0, 1), (0, 1)),
                                 dimension_numbers=("NCHW", "OIHW", "NCHW"))
    z = z + params["cb"].reshape(1, -1, 1, 1)
    return bn(z, params["g2"], params["b2"])


if __name__ == "__main__":
    key = jax.random.PRNGKey(0)
    kx, kp = jax.random.split(key)
    N, Cin, Cout, H, W = 2, 4, 8, 16, 16
    x = jax.random.normal(kx, (N, Cin, H, W), dtype=jnp.float32)
    params = init_params(kp, Cin, Cout, H, W)

    out = jax.jit(upconv_forward)(x, params)
    out = jax.block_until_ready(out)

    assert out.shape == (N, Cout, 2 * H, 2 * W), out.shape
    ref = reference_forward(x, params)
    err = float(jnp.max(jnp.abs(out - ref)))
    # bf16 MXU operands in stage 1 bound the deviation from the all-f32 reference to
    # ~1e-2 worst case; comfortably below this tolerance.
    assert err < 2.5e-2, f"max abs err {err}"
    print("KERNEL_OK")
</pallas_src>

<mosaic_0001>
module attributes {stable_mosaic.version = 11 : i64} {
  func.func @upsample_stats_kernel(%arg0: i32, %arg1: memref<1x4x256xbf16, #tpu.memory_space<vmem>>, %arg2: memref<256x1024xbf16, #tpu.memory_space<vmem>>, %arg3: memref<1x4x1024xf32, #tpu.memory_space<vmem>>, %arg4: memref<1x4x2xf32, #tpu.memory_space<vmem>>) attributes {dimension_semantics = [#tpu.dimension_semantics<parallel>], iteration_bounds = array<i64: 2>, scalar_prefetch = 0 : i64, scratch_operands = 0 : i64, tpu.core_type = #tpu.core_type<tc>, window_params = [{transform_indices = @transform_0, window_bounds = array<i64: 1, 4, 256>}, {pipeline_mode = #tpu.pipeline_mode<synchronous>, transform_indices = @transform_1, window_bounds = array<i64: 256, 1024>}, {transform_indices = @transform_2, window_bounds = array<i64: 1, 4, 1024>}, {transform_indices = @transform_3, window_bounds = array<i64: 1, 4, 2>}]} {
    %c0 = arith.constant 0 : index
    %c0_0 = arith.constant 0 : index
    %c0_1 = arith.constant 0 : index
    %0 = vector.load %arg1[%c0, %c0_0, %c0_1] : memref<1x4x256xbf16, #tpu.memory_space<vmem>>, vector<1x4x256xbf16>
    %1 = vector.shape_cast %0 : vector<1x4x256xbf16> to vector<4x256xbf16>
    %c0_2 = arith.constant 0 : index
    %c0_3 = arith.constant 0 : index
    %2 = vector.load %arg2[%c0_2, %c0_3] : memref<256x1024xbf16, #tpu.memory_space<vmem>>, vector<256x1024xbf16>
    %cst = arith.constant dense<0.000000e+00> : vector<4x1024xf32>
    %3 = tpu.matmul %1, %2, %cst {dimension_numbers = #tpu.dot_dimension_numbers<[1], [0], [0], [1], [0, 0, 1, 1], [], []>} : vector<4x256xbf16>, vector<256x1024xbf16>, vector<4x1024xf32> -> vector<4x1024xf32>
    %c0_4 = arith.constant 0 : index
    %c0_5 = arith.constant 0 : index
    %c0_6 = arith.constant 0 : index
    %4 = vector.load %arg3[%c0_4, %c0_5, %c0_6] : memref<1x4x1024xf32, #tpu.memory_space<vmem>>, vector<1x4x1024xf32>
    %5 = vector.shape_cast %4 : vector<1x4x1024xf32> to vector<4x1024xf32>
    %6 = vector.shape_cast %3 : vector<4x1024xf32> to vector<1x4x1024xf32>
    tpu.vector_store %arg3[%c0_4, %c0_5, %c0_6], %6 {strides = array<i32>} : memref<1x4x1024xf32, #tpu.memory_space<vmem>>, vector<1x4x1024xf32>,
    %cst_7 = arith.constant dense<0.000000e+00> : vector<4xf32>
    %7 = vector.multi_reduction <add>, %3, %cst_7 [1] : vector<4x1024xf32> to vector<4xf32>
    %8 = vector.shape_cast %7 : vector<4xf32> to vector<4x1xf32>
    %c0_8 = arith.constant 0 : index
    %c0_9 = arith.constant 0 : index
    %c0_10 = arith.constant 0 : index
    %9 = vector.load %arg4[%c0_8, %c0_9, %c0_10] : memref<1x4x2xf32, #tpu.memory_space<vmem>>, vector<1x4x1xf32>
    %10 = vector.shape_cast %9 : vector<1x4x1xf32> to vector<4x1xf32>
    %11 = vector.shape_cast %8 : vector<4x1xf32> to vector<1x4x1xf32>
    tpu.vector_store %arg4[%c0_8, %c0_9, %c0_10], %11 {strides = array<i32>} : memref<1x4x2xf32, #tpu.memory_space<vmem>>, vector<1x4x1xf32>,
    %12 = arith.mulf %3, %3 : vector<4x1024xf32>
    %cst_11 = arith.constant dense<0.000000e+00> : vector<4xf32>
    %13 = vector.multi_reduction <add>, %12, %cst_11 [1] : vector<4x1024xf32> to vector<4xf32>
    %14 = vector.shape_cast %13 : vector<4xf32> to vector<4x1xf32>
    %c0_12 = arith.constant 0 : index
    %c0_13 = arith.constant 0 : index
    %c1 = arith.constant 1 : index
    %15 = vector.load %arg4[%c0_12, %c0_13, %c1] : memref<1x4x2xf32, #tpu.memory_space<vmem>>, vector<1x4x1xf32>
    %16 = vector.shape_cast %15 : vector<1x4x1xf32> to vector<4x1xf32>
    %17 = vector.shape_cast %14 : vector<4x1xf32> to vector<1x4x1xf32>
    tpu.vector_store %arg4[%c0_12, %c0_13, %c1], %17 {strides = array<i32>} : memref<1x4x2xf32, #tpu.memory_space<vmem>>, vector<1x4x1xf32>,
    return
  }
  func.func @transform_0(%arg0: i32) -> (i32, i32, i32) {
    %c0_i32 = arith.constant 0 : i32
    %c0_i32_0 = arith.constant 0 : i32
    %c0_i32_1 = arith.constant 0 : i32
    return %arg0, %c0_i32, %c0_i32_0 : i32, i32, i32
  }
  func.func @transform_1(%arg0: i32) -> (i32, i32) {
    %c0_i32 = arith.constant 0 : i32
    %c0_i32_0 = arith.constant 0 : i32
    %c0_i32_1 = arith.constant 0 : i32
    return %c0_i32, %c0_i32_0 : i32, i32
  }
  func.func @transform_2(%arg0: i32) -> (i32, i32, i32) {
    %c0_i32 = arith.constant 0 : i32
    %c0_i32_0 = arith.constant 0 : i32
    %c0_i32_1 = arith.constant 0 : i32
    return %arg0, %c0_i32, %c0_i32_0 : i32, i32, i32
  }
  func.func @transform_3(%arg0: i32) -> (i32, i32, i32) {
    %c0_i32 = arith.constant 0 : i32
    %c0_i32_0 = arith.constant 0 : i32
    %c0_i32_1 = arith.constant 0 : i32
    return %arg0, %c0_i32, %c0_i32_0 : i32, i32, i32
  }
}

module attributes {stable_mosaic.version = 11 : i64} {
  func.func @bn1_conv_stats_kernel(%arg0: i32, %arg1: memref<1x4x1024xf32, #tpu.memory_space<vmem>>, %arg2: memref<4x1xf32, #tpu.memory_space<vmem>>, %arg3: memref<4x1xf32, #tpu.memory_space<vmem>>, %arg4: memref<4x8x4xf32, #tpu.memory_space<vmem>>, %arg5: memref<1x8x1024xf32, #tpu.memory_space<vmem>>, %arg6: memref<1x8x2xf32, #tpu.memory_space<vmem>>) attributes {dimension_semantics = [#tpu.dimension_semantics<parallel>], iteration_bounds = array<i64: 2>, scalar_prefetch = 0 : i64, scratch_operands = 0 : i64, tpu.core_type = #tpu.core_type<tc>, window_params = [{transform_indices = @transform_0, window_bounds = array<i64: 1, 4, 1024>}, {pipeline_mode = #tpu.pipeline_mode<synchronous>, transform_indices = @transform_1, window_bounds = array<i64: 4, 1>}, {pipeline_mode = #tpu.pipeline_mode<synchronous>, transform_indices = @transform_2, window_bounds = array<i64: 4, 1>}, {pipeline_mode = #tpu.pipeline_mode<synchronous>, transform_indices = @transform_3, window_bounds = array<i64: 4, 8, 4>}, {transform_indices = @transform_4, window_bounds = array<i64: 1, 8, 1024>}, {transform_indices = @transform_5, window_bounds = array<i64: 1, 8, 2>}]} {
    %c0 = arith.constant 0 : index
    %c0_0 = arith.constant 0 : index
    %c0_1 = arith.constant 0 : index
    %0 = vector.load %arg1[%c0, %c0_0, %c0_1] : memref<1x4x1024xf32, #tpu.memory_space<vmem>>, vector<1x4x1024xf32>
    %1 = vector.shape_cast %0 : vector<1x4x1024xf32> to vector<4x1024xf32>
    %c0_2 = arith.constant 0 : index
    %c0_3 = arith.constant 0 : index
    %2 = vector.load %arg2[%c0_2, %c0_3] : memref<4x1xf32, #tpu.memory_space<vmem>>, vector<4x1xf32>
    %3 = vector.broadcast %2 : vector<4x1xf32> to vector<4x1024xf32>
    %4 = arith.mulf %1, %3 : vector<4x1024xf32>
    %c0_4 = arith.constant 0 : index
    %c0_5 = arith.constant 0 : index
    %5 = vector.load %arg3[%c0_4, %c0_5] : memref<4x1xf32, #tpu.memory_space<vmem>>, vector<4x1xf32>
    %6 = vector.broadcast %5 : vector<4x1xf32> to vector<4x1024xf32>
    %7 = arith.addf %4, %6 : vector<4x1024xf32>
    %8 = tpu.iota {dimensions = array<i32: 1>} : vector<4x1024xi32>
    %c32_i32 = arith.constant 32 : i32
    %c0_i32 = arith.constant 0 : i32
    %9 = arith.cmpi eq, %c32_i32, %c0_i32 : i32
    %c1_i32 = arith.constant 1 : i32
    %10 = arith.select %9, %c1_i32, %c32_i32 : i32
    %11 = vector.broadcast %10 : i32 to vector<4x1024xi32>
    %12 = arith.remsi %8, %11 : vector<4x1024xi32>
    %c0_i32_6 = arith.constant 0 : i32
    %13 = vector.broadcast %c0_i32_6 : i32 to vector<4x1024xi32>
    %14 = arith.cmpi ne, %12, %13 : vector<4x1024xi32>
    %c0_i32_7 = arith.constant 0 : i32
    %15 = vector.broadcast %c0_i32_7 : i32 to vector<4x1024xi32>
    %16 = arith.cmpi slt, %12, %15 : vector<4x1024xi32>
    %c0_i32_8 = arith.constant 0 : i32
    %17 = arith.cmpi slt, %10, %c0_i32_8 : i32
    %18 = vector.broadcast %17 : i1 to vector<4x1024xi1>
    %19 = vector.broadcast %18 : vector<4x1024xi1> to vector<4x1024xi1>
    %20 = arith.xori %16, %19 : vector<4x1024xi1>
    %21 = arith.andi %20, %14 : vector<4x1024xi1>
    %22 = vector.broadcast %10 : i32 to vector<4x1024xi32>
    %23 = arith.addi %12, %22 : vector<4x1024xi32>
    %24 = arith.select %21, %23, %12 : vector<4x1024xi1>, vector<4x1024xi32>
    %c31_i32 = arith.constant 31 : i32
    %25 = vector.broadcast %c31_i32 : i32 to vector<4x1024xi32>
    %26 = arith.cmpi ne, %24, %25 : vector<4x1024xi32>
    %c992_i32 = arith.constant 992 : i32
    %27 = vector.broadcast %c992_i32 : i32 to vector<4x1024xi32>
    %28 = arith.cmpi slt, %8, %27 : vector<4x1024xi32>
    %c1023_i32 = arith.constant 1023 : i32
    %29 = tpu.dynamic_rotate %7 by %c1023_i32 dim 1 : vector<4x1024xf32>, i32 -> vector<4x1024xf32>
    %cst = arith.constant 0.000000e+00 : f32
    %30 = vector.broadcast %cst : f32 to vector<4x1024xf32>
    %31 = arith.select %26, %29, %30 : vector<4x1024xi1>, vector<4x1024xf32>
    %c992_i32_9 = arith.constant 992 : i32
    %32 = tpu.dynamic_rotate %7 by %c992_i32_9 dim 1 : vector<4x1024xf32>, i32 -> vector<4x1024xf32>
    %cst_10 = arith.constant 0.000000e+00 : f32
    %33 = vector.broadcast %cst_10 : f32 to vector<4x1024xf32>
    %34 = arith.select %28, %32, %33 : vector<4x1024xi1>, vector<4x1024xf32>
    %35 = arith.andi %26, %28 : vector<4x1024xi1>
    %c991_i32 = arith.constant 991 : i32
    %36 = tpu.dynamic_rotate %7 by %c991_i32 dim 1 : vector<4x1024xf32>, i32 -> vector<4x1024xf32>
    %cst_11 = arith.constant 0.000000e+00 : f32
    %37 = vector.broadcast %cst_11 : f32 to vector<4x1024xf32>
    %38 = arith.select %35, %36, %37 : vector<4x1024xi1>, vector<4x1024xf32>
    %c0_12 = arith.constant 0 : index
    %c0_13 = arith.constant 0 : index
    %c0_14 = arith.constant 0 : index
    %39 = vector.load %arg4[%c0_12, %c0_13, %c0_14] : memref<4x8x4xf32, #tpu.memory_space<vmem>>, vector<1x8x4xf32>
    %40 = vector.shape_cast %39 : vector<1x8x4xf32> to vector<8x4xf32>
    %cst_15 = arith.constant dense<0.000000e+00> : vector<8x1024xf32>
    %41 = tpu.matmul %40, %7, %cst_15 {dimension_numbers = #tpu.dot_dimension_numbers<[1], [0], [0], [1], [0, 0, 1, 1], [], []>} : vector<8x4xf32>, vector<4x1024xf32>, vector<8x1024xf32> -> vector<8x1024xf32>
    %c1 = arith.constant 1 : index
    %c0_16 = arith.constant 0 : index
    %c0_17 = arith.constant 0 : index
    %42 = vector.load %arg4[%c1, %c0_16, %c0_17] : memref<4x8x4xf32, #tpu.memory_space<vmem>>, vector<1x8x4xf32>
    %43 = vector.shape_cast %42 : vector<1x8x4xf32> to vector<8x4xf32>
    %cst_18 = arith.constant dense<0.000000e+00> : vector<8x1024xf32>
    %44 = tpu.matmul %43, %31, %cst_18 {dimension_numbers = #tpu.dot_dimension_numbers<[1], [0], [0], [1], [0, 0, 1, 1], [], []>} : vector<8x4xf32>, vector<4x1024xf32>, vector<8x1024xf32> -> vector<8x1024xf32>
    %45 = arith.addf %41, %44 : vector<8x1024xf32>
    %c2 = arith.constant 2 : index
    %c0_19 = arith.constant 0 : index
    %c0_20 = arith.constant 0 : index
    %46 = vector.load %arg4[%c2, %c0_19, %c0_20] : memref<4x8x4xf32, #tpu.memory_space<vmem>>, vector<1x8x4xf32>
    %47 = vector.shape_cast %46 : vector<1x8x4xf32> to vector<8x4xf32>
    %cst_21 = arith.constant dense<0.000000e+00> : vector<8x1024xf32>
    %48 = tpu.matmul %47, %34, %cst_21 {dimension_numbers = #tpu.dot_dimension_numbers<[1], [0], [0], [1], [0, 0, 1, 1], [], []>} : vector<8x4xf32>, vector<4x1024xf32>, vector<8x1024xf32> -> vector<8x1024xf32>
    %49 = arith.addf %45, %48 : vector<8x1024xf32>
    %c3 = arith.constant 3 : index
    %c0_22 = arith.constant 0 : index
    %c0_23 = arith.constant 0 : index
    %50 = vector.load %arg4[%c3, %c0_22, %c0_23] : memref<4x8x4xf32, #tpu.memory_space<vmem>>, vector<1x8x4xf32>
    %51 = vector.shape_cast %50 : vector<1x8x4xf32> to vector<8x4xf32>
    %cst_24 = arith.constant dense<0.000000e+00> : vector<8x1024xf32>
    %52 = tpu.matmul %51, %38, %cst_24 {dimension_numbers = #tpu.dot_dimension_numbers<[1], [0], [0], [1], [0, 0, 1, 1], [], []>} : vector<8x4xf32>, vector<4x1024xf32>, vector<8x1024xf32> -> vector<8x1024xf32>
    %53 = arith.addf %49, %52 : vector<8x1024xf32>
    %c0_25 = arith.constant 0 : index
    %c0_26 = arith.constant 0 : index
    %c0_27 = arith.constant 0 : index
    %54 = vector.load %arg5[%c0_25, %c0_26, %c0_27] : memref<1x8x1024xf32, #tpu.memory_space<vmem>>, vector<1x8x1024xf32>
    %55 = vector.shape_cast %54 : vector<1x8x1024xf32> to vector<8x1024xf32>
    %56 = vector.shape_cast %53 : vector<8x1024xf32> to vector<1x8x1024xf32>
    tpu.vector_store %arg5[%c0_25, %c0_26, %c0_27], %56 {strides = array<i32>} : memref<1x8x1024xf32, #tpu.memory_space<vmem>>, vector<1x8x1024xf32>,
    %cst_28 = arith.constant dense<0.000000e+00> : vector<8xf32>
    %57 = vector.multi_reduction <add>, %53, %cst_28 [1] : vector<8x1024xf32> to vector<8xf32>
    %58 = vector.shape_cast %57 : vector<8xf32> to vector<8x1xf32>
    %c0_29 = arith.constant 0 : index
    %c0_30 = arith.constant 0 : index
    %c0_31 = arith.constant 0 : index
    %59 = vector.load %arg6[%c0_29, %c0_30, %c0_31] : memref<1x8x2xf32, #tpu.memory_space<vmem>>, vector<1x8x1xf32>
    %60 = vector.shape_cast %59 : vector<1x8x1xf32> to vector<8x1xf32>
    %61 = vector.shape_cast %58 : vector<8x1xf32> to vector<1x8x1xf32>
    tpu.vector_store %arg6[%c0_29, %c0_30, %c0_31], %61 {strides = array<i32>} : memref<1x8x2xf32, #tpu.memory_space<vmem>>, vector<1x8x1xf32>,
    %62 = arith.mulf %53, %53 : vector<8x1024xf32>
    %cst_32 = arith.constant dense<0.000000e+00> : vector<8xf32>
    %63 = vector.multi_reduction <add>, %62, %cst_32 [1] : vector<8x1024xf32> to vector<8xf32>
    %64 = vector.shape_cast %63 : vector<8xf32> to vector<8x1xf32>
    %c0_33 = arith.constant 0 : index
    %c0_34 = arith.constant 0 : index
    %c1_35 = arith.constant 1 : index
    %65 = vector.load %arg6[%c0_33, %c0_34, %c1_35] : memref<1x8x2xf32, #tpu.memory_space<vmem>>, vector<1x8x1xf32>
    %66 = vector.shape_cast %65 : vector<1x8x1xf32> to vector<8x1xf32>
    %67 = vector.shape_cast %64 : vector<8x1xf32> to vector<1x8x1xf32>
    tpu.vector_store %arg6[%c0_33, %c0_34, %c1_35], %67 {strides = array<i32>} : memref<1x8x2xf32, #tpu.memory_space<vmem>>, vector<1x8x1xf32>,
    return
  }
  func.func @transform_0(%arg0: i32) -> (i32, i32, i32) {
    %c0_i32 = arith.constant 0 : i32
    %c0_i32_0 = arith.constant 0 : i32
    %c0_i32_1 = arith.constant 0 : i32
    return %arg0, %c0_i32, %c0_i32_0 : i32, i32, i32
  }
  func.func @transform_1(%arg0: i32) -> (i32, i32) {
    %c0_i32 = arith.constant 0 : i32
    %c0_i32_0 = arith.constant 0 : i32
    %c0_i32_1 = arith.constant 0 : i32
    return %c0_i32, %c0_i32_0 : i32, i32
  }
  func.func @transform_2(%arg0: i32) -> (i32, i32) {
    %c0_i32 = arith.constant 0 : i32
    %c0_i32_0 = arith.constant 0 : i32
    %c0_i32_1 = arith.constant 0 : i32
    return %c0_i32, %c0_i32_0 : i32, i32
  }
  func.func @transform_3(%arg0: i32) -> (i32, i32, i32) {
    %c0_i32 = arith.constant 0 : i32
    %c0_i32_0 = arith.constant 0 : i32
    %c0_i32_1 = arith.constant 0 : i32
    %c0_i32_2 = arith.constant 0 : i32
    return %c0_i32, %c0_i32_0, %c0_i32_1 : i32, i32, i32
  }
  func.func @transform_4(%arg0: i32) -> (i32, i32, i32) {
    %c0_i32 = arith.constant 0 : i32
    %c0_i32_0 = arith.constant 0 : i32
    %c0_i32_1 = arith.constant 0 : i32
    return %arg0, %c0_i32, %c0_i32_0 : i32, i32, i32
  }
  func.func @transform_5(%arg0: i32) -> (i32, i32, i32) {
    %c0_i32 = arith.constant 0 : i32
    %c0_i32_0 = arith.constant 0 : i32
    %c0_i32_1 = arith.constant 0 : i32
    return %arg0, %c0_i32, %c0_i32_0 : i32, i32, i32
  }
}

module attributes {stable_mosaic.version = 11 : i64} {
  func.func @bn2_apply_kernel(%arg0: i32, %arg1: memref<1x8x1024xf32, #tpu.memory_space<vmem>>, %arg2: memref<8x1xf32, #tpu.memory_space<vmem>>, %arg3: memref<8x1xf32, #tpu.memory_space<vmem>>, %arg4: memref<1x8x1024xf32, #tpu.memory_space<vmem>>) attributes {dimension_semantics = [#tpu.dimension_semantics<parallel>], iteration_bounds = array<i64: 2>, scalar_prefetch = 0 : i64, scratch_operands = 0 : i64, tpu.core_type = #tpu.core_type<tc>, window_params = [{transform_indices = @transform_0, window_bounds = array<i64: 1, 8, 1024>}, {pipeline_mode = #tpu.pipeline_mode<synchronous>, transform_indices = @transform_1, window_bounds = array<i64: 8, 1>}, {pipeline_mode = #tpu.pipeline_mode<synchronous>, transform_indices = @transform_2, window_bounds = array<i64: 8, 1>}, {transform_indices = @transform_3, window_bounds = array<i64: 1, 8, 1024>}]} {
    %c0 = arith.constant 0 : index
    %c0_0 = arith.constant 0 : index
    %c0_1 = arith.constant 0 : index
    %0 = vector.load %arg1[%c0, %c0_0, %c0_1] : memref<1x8x1024xf32, #tpu.memory_space<vmem>>, vector<1x8x1024xf32>
    %1 = vector.shape_cast %0 : vector<1x8x1024xf32> to vector<8x1024xf32>
    %c0_2 = arith.constant 0 : index
    %c0_3 = arith.constant 0 : index
    %2 = vector.load %arg2[%c0_2, %c0_3] : memref<8x1xf32, #tpu.memory_space<vmem>>, vector<8x1xf32>
    %3 = vector.broadcast %2 : vector<8x1xf32> to vector<8x1024xf32>
    %4 = arith.mulf %1, %3 : vector<8x1024xf32>
    %c0_4 = arith.constant 0 : index
    %c0_5 = arith.constant 0 : index
    %5 = vector.load %arg3[%c0_4, %c0_5] : memref<8x1xf32, #tpu.memory_space<vmem>>, vector<8x1xf32>
    %6 = vector.broadcast %5 : vector<8x1xf32> to vector<8x1024xf32>
    %7 = arith.addf %4, %6 : vector<8x1024xf32>
    %c0_6 = arith.constant 0 : index
    %c0_7 = arith.constant 0 : index
    %c0_8 = arith.constant 0 : index
    %8 = vector.load %arg4[%c0_6, %c0_7, %c0_8] : memref<1x8x1024xf32, #tpu.memory_space<vmem>>, vector<1x8x1024xf32>
    %9 = vector.shape_cast %8 : vector<1x8x1024xf32> to vector<8x1024xf32>
    %10 = vector.shape_cast %7 : vector<8x1024xf32> to vector<1x8x1024xf32>
    tpu.vector_store %arg4[%c0_6, %c0_7, %c0_8], %10 {strides = array<i32>} : memref<1x8x1024xf32, #tpu.memory_space<vmem>>, vector<1x8x1024xf32>,
    return
  }
  func.func @transform_0(%arg0: i32) -> (i32, i32, i32) {
    %c0_i32 = arith.constant 0 : i32
    %c0_i32_0 = arith.constant 0 : i32
    %c0_i32_1 = arith.constant 0 : i32
    return %arg0, %c0_i32, %c0_i32_0 : i32, i32, i32
  }
  func.func @transform_1(%arg0: i32) -> (i32, i32) {
    %c0_i32 = arith.constant 0 : i32
    %c0_i32_0 = arith.constant 0 : i32
    %c0_i32_1 = arith.constant 0 : i32
    return %c0_i32, %c0_i32_0 : i32, i32
  }
  func.func @transform_2(%arg0: i32) -> (i32, i32) {
    %c0_i32 = arith.constant 0 : i32
    %c0_i32_0 = arith.constant 0 : i32
    %c0_i32_1 = arith.constant 0 : i32
    return %c0_i32, %c0_i32_0 : i32, i32
  }
  func.func @transform_3(%arg0: i32) -> (i32, i32, i32) {
    %c0_i32 = arith.constant 0 : i32
    %c0_i32_0 = arith.constant 0 : i32
    %c0_i32_1 = arith.constant 0 : i32
    return %arg0, %c0_i32, %c0_i32_0 : i32, i32, i32
  }
}

</mosaic_0001>

<llo_original>
// kernel: upconv_forward.5
$region0: #{upconv_forward.5}
  #allocation0 [shape = 'u32[]', space=smem, size = 0x4, offset = 0x4, fixed_abs, tag = 'smem constant byte address 0x4 - core index']
  #allocation1 [shape = 'u32[144,128]{1,0:T(1,128)}', space=vmem, size = 0x12000, scoped, tag = 'internal scratch']
  %s0 = inlined_call_operand.vmem [shape: f32[2,8,1024], index: 0, kind: input, shape index: {}]
  %s1 = inlined_call_operand.vmem [shape: f32[8,1], index: 1, kind: input, shape index: {}]
  %s2 = inlined_call_operand.vmem [shape: f32[8,1], index: 2, kind: input, shape index: {}]
  %s3 = inlined_call_operand.vmem [shape: f32[2,8,1024], index: 3, kind: output, shape index: {}]
  %s4 = sld [smem:[#allocation0]]
  $region45: #{upconv_forward.5} parent=0
    _
  %s6 = ssub.s32 1, %s4
  %s7 = scalar_select 0, %s6, %s4
  loop: start=0, step=1, limit=4
  $region2: #{upconv_forward.5} parent=0 // loop_pre_header
    _
  $region3: #{upconv_forward.5} parent=0 // loop_header
    %s9 = sphi 0, %s13
    %p10 = scmp.ge.s32.totalorder %s9, 4
    %s19 = sphi 0, %s21
    %s22 = sphi 0, %s19
    %s23 = sphi 0, %s22
    %s39 = sphi 0, %s23
    %s43 = sphi 0, %s43
    %s45 = sphi 0, %s43
    %s46 = sphi 0, %s45
    %s60 = sphi 0, %s46
    %s64 = sphi 0, %s64
    %s66 = sphi 0, %s64
    %s67 = sphi 0, %s66
    %s81 = sphi 0, %s67
    %s87 = sphi 0, %s89
    %s90 = sphi 0, %s87
    %s91 = sphi 0, %s90
    %s107 = sphi 0, %s91
  $region4: #{upconv_forward.5} parent=0 // loop_header_branch
    %12 = sbr.rel (%p10) target = $region8
  $region5: #{upconv_forward.5} parent=0 // loop_body
    %s14 = ssub.s32 %s9, 1
    %s15 = ssub.s32 %s9, 2
    %s16 = sadd.s32 %s9, 1
    %s17 = ssub.s32 %s9, %s16
    %p18 = scmp.eq.s32.totalorder %s17, 0
    %s20 = sadd.s32 %s19, 1
    %s21 = scalar_select %p18, %s19, %s20
    %p24 = pneg %p18
    %p25 = scmp.eq.s32.totalorder %s9, 1
    %p26 = por %p24, %p25
    %p27 = scmp.ne.s32.totalorder %s19, %s22
    %p28 = scmp.eq.s32.totalorder %s9, 0
    %p29 = por %p27, %p28
    %p30 = scmp.ne.s32.totalorder %s19, %s22
    %p31 = scmp.eq.s32.totalorder %s14, 1
    %p32 = por %p30, %p31
    %p33 = scmp.ne.s32.totalorder %s22, %s23
    %p34 = scmp.eq.s32.totalorder %s14, 0
    %p35 = por %p33, %p34
    %p36 = scmp.ne.s32.totalorder %s22, %s23
    %p37 = scmp.eq.s32.totalorder %s15, 1
    %p38 = por %p36, %p37
    %p40 = scmp.ne.s32.totalorder %s23, %s39
    %p41 = scmp.eq.s32.totalorder %s15, 0
    %p42 = por %p40, %p41
    %s44 = sadd.s32 %s43, 1
    %p47 = scmp.eq.s32.totalorder %s9, 1
    %p48 = scmp.ne.s32.totalorder %s43, %s45
    %p49 = scmp.eq.s32.totalorder %s9, 0
    %p50 = por %p48, %p49
    %p51 = scmp.ne.s32.totalorder %s43, %s45
    %p52 = scmp.eq.s32.totalorder %s14, 1
    %p53 = por %p51, %p52
    %p54 = scmp.ne.s32.totalorder %s45, %s46
    %p55 = scmp.eq.s32.totalorder %s14, 0
    %p56 = por %p54, %p55
    %p57 = scmp.ne.s32.totalorder %s45, %s46
    %p58 = scmp.eq.s32.totalorder %s15, 1
    %p59 = por %p57, %p58
    %p61 = scmp.ne.s32.totalorder %s46, %s60
    %p62 = scmp.eq.s32.totalorder %s15, 0
    %p63 = por %p61, %p62
    %s65 = sadd.s32 %s64, 1
    %p68 = scmp.eq.s32.totalorder %s9, 1
    %p69 = scmp.ne.s32.totalorder %s64, %s66
    %p70 = scmp.eq.s32.totalorder %s9, 0
    %p71 = por %p69, %p70
    %p72 = scmp.ne.s32.totalorder %s64, %s66
    %p73 = scmp.eq.s32.totalorder %s14, 1
    %p74 = por %p72, %p73
    %p75 = scmp.ne.s32.totalorder %s66, %s67
    %p76 = scmp.eq.s32.totalorder %s14, 0
    %p77 = por %p75, %p76
    %p78 = scmp.ne.s32.totalorder %s66, %s67
    %p79 = scmp.eq.s32.totalorder %s15, 1
    %p80 = por %p78, %p79
    %p82 = scmp.ne.s32.totalorder %s67, %s81
    %p83 = scmp.eq.s32.totalorder %s15, 0
    %p84 = por %p82, %p83
    %s85 = ssub.s32 %s9, %s16
    %p86 = scmp.eq.s32.totalorder %s85, 0
    %s88 = sadd.s32 %s87, 1
    %s89 = scalar_select %p86, %s87, %s88
    %p92 = pneg %p86
    %p93 = scmp.eq.s32.totalorder %s9, 1
    %p94 = por %p92, %p93
    %p95 = scmp.ne.s32.totalorder %s87, %s90
    %p96 = scmp.eq.s32.totalorder %s9, 0
    %p97 = por %p95, %p96
    %p98 = scmp.ne.s32.totalorder %s87, %s90
    %p99 = scmp.eq.s32.totalorder %s14, 1
    %p100 = por %p98, %p99
    %p101 = scmp.ne.s32.totalorder %s90, %s91
    %p102 = scmp.eq.s32.totalorder %s14, 0
    %p103 = por %p101, %p102
    %p104 = scmp.ne.s32.totalorder %s90, %s91
    %p105 = scmp.eq.s32.totalorder %s15, 1
    %p106 = por %p104, %p105
    %p108 = scmp.ne.s32.totalorder %s91, %s107
    %p109 = scmp.eq.s32.totalorder %s15, 0
    %p110 = por %p108, %p109
    %p111 = scmp.le.s32.totalorder 1, %s9
    %p112 = scmp.lt.s32.totalorder %s9, 3
    %p113 = pnand %p111, %p112
    %p114 = pneg %p113
    // Predicated region
    $region9: #{upconv_forward.5} parent=5 // pred_check
      _
    $region10: #{upconv_forward.5} parent=5 // pred_check_branch
      %116 = sbr.rel (%p113) target = $region12
    $region11: #{upconv_forward.5} parent=5 // pred_region
      %s117 = ssub.s32 %s9, 1
      // Predicated region
      $region13: #{upconv_forward.5} parent=11 // pred_check
        %p118 = pneg %p56
      $region14: #{upconv_forward.5} parent=11 // pred_check_branch
        %120 = sbr.rel (%p118) target = $region16
      $region15: #{upconv_forward.5} parent=11 // pred_region
        _
      $region16: #{upconv_forward.5} parent=11 // pred_fallthru
        _
      // Predicated region
      $region17: #{upconv_forward.5} parent=11 // pred_check
        %p121 = pneg %p77
      $region18: #{upconv_forward.5} parent=11 // pred_check_branch
        %123 = sbr.rel (%p121) target = $region20
      $region19: #{upconv_forward.5} parent=11 // pred_region
        _
      $region20: #{upconv_forward.5} parent=11 // pred_fallthru
        _
    $region12: #{upconv_forward.5} parent=5 // pred_fallthru
      _
    %p124 = scmp.lt.s32.totalorder %s9, 2
    // Predicated region
    $region21: #{upconv_forward.5} parent=5 // pred_check
      %p125 = pneg %p124
    $region22: #{upconv_forward.5} parent=5 // pred_check_branch
      %127 = sbr.rel (%p125) target = $region24
    $region23: #{upconv_forward.5} parent=5 // pred_region
      // Predicated region
      $region25: #{upconv_forward.5} parent=23 // pred_check
        %p128 = pneg %p29
      $region26: #{upconv_forward.5} parent=23 // pred_check_branch
        %130 = sbr.rel (%p128) target = $region28
      $region27: #{upconv_forward.5} parent=23 // pred_region
        %p131 = scmp.lt.s32.totalorder %s9, 1
        %s132 = scalar_select %p131, %s9, 1
        %s133 = smul.addr %s132, 8
        %s134 = smul.addr %s133, 8
        %s135 = scalar_lea.vmem %s0, %s134
      $region28: #{upconv_forward.5} parent=23 // pred_fallthru
        _
    $region24: #{upconv_forward.5} parent=5 // pred_fallthru
      _
    %p136 = scmp.le.s32.totalorder 1, %s9
    %p137 = scmp.lt.s32.totalorder %s9, 3
    %p138 = pnand %p136, %p137
    %p139 = pneg %p138
    // Predicated region
    $region29: #{upconv_forward.5} parent=5 // pred_check
      _
    $region30: #{upconv_forward.5} parent=5 // pred_check_branch
      %141 = sbr.rel (%p138) target = $region32
    $region31: #{upconv_forward.5} parent=5 // pred_region
      %s142 = ssub.s32 %s9, 1
      %p143 = scmp.lt.s32.totalorder %s14, 1
      %s144 = scalar_select %p143, %s14, 1
      %s145 = smul.addr %s144, 8
      %s146 = smul.addr %s145, 8
      %s147 = scalar_lea.vmem %s0, %s146
      %p148 = pneg %p35
      %p149 = pneg %p32
      %p150 = pneg %p56
      %p151 = pneg %p53
      %p152 = pneg %p77
      %p153 = pneg %p74
      %p154 = pneg %p103
      %p155 = pneg %p100
      %p156 = scmp.lt.s32.totalorder %s14, 1
      %s157 = scalar_select %p156, %s14, 1
      %s158 = smul.addr %s157, 8
      %s159 = smul.addr %s158, 8
      %s160 = scalar_lea.vmem %s3, %s159
      %p161 = scmp.lt.s32.totalorder %s14, 1
      %s162 = scalar_select %p161, %s14, 1
      %s163 = smul.addr %s162, 8
      %s164 = smul.addr %s163, 8
      %s165 = scalar_lea.vmem %s0, %s164
      %p166 = scmp.lt.s32.totalorder %s14, 1
      %s167 = scalar_select %p166, %s14, 1
      %s168 = smul.addr %s167, 8
      %s169 = smul.addr %s168, 8
      %s170 = scalar_lea.vmem %s3, %s169
      %v171 = vld [vmem:[%s165] sm:$0xff]
      %v172 = vld [vmem:[%s165 + $0x8] sm:$0xff]
      %v173 = vld [vmem:[%s165 + $0x10] sm:$0xff]
      %v174 = vld [vmem:[%s165 + $0x18] sm:$0xff]
      %v175 = vld [vmem:[%s165 + $0x20] sm:$0xff]
      %v176 = vld [vmem:[%s165 + $0x28] sm:$0xff]
      %v177 = vld [vmem:[%s165 + $0x30] sm:$0xff]
      %v178 = vld [vmem:[%s165 + $0x38] sm:$0xff]
      %v179 = vld [vmem:[%s1] sm:$0xff]
      %181 = vset.pattern.permute.xlu0 0
      %182 = vperm.xlu0 %181, %v179
      %v183 = vpop.permute.xlu0 %182
      %v185 = vmul.f32 %v171, %v183
      %v186 = vmul.f32 %v172, %v183
      %v187 = vmul.f32 %v173, %v183
      %v188 = vmul.f32 %v174, %v183
      %v189 = vmul.f32 %v175, %v183
      %v190 = vmul.f32 %v176, %v183
      %v191 = vmul.f32 %v177, %v183
      %v192 = vmul.f32 %v178, %v183
      %v193 = vld [vmem:[%s2] sm:$0xff]
      %195 = vset.pattern.permute.xlu0 0
      %196 = vperm.xlu0 %195, %v193
      %v197 = vpop.permute.xlu0 %196
      %v199 = vadd.f32 %v185, %v197
      %v200 = vadd.f32 %v186, %v197
      %v201 = vadd.f32 %v187, %v197
      %v202 = vadd.f32 %v188, %v197
      %v203 = vadd.f32 %v189, %v197
      %v204 = vadd.f32 %v190, %v197
      %v205 = vadd.f32 %v191, %v197
      %v206 = vadd.f32 %v192, %v197
      %207 = vst [vmem:[%s170] sm:$0xff] %v199
      %208 = vst [vmem:[%s170 + $0x8] sm:$0xff] %v200
      %209 = vst [vmem:[%s170 + $0x10] sm:$0xff] %v201
      %210 = vst [vmem:[%s170 + $0x18] sm:$0xff] %v202
      %211 = vst [vmem:[%s170 + $0x20] sm:$0xff] %v203
      %212 = vst [vmem:[%s170 + $0x28] sm:$0xff] %v204
      %213 = vst [vmem:[%s170 + $0x30] sm:$0xff] %v205
      %214 = vst [vmem:[%s170 + $0x38] sm:$0xff] %v206
      %p215 = scmp.lt.s32.totalorder %s14, 1
      %s216 = scalar_select %p215, %s14, 1
      %s217 = smul.addr %s216, 8
      %s218 = smul.addr %s217, 8
      %s219 = scalar_lea.vmem %s3, %s218
      // Predicated region
      $region33: #{upconv_forward.5} parent=31 // pred_check
        %p220 = pneg %p100
      $region34: #{upconv_forward.5} parent=31 // pred_check_branch
        %222 = sbr.rel (%p220) target = $region36
      $region35: #{upconv_forward.5} parent=31 // pred_region
        _
      $region36: #{upconv_forward.5} parent=31 // pred_fallthru
        _
    $region32: #{upconv_forward.5} parent=5 // pred_fallthru
      _
    %p223 = scmp.le.s32.totalorder 2, %s9
    // Predicated region
    $region37: #{upconv_forward.5} parent=5 // pred_check
      %p224 = pneg %p223
    $region38: #{upconv_forward.5} parent=5 // pred_check_branch
      %226 = sbr.rel (%p224) target = $region40
    $region39: #{upconv_forward.5} parent=5 // pred_region
      %s227 = ssub.s32 %s9, 2
      // Predicated region
      $region41: #{upconv_forward.5} parent=39 // pred_check
        %p228 = pneg %p106
      $region42: #{upconv_forward.5} parent=39 // pred_check_branch
        %230 = sbr.rel (%p228) target = $region44
      $region43: #{upconv_forward.5} parent=39 // pred_region
        %p231 = scmp.lt.s32.totalorder %s15, 1
        %s232 = scalar_select %p231, %s15, 1
        %s233 = smul.addr %s232, 8
        %s234 = smul.addr %s233, 8
        %s235 = scalar_lea.vmem %s3, %s234
      $region44: #{upconv_forward.5} parent=39 // pred_fallthru
        _
    $region40: #{upconv_forward.5} parent=5 // pred_fallthru
      _
  $region6: #{upconv_forward.5} parent=0 // loop_footer
    %s13 = sadd.s32 1, %s9
  $region7: #{upconv_forward.5} parent=0 // loop_footer_branch
    %8 = sbr.rel target = $region3
  $region8: #{upconv_forward.5} parent=0 // loop_exit
    _

// kernel: upconv_forward.3
$region0: #{upconv_forward.3}
  #allocation0 [shape = 'u32[]', space=smem, size = 0x4, offset = 0x4, fixed_abs, tag = 'smem constant byte address 0x4 - core index']
  #allocation1 [shape = 'u32[144,128]{1,0:T(1,128)}', space=vmem, size = 0x12000, scoped, tag = 'internal scratch']
  %s0 = inlined_call_operand.vmem [shape: bf16[2,4,256], index: 0, kind: input, shape index: {}]
  %s1 = inlined_call_operand.vmem [shape: bf16[256,1024], index: 1, kind: input, shape index: {}]
  %s2 = inlined_call_operand.vmem [shape: f32[2,4,1024], index: 2, kind: output, shape index: {0}]
  %s3 = inlined_call_operand.vmem [shape: f32[2,4,2], index: 3, kind: output, shape index: {1}]
  %4 = xla_tuple %s2, %s3
  %s5 = sld [smem:[#allocation0]]
  $region49: #{upconv_forward.3} parent=0
    _
  %s7 = ssub.s32 1, %s5
  %s8 = scalar_select 0, %s7, %s5
  loop: start=0, step=1, limit=4
  $region2: #{upconv_forward.3} parent=0 // loop_pre_header
    _
  $region3: #{upconv_forward.3} parent=0 // loop_header
    %s10 = sphi 0, %s14
    %p11 = scmp.ge.s32.totalorder %s10, 4
    %s20 = sphi 0, %s22
    %s23 = sphi 0, %s20
    %s24 = sphi 0, %s23
    %s40 = sphi 0, %s24
    %s44 = sphi 0, %s44
    %s46 = sphi 0, %s44
    %s47 = sphi 0, %s46
    %s61 = sphi 0, %s47
    %s67 = sphi 0, %s69
    %s70 = sphi 0, %s67
    %s71 = sphi 0, %s70
    %s87 = sphi 0, %s71
    %s93 = sphi 0, %s95
    %s96 = sphi 0, %s93
    %s97 = sphi 0, %s96
    %s113 = sphi 0, %s97
  $region4: #{upconv_forward.3} parent=0 // loop_header_branch
    %13 = sbr.rel (%p11) target = $region8
  $region5: #{upconv_forward.3} parent=0 // loop_body
    %s15 = ssub.s32 %s10, 1
    %s16 = ssub.s32 %s10, 2
    %s17 = sadd.s32 %s10, 1
    %s18 = ssub.s32 %s10, %s17
    %p19 = scmp.eq.s32.totalorder %s18, 0
    %s21 = sadd.s32 %s20, 1
    %s22 = scalar_select %p19, %s20, %s21
    %p25 = pneg %p19
    %p26 = scmp.eq.s32.totalorder %s10, 1
    %p27 = por %p25, %p26
    %p28 = scmp.ne.s32.totalorder %s20, %s23
    %p29 = scmp.eq.s32.totalorder %s10, 0
    %p30 = por %p28, %p29
    %p31 = scmp.ne.s32.totalorder %s20, %s23
    %p32 = scmp.eq.s32.totalorder %s15, 1
    %p33 = por %p31, %p32
    %p34 = scmp.ne.s32.totalorder %s23, %s24
    %p35 = scmp.eq.s32.totalorder %s15, 0
    %p36 = por %p34, %p35
    %p37 = scmp.ne.s32.totalorder %s23, %s24
    %p38 = scmp.eq.s32.totalorder %s16, 1
    %p39 = por %p37, %p38
    %p41 = scmp.ne.s32.totalorder %s24, %s40
    %p42 = scmp.eq.s32.totalorder %s16, 0
    %p43 = por %p41, %p42
    %s45 = sadd.s32 %s44, 1
    %p48 = scmp.eq.s32.totalorder %s10, 1
    %p49 = scmp.ne.s32.totalorder %s44, %s46
    %p50 = scmp.eq.s32.totalorder %s10, 0
    %p51 = por %p49, %p50
    %p52 = scmp.ne.s32.totalorder %s44, %s46
    %p53 = scmp.eq.s32.totalorder %s15, 1
    %p54 = por %p52, %p53
    %p55 = scmp.ne.s32.totalorder %s46, %s47
    %p56 = scmp.eq.s32.totalorder %s15, 0
    %p57 = por %p55, %p56
    %p58 = scmp.ne.s32.totalorder %s46, %s47
    %p59 = scmp.eq.s32.totalorder %s16, 1
    %p60 = por %p58, %p59
    %p62 = scmp.ne.s32.totalorder %s47, %s61
    %p63 = scmp.eq.s32.totalorder %s16, 0
    %p64 = por %p62, %p63
    %s65 = ssub.s32 %s10, %s17
    %p66 = scmp.eq.s32.totalorder %s65, 0
    %s68 = sadd.s32 %s67, 1
    %s69 = scalar_select %p66, %s67, %s68
    %p72 = pneg %p66
    %p73 = scmp.eq.s32.totalorder %s10, 1
    %p74 = por %p72, %p73
    %p75 = scmp.ne.s32.totalorder %s67, %s70
    %p76 = scmp.eq.s32.totalorder %s10, 0
    %p77 = por %p75, %p76
    %p78 = scmp.ne.s32.totalorder %s67, %s70
    %p79 = scmp.eq.s32.totalorder %s15, 1
    %p80 = por %p78, %p79
    %p81 = scmp.ne.s32.totalorder %s70, %s71
    %p82 = scmp.eq.s32.totalorder %s15, 0
    %p83 = por %p81, %p82
    %p84 = scmp.ne.s32.totalorder %s70, %s71
    %p85 = scmp.eq.s32.totalorder %s16, 1
    %p86 = por %p84, %p85
    %p88 = scmp.ne.s32.totalorder %s71, %s87
    %p89 = scmp.eq.s32.totalorder %s16, 0
    %p90 = por %p88, %p89
    %s91 = ssub.s32 %s10, %s17
    %p92 = scmp.eq.s32.totalorder %s91, 0
    %s94 = sadd.s32 %s93, 1
    %s95 = scalar_select %p92, %s93, %s94
    %p98 = pneg %p92
    %p99 = scmp.eq.s32.totalorder %s10, 1
    %p100 = por %p98, %p99
    %p101 = scmp.ne.s32.totalorder %s93, %s96
    %p102 = scmp.eq.s32.totalorder %s10, 0
    %p103 = por %p101, %p102
    %p104 = scmp.ne.s32.totalorder %s93, %s96
    %p105 = scmp.eq.s32.totalorder %s15, 1
    %p106 = por %p104, %p105
    %p107 = scmp.ne.s32.totalorder %s96, %s97
    %p108 = scmp.eq.s32.totalorder %s15, 0
    %p109 = por %p107, %p108
    %p110 = scmp.ne.s32.totalorder %s96, %s97
    %p111 = scmp.eq.s32.totalorder %s16, 1
    %p112 = por %p110, %p111
    %p114 = scmp.ne.s32.totalorder %s97, %s113
    %p115 = scmp.eq.s32.totalorder %s16, 0
    %p116 = por %p114, %p115
    %p117 = scmp.le.s32.totalorder 1, %s10
    %p118 = scmp.lt.s32.totalorder %s10, 3
    %p119 = pnand %p117, %p118
    %p120 = pneg %p119
    // Predicated region
    $region9: #{upconv_forward.3} parent=5 // pred_check
      _
    $region10: #{upconv_forward.3} parent=5 // pred_check_branch
      %122 = sbr.rel (%p119) target = $region12
    $region11: #{upconv_forward.3} parent=5 // pred_region
      %s123 = ssub.s32 %s10, 1
      // Predicated region
      $region13: #{upconv_forward.3} parent=11 // pred_check
        %p124 = pneg %p57
      $region14: #{upconv_forward.3} parent=11 // pred_check_branch
        %126 = sbr.rel (%p124) target = $region16
      $region15: #{upconv_forward.3} parent=11 // pred_region
        _
      $region16: #{upconv_forward.3} parent=11 // pred_fallthru
        _
    $region12: #{upconv_forward.3} parent=5 // pred_fallthru
      _
    %p127 = scmp.lt.s32.totalorder %s10, 2
    // Predicated region
    $region17: #{upconv_forward.3} parent=5 // pred_check
      %p128 = pneg %p127
    $region18: #{upconv_forward.3} parent=5 // pred_check_branch
      %130 = sbr.rel (%p128) target = $region20
    $region19: #{upconv_forward.3} parent=5 // pred_region
      // Predicated region
      $region21: #{upconv_forward.3} parent=19 // pred_check
        %p131 = pneg %p30
      $region22: #{upconv_forward.3} parent=19 // pred_check_branch
        %133 = sbr.rel (%p131) target = $region24
      $region23: #{upconv_forward.3} parent=19 // pred_region
        %p134 = scmp.lt.s32.totalorder %s10, 1
        %s135 = scalar_select %p134, %s10, 1
        %s136 = smul.addr %s135, 2
        %s137 = smul.addr %s136, 2
        %s138 = scalar_lea.vmem %s0, %s137
      $region24: #{upconv_forward.3} parent=19 // pred_fallthru
        _
    $region20: #{upconv_forward.3} parent=5 // pred_fallthru
      _
    %p139 = scmp.le.s32.totalorder 1, %s10
    %p140 = scmp.lt.s32.totalorder %s10, 3
    %p141 = pnand %p139, %p140
    %p142 = pneg %p141
    // Predicated region
    $region25: #{upconv_forward.3} parent=5 // pred_check
      _
    $region26: #{upconv_forward.3} parent=5 // pred_check_branch
      %144 = sbr.rel (%p141) target = $region28
    $region27: #{upconv_forward.3} parent=5 // pred_region
      %s145 = ssub.s32 %s10, 1
      %p146 = scmp.lt.s32.totalorder %s15, 1
      %s147 = scalar_select %p146, %s15, 1
      %s148 = smul.addr %s147, 2
      %s149 = smul.addr %s148, 2
      %s150 = scalar_lea.vmem %s0, %s149
      %p151 = pneg %p36
      %p152 = pneg %p33
      %p153 = pneg %p57
      %p154 = pneg %p54
      %p155 = pneg %p83
      %p156 = pneg %p80
      %p157 = scmp.lt.s32.totalorder %s15, 1
      %s158 = scalar_select %p157, %s15, 1
      %s159 = smul.addr %s158, 8
      %s160 = smul.addr %s159, 4
      %s161 = scalar_lea.vmem %s2, %s160
      %p162 = pneg %p109
      %p163 = pneg %p106
      %p164 = scmp.lt.s32.totalorder %s15, 1
      %s165 = scalar_select %p164, %s15, 1
      %s166 = smul.addr %s165, 4
      %s167 = scalar_lea.vmem %s3, %s166
      %p168 = scmp.lt.s32.totalorder %s15, 1
      %s169 = scalar_select %p168, %s15, 1
      %s170 = smul.addr %s169, 2
      %s171 = smul.addr %s170, 2
      %s172 = scalar_lea.vmem %s0, %s171
      %p173 = scmp.lt.s32.totalorder %s15, 1
      %s174 = scalar_select %p173, %s15, 1
      %s175 = smul.addr %s174, 8
      %s176 = smul.addr %s175, 4
      %s177 = scalar_lea.vmem %s2, %s176
      %p178 = scmp.lt.s32.totalorder %s15, 1
      %s179 = scalar_select %p178, %s15, 1
      %s180 = smul.addr %s179, 4
      %s181 = scalar_lea.vmem %s3, %s180
      %v182 = vld [vmem:[%s172] sm:$0xf]
      %v183 = vld [vmem:[%s1] sm:$0xff]
      %v184 = vld [vmem:[%s1 + $0x8] sm:$0xff]
      %v185 = vld [vmem:[%s1 + $0x10] sm:$0xff]
      %v186 = vld [vmem:[%s1 + $0x18] sm:$0xff]
      %v187 = vld [vmem:[%s1 + $0x20] sm:$0xff]
      %v188 = vld [vmem:[%s1 + $0x28] sm:$0xff]
      %v189 = vld [vmem:[%s1 + $0x30] sm:$0xff]
      %v190 = vld [vmem:[%s1 + $0x38] sm:$0xff]
      %v191 = vld [vmem:[%s1 + $0x40] sm:$0xff]
      %v192 = vld [vmem:[%s1 + $0x48] sm:$0xff]
      %v193 = vld [vmem:[%s1 + $0x50] sm:$0xff]
      %v194 = vld [vmem:[%s1 + $0x58] sm:$0xff]
      %v195 = vld [vmem:[%s1 + $0x60] sm:$0xff]
      %v196 = vld [vmem:[%s1 + $0x68] sm:$0xff]
      %v197 = vld [vmem:[%s1 + $0x70] sm:$0xff]
      %v198 = vld [vmem:[%s1 + $0x78] sm:$0xff]
      %v199 = vld [vmem:[%s1 + $0x80] sm:$0xff]
      %v200 = vld [vmem:[%s1 + $0x88] sm:$0xff]
      %v201 = vld [vmem:[%s1 + $0x90] sm:$0xff]
      %v202 = vld [vmem:[%s1 + $0x98] sm:$0xff]
      %v203 = vld [vmem:[%s1 + $0xa0] sm:$0xff]
      %v204 = vld [vmem:[%s1 + $0xa8] sm:$0xff]
      %v205 = vld [vmem:[%s1 + $0xb0] sm:$0xff]
      %v206 = vld [vmem:[%s1 + $0xb8] sm:$0xff]
      %v207 = vld [vmem:[%s1 + $0xc0] sm:$0xff]
      %v208 = vld [vmem:[%s1 + $0xc8] sm:$0xff]
      %v209 = vld [vmem:[%s1 + $0xd0] sm:$0xff]
      %v210 = vld [vmem:[%s1 + $0xd8] sm:$0xff]
      %v211 = vld [vmem:[%s1 + $0xe0] sm:$0xff]
      %v212 = vld [vmem:[%s1 + $0xe8] sm:$0xff]
      %v213 = vld [vmem:[%s1 + $0xf0] sm:$0xff]
      %v214 = vld [vmem:[%s1 + $0xf8] sm:$0xff]
      %v215 = vld [vmem:[%s1 + $0x100] sm:$0xff]
      %v216 = vld [vmem:[%s1 + $0x108] sm:$0xff]
      %v217 = vld [vmem:[%s1 + $0x110] sm:$0xff]
      %v218 = vld [vmem:[%s1 + $0x118] sm:$0xff]
      %v219 = vld [vmem:[%s1 + $0x120] sm:$0xff]
      %v220 = vld [vmem:[%s1 + $0x128] sm:$0xff]
      %v221 = vld [vmem:[%s1 + $0x130] sm:$0xff]
      %v222 = vld [vmem:[%s1 + $0x138] sm:$0xff]
      %v223 = vld [vmem:[%s1 + $0x140] sm:$0xff]
      %v224 = vld [vmem:[%s1 + $0x148] sm:$0xff]
      %v225 = vld [vmem:[%s1 + $0x150] sm:$0xff]
      %v226 = vld [vmem:[%s1 + $0x158] sm:$0xff]
      %v227 = vld [vmem:[%s1 + $0x160] sm:$0xff]
      %v228 = vld [vmem:[%s1 + $0x168] sm:$0xff]
      %v229 = vld [vmem:[%s1 + $0x170] sm:$0xff]
      %v230 = vld [vmem:[%s1 + $0x178] sm:$0xff]
      %v231 = vld [vmem:[%s1 + $0x180] sm:$0xff]
      %v232 = vld [vmem:[%s1 + $0x188] sm:$0xff]
      %v233 = vld [vmem:[%s1 + $0x190] sm:$0xff]
      %v234 = vld [vmem:[%s1 + $0x198] sm:$0xff]
      %v235 = vld [vmem:[%s1 + $0x1a0] sm:$0xff]
      %v236 = vld [vmem:[%s1 + $0x1a8] sm:$0xff]
      %v237 = vld [vmem:[%s1 + $0x1b0] sm:$0xff]
      %v238 = vld [vmem:[%s1 + $0x1b8] sm:$0xff]
      %v239 = vld [vmem:[%s1 + $0x1c0] sm:$0xff]
      %v240 = vld [vmem:[%s1 + $0x1c8] sm:$0xff]
      %v241 = vld [vmem:[%s1 + $0x1d0] sm:$0xff]
      %v242 = vld [vmem:[%s1 + $0x1d8] sm:$0xff]
      %v243 = vld [vmem:[%s1 + $0x1e0] sm:$0xff]
      %v244 = vld [vmem:[%s1 + $0x1e8] sm:$0xff]
      %v245 = vld [vmem:[%s1 + $0x1f0] sm:$0xff]
      %v246 = vld [vmem:[%s1 + $0x1f8] sm:$0xff]
      %v247 = vld [vmem:[%s1 + $0x200] sm:$0xff]
      %v248 = vld [vmem:[%s1 + $0x208] sm:$0xff]
      %v249 = vld [vmem:[%s1 + $0x210] sm:$0xff]
      %v250 = vld [vmem:[%s1 + $0x218] sm:$0xff]
      %v251 = vld [vmem:[%s1 + $0x220] sm:$0xff]
      %v252 = vld [vmem:[%s1 + $0x228] sm:$0xff]
      %v253 = vld [vmem:[%s1 + $0x230] sm:$0xff]
      %v254 = vld [vmem:[%s1 + $0x238] sm:$0xff]
      %v255 = vld [vmem:[%s1 + $0x240] sm:$0xff]
      %v256 = vld [vmem:[%s1 + $0x248] sm:$0xff]
      %v257 = vld [vmem:[%s1 + $0x250] sm:$0xff]
      %v258 = vld [vmem:[%s1 + $0x258] sm:$0xff]
      %v259 = vld [vmem:[%s1 + $0x260] sm:$0xff]
      %v260 = vld [vmem:[%s1 + $0x268] sm:$0xff]
      %v261 = vld [vmem:[%s1 + $0x270] sm:$0xff]
      %v262 = vld [vmem:[%s1 + $0x278] sm:$0xff]
      %v263 = vld [vmem:[%s1 + $0x280] sm:$0xff]
      %v264 = vld [vmem:[%s1 + $0x288] sm:$0xff]
      %v265 = vld [vmem:[%s1 + $0x290] sm:$0xff]
      %v266 = vld [vmem:[%s1 + $0x298] sm:$0xff]
      %v267 = vld [vmem:[%s1 + $0x2a0] sm:$0xff]
      %v268 = vld [vmem:[%s1 + $0x2a8] sm:$0xff]
      %v269 = vld [vmem:[%s1 + $0x2b0] sm:$0xff]
      %v270 = vld [vmem:[%s1 + $0x2b8] sm:$0xff]
      %v271 = vld [vmem:[%s1 + $0x2c0] sm:$0xff]
      %v272 = vld [vmem:[%s1 + $0x2c8] sm:$0xff]
      %v273 = vld [vmem:[%s1 + $0x2d0] sm:$0xff]
      %v274 = vld [vmem:[%s1 + $0x2d8] sm:$0xff]
      %v275 = vld [vmem:[%s1 + $0x2e0] sm:$0xff]
      %v276 = vld [vmem:[%s1 + $0x2e8] sm:$0xff]
      %v277 = vld [vmem:[%s1 + $0x2f0] sm:$0xff]
      %v278 = vld [vmem:[%s1 + $0x2f8] sm:$0xff]
      %v279 = vld [vmem:[%s1 + $0x300] sm:$0xff]
      %v280 = vld [vmem:[%s1 + $0x308] sm:$0xff]
      %v281 = vld [vmem:[%s1 + $0x310] sm:$0xff]
      %v282 = vld [vmem:[%s1 + $0x318] sm:$0xff]
      %v283 = vld [vmem:[%s1 + $0x320] sm:$0xff]
      %v284 = vld [vmem:[%s1 + $0x328] sm:$0xff]
      %v285 = vld [vmem:[%s1 + $0x330] sm:$0xff]
      %v286 = vld [vmem:[%s1 + $0x338] sm:$0xff]
      %v287 = vld [vmem:[%s1 + $0x340] sm:$0xff]
      %v288 = vld [vmem:[%s1 + $0x348] sm:$0xff]
      %v289 = vld [vmem:[%s1 + $0x350] sm:$0xff]
      %v290 = vld [vmem:[%s1 + $0x358] sm:$0xff]
      %v291 = vld [vmem:[%s1 + $0x360] sm:$0xff]
      %v292 = vld [vmem:[%s1 + $0x368] sm:$0xff]
      %v293 = vld [vmem:[%s1 + $0x370] sm:$0xff]
      %v294 = vld [vmem:[%s1 + $0x378] sm:$0xff]
      %v295 = vld [vmem:[%s1 + $0x380] sm:$0xff]
      %v296 = vld [vmem:[%s1 + $0x388] sm:$0xff]
      %v297 = vld [vmem:[%s1 + $0x390] sm:$0xff]
      %v298 = vld [vmem:[%s1 + $0x398] sm:$0xff]
      %v299 = vld [vmem:[%s1 + $0x3a0] sm:$0xff]
      %v300 = vld [vmem:[%s1 + $0x3a8] sm:$0xff]
      %v301 = vld [vmem:[%s1 + $0x3b0] sm:$0xff]
      %v302 = vld [vmem:[%s1 + $0x3b8] sm:$0xff]
      %v303 = vld [vmem:[%s1 + $0x3c0] sm:$0xff]
      %v304 = vld [vmem:[%s1 + $0x3c8] sm:$0xff]
      %v305 = vld [vmem:[%s1 + $0x3d0] sm:$0xff]
      %v306 = vld [vmem:[%s1 + $0x3d8] sm:$0xff]
      %v307 = vld [vmem:[%s1 + $0x3e0] sm:$0xff]
      %v308 = vld [vmem:[%s1 + $0x3e8] sm:$0xff]
      %v309 = vld [vmem:[%s1 + $0x3f0] sm:$0xff]
      %v310 = vld [vmem:[%s1 + $0x3f8] sm:$0xff]
      %v313 = vunpack.c.l.s4 1983009808
      %v314 = vunpack.c.0.s8 %v313
      %v315 = vlaneseq
      %v316 = vshrl.u32 %v315, 7
      %v317 = vsub.s32 %v314, %v316
      %v318 = vrot.slane %v182, %v317
      %v319 = vcombine.high %v318, %v318
      %v450 = vunpack.c.l.b16 %v183
      %v451 = vunpack.c.h.b16 %v183
      %v452 = vunpack.c.l.b16 %v184
      %v453 = vunpack.c.h.b16 %v184
      %v454 = vunpack.c.l.b16 %v185
      %v455 = vunpack.c.h.b16 %v185
      %v456 = vunpack.c.l.b16 %v186
      %v457 = vunpack.c.h.b16 %v186
      %v458 = vunpack.c.l.b16 %v187
      %v459 = vunpack.c.h.b16 %v187
      %v460 = vunpack.c.l.b16 %v188
      %v461 = vunpack.c.h.b16 %v188
      %v462 = vunpack.c.l.b16 %v189
      %v463 = vunpack.c.h.b16 %v189
      %v464 = vunpack.c.l.b16 %v190
      %v465 = vunpack.c.h.b16 %v190
      %v466 = vunpack.c.l.b16 %v191
      %v467 = vunpack.c.h.b16 %v191
      %v468 = vunpack.c.l.b16 %v192
      %v469 = vunpack.c.h.b16 %v192
      %v470 = vunpack.c.l.b16 %v193
      %v471 = vunpack.c.h.b16 %v193
      %v472 = vunpack.c.l.b16 %v194
      %v473 = vunpack.c.h.b16 %v194
      %v474 = vunpack.c.l.b16 %v195
      %v475 = vunpack.c.h.b16 %v195
      %v476 = vunpack.c.l.b16 %v196
      %v477 = vunpack.c.h.b16 %v196
      %v478 = vunpack.c.l.b16 %v197
      %v479 = vunpack.c.h.b16 %v197
      %v480 = vunpack.c.l.b16 %v198
      %v481 = vunpack.c.h.b16 %v198
      %v482 = vunpack.c.l.b16 %v199
      %v483 = vunpack.c.h.b16 %v199
      %v484 = vunpack.c.l.b16 %v200
      %v485 = vunpack.c.h.b16 %v200
      %v486 = vunpack.c.l.b16 %v201
      %v487 = vunpack.c.h.b16 %v201
      %v488 = vunpack.c.l.b16 %v202
      %v489 = vunpack.c.h.b16 %v202
      %v490 = vunpack.c.l.b16 %v203
      %v491 = vunpack.c.h.b16 %v203
      %v492 = vunpack.c.l.b16 %v204
      %v493 = vunpack.c.h.b16 %v204
      %v494 = vunpack.c.l.b16 %v205
      %v495 = vunpack.c.h.b16 %v205
      %v496 = vunpack.c.l.b16 %v206
      %v497 = vunpack.c.h.b16 %v206
      %v498 = vunpack.c.l.b16 %v207
      %v499 = vunpack.c.h.b16 %v207
      %v500 = vunpack.c.l.b16 %v208
      %v501 = vunpack.c.h.b16 %v208
      %v502 = vunpack.c.l.b16 %v209
      %v503 = vunpack.c.h.b16 %v209
      %v504 = vunpack.c.l.b16 %v210
      %v505 = vunpack.c.h.b16 %v210
      %v506 = vunpack.c.l.b16 %v211
      %v507 = vunpack.c.h.b16 %v211
      %v508 = vunpack.c.l.b16 %v212
      %v509 = vunpack.c.h.b16 %v212
      %v510 = vunpack.c.l.b16 %v213
      %v511 = vunpack.c.h.b16 %v213
      %v512 = vunpack.c.l.b16 %v214
      %v513 = vunpack.c.h.b16 %v214
      %v514 = vunpack.c.l.b16 %v215
      %v515 = vunpack.c.h.b16 %v215
      %v516 = vunpack.c.l.b16 %v216
      %v517 = vunpack.c.h.b16 %v216
      %v518 = vunpack.c.l.b16 %v217
      %v519 = vunpack.c.h.b16 %v217
      %v520 = vunpack.c.l.b16 %v218
      %v521 = vunpack.c.h.b16 %v218
      %v522 = vunpack.c.l.b16 %v219
      %v523 = vunpack.c.h.b16 %v219
      %v524 = vunpack.c.l.b16 %v220
      %v525 = vunpack.c.h.b16 %v220
      %v526 = vunpack.c.l.b16 %v221
      %v527 = vunpack.c.h.b16 %v221
      %v528 = vunpack.c.l.b16 %v222
      %v529 = vunpack.c.h.b16 %v222
      %v530 = vunpack.c.l.b16 %v223
      %v531 = vunpack.c.h.b16 %v223
      %v532 = vunpack.c.l.b16 %v224
      %v533 = vunpack.c.h.b16 %v224
      %v534 = vunpack.c.l.b16 %v225
      %v535 = vunpack.c.h.b16 %v225
      %v536 = vunpack.c.l.b16 %v226
      %v537 = vunpack.c.h.b16 %v226
      %v538 = vunpack.c.l.b16 %v227
      %v539 = vunpack.c.h.b16 %v227
      %v540 = vunpack.c.l.b16 %v228
      %v541 = vunpack.c.h.b16 %v228
      %v542 = vunpack.c.l.b16 %v229
      %v543 = vunpack.c.h.b16 %v229
      %v544 = vunpack.c.l.b16 %v230
      %v545 = vunpack.c.h.b16 %v230
      %v546 = vunpack.c.l.b16 %v231
      %v547 = vunpack.c.h.b16 %v231
      %v548 = vunpack.c.l.b16 %v232
      %v549 = vunpack.c.h.b16 %v232
      %v550 = vunpack.c.l.b16 %v233
      %v551 = vunpack.c.h.b16 %v233
      %v552 = vunpack.c.l.b16 %v234
      %v553 = vunpack.c.h.b16 %v234
      %v554 = vunpack.c.l.b16 %v235
      %v555 = vunpack.c.h.b16 %v235
      %v556 = vunpack.c.l.b16 %v236
      %v557 = vunpack.c.h.b16 %v236
      %v558 = vunpack.c.l.b16 %v237
      %v559 = vunpack.c.h.b16 %v237
      %v560 = vunpack.c.l.b16 %v238
      %v561 = vunpack.c.h.b16 %v238
      %v562 = vunpack.c.l.b16 %v239
      %v563 = vunpack.c.h.b16 %v239
      %v564 = vunpack.c.l.b16 %v240
      %v565 = vunpack.c.h.b16 %v240
      %v566 = vunpack.c.l.b16 %v241
      %v567 = vunpack.c.h.b16 %v241
      %v568 = vunpack.c.l.b16 %v242
      %v569 = vunpack.c.h.b16 %v242
      %v570 = vunpack.c.l.b16 %v243
      %v571 = vunpack.c.h.b16 %v243
      %v572 = vunpack.c.l.b16 %v244
      %v573 = vunpack.c.h.b16 %v244
      %v574 = vunpack.c.l.b16 %v245
      %v575 = vunpack.c.h.b16 %v245
      %v576 = vunpack.c.l.b16 %v246
      %v577 = vunpack.c.h.b16 %v246
      %v578 = vunpack.c.l.b16 %v247
      %v579 = vunpack.c.h.b16 %v247
      %v580 = vunpack.c.l.b16 %v248
      %v581 = vunpack.c.h.b16 %v248
      %v582 = vunpack.c.l.b16 %v249
      %v583 = vunpack.c.h.b16 %v249
      %v584 = vunpack.c.l.b16 %v250
      %v585 = vunpack.c.h.b16 %v250
      %v586 = vunpack.c.l.b16 %v251
      %v587 = vunpack.c.h.b16 %v251
      %v588 = vunpack.c.l.b16 %v252
      %v589 = vunpack.c.h.b16 %v252
      %v590 = vunpack.c.l.b16 %v253
      %v591 = vunpack.c.h.b16 %v253
      %v592 = vunpack.c.l.b16 %v254
      %v593 = vunpack.c.h.b16 %v254
      %v594 = vunpack.c.l.b16 %v255
      %v595 = vunpack.c.h.b16 %v255
      %v596 = vunpack.c.l.b16 %v256
      %v597 = vunpack.c.h.b16 %v256
      %v598 = vunpack.c.l.b16 %v257
      %v599 = vunpack.c.h.b16 %v257
      %v600 = vunpack.c.l.b16 %v258
      %v601 = vunpack.c.h.b16 %v258
      %v602 = vunpack.c.l.b16 %v259
      %v603 = vunpack.c.h.b16 %v259
      %v604 = vunpack.c.l.b16 %v260
      %v605 = vunpack.c.h.b16 %v260
      %v606 = vunpack.c.l.b16 %v261
      %v607 = vunpack.c.h.b16 %v261
      %v608 = vunpack.c.l.b16 %v262
      %v609 = vunpack.c.h.b16 %v262
      %v610 = vunpack.c.l.b16 %v263
      %v611 = vunpack.c.h.b16 %v263
      %v612 = vunpack.c.l.b16 %v264
      %v613 = vunpack.c.h.b16 %v264
      %v614 = vunpack.c.l.b16 %v265
      %v615 = vunpack.c.h.b16 %v265
      %v616 = vunpack.c.l.b16 %v266
      %v617 = vunpack.c.h.b16 %v266
      %v618 = vunpack.c.l.b16 %v267
      %v619 = vunpack.c.h.b16 %v267
      %v620 = vunpack.c.l.b16 %v268
      %v621 = vunpack.c.h.b16 %v268
      %v622 = vunpack.c.l.b16 %v269
      %v623 = vunpack.c.h.b16 %v269
      %v624 = vunpack.c.l.b16 %v270
      %v625 = vunpack.c.h.b16 %v270
      %v626 = vunpack.c.l.b16 %v271
      %v627 = vunpack.c.h.b16 %v271
      %v628 = vunpack.c.l.b16 %v272
      %v629 = vunpack.c.h.b16 %v272
      %v630 = vunpack.c.l.b16 %v273
      %v631 = vunpack.c.h.b16 %v273
      %v632 = vunpack.c.l.b16 %v274
      %v633 = vunpack.c.h.b16 %v274
      %v634 = vunpack.c.l.b16 %v275
      %v635 = vunpack.c.h.b16 %v275
      %v636 = vunpack.c.l.b16 %v276
      %v637 = vunpack.c.h.b16 %v276
      %v638 = vunpack.c.l.b16 %v277
      %v639 = vunpack.c.h.b16 %v277
      %v640 = vunpack.c.l.b16 %v278
      %v641 = vunpack.c.h.b16 %v278
      %v642 = vunpack.c.l.b16 %v279
      %v643 = vunpack.c.h.b16 %v279
      %v644 = vunpack.c.l.b16 %v280
      %v645 = vunpack.c.h.b16 %v280
      %v646 = vunpack.c.l.b16 %v281
      %v647 = vunpack.c.h.b16 %v281
      %v648 = vunpack.c.l.b16 %v282
      %v649 = vunpack.c.h.b16 %v282
      %v650 = vunpack.c.l.b16 %v283
      %v651 = vunpack.c.h.b16 %v283
      %v652 = vunpack.c.l.b16 %v284
      %v653 = vunpack.c.h.b16 %v284
      %v654 = vunpack.c.l.b16 %v285
      %v655 = vunpack.c.h.b16 %v285
      %v656 = vunpack.c.l.b16 %v286
      %v657 = vunpack.c.h.b16 %v286
      %v658 = vunpack.c.l.b16 %v287
      %v659 = vunpack.c.h.b16 %v287
      %v660 = vunpack.c.l.b16 %v288
      %v661 = vunpack.c.h.b16 %v288
      %v662 = vunpack.c.l.b16 %v289
      %v663 = vunpack.c.h.b16 %v289
      %v664 = vunpack.c.l.b16 %v290
      %v665 = vunpack.c.h.b16 %v290
      %v666 = vunpack.c.l.b16 %v291
      %v667 = vunpack.c.h.b16 %v291
      %v668 = vunpack.c.l.b16 %v292
      %v669 = vunpack.c.h.b16 %v292
      %v670 = vunpack.c.l.b16 %v293
      %v671 = vunpack.c.h.b16 %v293
      %v672 = vunpack.c.l.b16 %v294
      %v673 = vunpack.c.h.b16 %v294
      %v674 = vunpack.c.l.b16 %v295
      %v675 = vunpack.c.h.b16 %v295
      %v676 = vunpack.c.l.b16 %v296
      %v677 = vunpack.c.h.b16 %v296
      %v678 = vunpack.c.l.b16 %v297
      %v679 = vunpack.c.h.b16 %v297
      %v680 = vunpack.c.l.b16 %v298
      %v681 = vunpack.c.h.b16 %v298
      %v682 = vunpack.c.l.b16 %v299
      %v683 = vunpack.c.h.b16 %v299
      %v684 = vunpack.c.l.b16 %v300
      %v685 = vunpack.c.h.b16 %v300
      %v686 = vunpack.c.l.b16 %v301
      %v687 = vunpack.c.h.b16 %v301
      %v688 = vunpack.c.l.b16 %v302
      %v689 = vunpack.c.h.b16 %v302
      %v690 = vunpack.c.l.b16 %v303
      %v691 = vunpack.c.h.b16 %v303
      %v692 = vunpack.c.l.b16 %v304
      %v693 = vunpack.c.h.b16 %v304
      %v694 = vunpack.c.l.b16 %v305
      %v695 = vunpack.c.h.b16 %v305
      %v696 = vunpack.c.l.b16 %v306
      %v697 = vunpack.c.h.b16 %v306
      %v698 = vunpack.c.l.b16 %v307
      %v699 = vunpack.c.h.b16 %v307
      %v700 = vunpack.c.l.b16 %v308
      %v701 = vunpack.c.h.b16 %v308
      %v702 = vunpack.c.l.b16 %v309
      %v703 = vunpack.c.h.b16 %v309
      %v704 = vunpack.c.l.b16 %v310
      %v705 = vunpack.c.h.b16 %v310
      %v706 = vpack.c.b16 %v458, %v450
      %v707 = vpack.c.b16 %v459, %v451
      %v708 = vpack.c.b16 %v460, %v452
      %v709 = vpack.c.b16 %v461, %v453
      %v710 = vpack.c.b16 %v462, %v454
      %v711 = vpack.c.b16 %v463, %v455
      %v712 = vpack.c.b16 %v464, %v456
      %v713 = vpack.c.b16 %v465, %v457
      %v714 = vpack.c.b16 %v474, %v466
      %v715 = vpack.c.b16 %v475, %v467
      %v716 = vpack.c.b16 %v476, %v468
      %v717 = vpack.c.b16 %v477, %v469
      %v718 = vpack.c.b16 %v478, %v470
      %v719 = vpack.c.b16 %v479, %v471
      %v720 = vpack.c.b16 %v480, %v472
      %v721 = vpack.c.b16 %v481, %v473
      %v722 = vpack.c.b16 %v490, %v482
      %v723 = vpack.c.b16 %v491, %v483
      %v724 = vpack.c.b16 %v492, %v484
      %v725 = vpack.c.b16 %v493, %v485
      %v726 = vpack.c.b16 %v494, %v486
      %v727 = vpack.c.b16 %v495, %v487
      %v728 = vpack.c.b16 %v496, %v488
      %v729 = vpack.c.b16 %v497, %v489
      %v730 = vpack.c.b16 %v506, %v498
      %v731 = vpack.c.b16 %v507, %v499
      %v732 = vpack.c.b16 %v508, %v500
      %v733 = vpack.c.b16 %v509, %v501
      %v734 = vpack.c.b16 %v510, %v502
      %v735 = vpack.c.b16 %v511, %v503
      %v736 = vpack.c.b16 %v512, %v504
      %v737 = vpack.c.b16 %v513, %v505
      %v738 = vpack.c.b16 %v522, %v514
      %v739 = vpack.c.b16 %v523, %v515
      %v740 = vpack.c.b16 %v524, %v516
      %v741 = vpack.c.b16 %v525, %v517
      %v742 = vpack.c.b16 %v526, %v518
      %v743 = vpack.c.b16 %v527, %v519
      %v744 = vpack.c.b16 %v528, %v520
      %v745 = vpack.c.b16 %v529, %v521
      %v746 = vpack.c.b16 %v538, %v530
      %v747 = vpack.c.b16 %v539, %v531
      %v748 = vpack.c.b16 %v540, %v532
      %v749 = vpack.c.b16 %v541, %v533
      %v750 = vpack.c.b16 %v542, %v534
      %v751 = vpack.c.b16 %v543, %v535
      %v752 = vpack.c.b16 %v544, %v536
      %v753 = vpack.c.b16 %v545, %v537
      %v754 = vpack.c.b16 %v554, %v546
      %v755 = vpack.c.b16 %v555, %v547
      %v756 = vpack.c.b16 %v556, %v548
      %v757 = vpack.c.b16 %v557, %v549
      %v758 = vpack.c.b16 %v558, %v550
      %v759 = vpack.c.b16 %v559, %v551
      %v760 = vpack.c.b16 %v560, %v552
      %v761 = vpack.c.b16 %v561, %v553
      %v762 = vpack.c.b16 %v570, %v562
      %v763 = vpack.c.b16 %v571, %v563
      %v764 = vpack.c.b16 %v572, %v564
      %v765 = vpack.c.b16 %v573, %v565
      %v766 = vpack.c.b16 %v574, %v566
      %v767 = vpack.c.b16 %v575, %v567
      %v768 = vpack.c.b16 %v576, %v568
      %v769 = vpack.c.b16 %v577, %v569
      %v770 = vpack.c.b16 %v586, %v578
      %v771 = vpack.c.b16 %v587, %v579
      %v772 = vpack.c.b16 %v588, %v580
      %v773 = vpack.c.b16 %v589, %v581
      %v774 = vpack.c.b16 %v590, %v582
      %v775 = vpack.c.b16 %v591, %v583
      %v776 = vpack.c.b16 %v592, %v584
      %v777 = vpack.c.b16 %v593, %v585
      %v778 = vpack.c.b16 %v602, %v594
      %v779 = vpack.c.b16 %v603, %v595
      %v780 = vpack.c.b16 %v604, %v596
      %v781 = vpack.c.b16 %v605, %v597
      %v782 = vpack.c.b16 %v606, %v598
      %v783 = vpack.c.b16 %v607, %v599
      %v784 = vpack.c.b16 %v608, %v600
      %v785 = vpack.c.b16 %v609, %v601
      %v786 = vpack.c.b16 %v618, %v610
      %v787 = vpack.c.b16 %v619, %v611
      %v788 = vpack.c.b16 %v620, %v612
      %v789 = vpack.c.b16 %v621, %v613
      %v790 = vpack.c.b16 %v622, %v614
      %v791 = vpack.c.b16 %v623, %v615
      %v792 = vpack.c.b16 %v624, %v616
      %v793 = vpack.c.b16 %v625, %v617
      %v794 = vpack.c.b16 %v634, %v626
      %v795 = vpack.c.b16 %v635, %v627
      %v796 = vpack.c.b16 %v636, %v628
      %v797 = vpack.c.b16 %v637, %v629
      %v798 = vpack.c.b16 %v638, %v630
      %v799 = vpack.c.b16 %v639, %v631
      %v800 = vpack.c.b16 %v640, %v632
      %v801 = vpack.c.b16 %v641, %v633
      %v802 = vpack.c.b16 %v650, %v642
      %v803 = vpack.c.b16 %v651, %v643
      %v804 = vpack.c.b16 %v652, %v644
      %v805 = vpack.c.b16 %v653, %v645
      %v806 = vpack.c.b16 %v654, %v646
      %v807 = vpack.c.b16 %v655, %v647
      %v808 = vpack.c.b16 %v656, %v648
      %v809 = vpack.c.b16 %v657, %v649
      %v810 = vpack.c.b16 %v666, %v658
      %v811 = vpack.c.b16 %v667, %v659
      %v812 = vpack.c.b16 %v668, %v660
      %v813 = vpack.c.b16 %v669, %v661
      %v814 = vpack.c.b16 %v670, %v662
      %v815 = vpack.c.b16 %v671, %v663
      %v816 = vpack.c.b16 %v672, %v664
      %v817 = vpack.c.b16 %v673, %v665
      %v818 = vpack.c.b16 %v682, %v674
      %v819 = vpack.c.b16 %v683, %v675
      %v820 = vpack.c.b16 %v684, %v676
      %v821 = vpack.c.b16 %v685, %v677
      %v822 = vpack.c.b16 %v686, %v678
      %v823 = vpack.c.b16 %v687, %v679
      %v824 = vpack.c.b16 %v688, %v680
      %v825 = vpack.c.b16 %v689, %v681
      %v826 = vpack.c.b16 %v698, %v690
      %v827 = vpack.c.b16 %v699, %v691
      %v828 = vpack.c.b16 %v700, %v692
      %v829 = vpack.c.b16 %v701, %v693
      %v830 = vpack.c.b16 %v702, %v694
      %v831 = vpack.c.b16 %v703, %v695
      %v832 = vpack.c.b16 %v704, %v696
      %v833 = vpack.c.b16 %v705, %v697
      %962 = vmatprep.subr.bf16.mxu0 %v763
      %963 = vmatpush1.bf16.msra.mxu0 %v762
      %964 = vmatprep.subr.bf16.mxu0 %v755
      %965 = vmatpush1.bf16.msra.mxu0 %v754
      %966 = vmatprep.subr.bf16.mxu0 %v747
      %967 = vmatpush1.bf16.msra.mxu0 %v746
      %968 = vmatprep.subr.bf16.mxu0 %v739
      %969 = vmatpush1.bf16.msra.mxu0 %v738
      %970 = vmatprep.subr.bf16.mxu0 %v731
      %971 = vmatpush1.bf16.msra.mxu0 %v730
      %972 = vmatprep.subr.bf16.mxu0 %v723
      %973 = vmatpush1.bf16.msra.mxu0 %v722
      %974 = vmatprep.subr.bf16.mxu0 %v715
      %975 = vmatpush1.bf16.msra.mxu0 %v714
      %976 = vmatprep.subr.bf16.mxu0 %v707
      %977 = vmatpush1.bf16.msra.mxu0 %v706
      %978 = vmatprep.subr.bf16.mxu0 %v827
      %979 = vmatpush2.bf16.msra.mxu0 %v826
      %980 = vmatprep.subr.bf16.mxu0 %v819
      %981 = vmatpush2.bf16.msra.mxu0 %v818
      %982 = vmatprep.subr.bf16.mxu0 %v811
      %983 = vmatpush2.bf16.msra.mxu0 %v810
      %984 = vmatprep.subr.bf16.mxu0 %v803
      %985 = vmatpush2.bf16.msra.mxu0 %v802
      %986 = vmatprep.subr.bf16.mxu0 %v795
      %987 = vmatpush2.bf16.msra.mxu0 %v794
      %988 = vmatprep.subr.bf16.mxu0 %v787
      %989 = vmatpush2.bf16.msra.mxu0 %v786
      %990 = vmatprep.subr.bf16.mxu0 %v779
      %991 = vmatpush2.bf16.msra.mxu0 %v778
      %992 = vmatprep.subr.bf16.mxu0 %v771
      %993 = vmatpush2.bf16.msra.mxu0 %v770
      %994 = vmatprep.mubr.bf16.mxu0 %v319
      %995 = vmatmul.mubr.bf16.gmra.mxu0 %v318
      %v996 = vpop.f32.mrf.mxu0
      %v997 = vadd.f32 0.0, %v996
      %v998 = vpop.f32.mrf.mxu0
      %v999 = vadd.f32 0.0, %v998
      %v1000 = vpop.f32.mrf.mxu0
      %v1001 = vpop.f32.mrf.mxu0
      %1002 = vdwg.mxu0
      %1003 = vmatprep.subr.bf16.mxu0 %v765
      %1004 = vmatpush1.bf16.msra.mxu0 %v764
      %1005 = vmatprep.subr.bf16.mxu0 %v757
      %1006 = vmatpush1.bf16.msra.mxu0 %v756
      %1007 = vmatprep.subr.bf16.mxu0 %v749
      %1008 = vmatpush1.bf16.msra.mxu0 %v748
      %1009 = vmatprep.subr.bf16.mxu0 %v741
      %1010 = vmatpush1.bf16.msra.mxu0 %v740
      %1011 = vmatprep.subr.bf16.mxu0 %v733
      %1012 = vmatpush1.bf16.msra.mxu0 %v732
      %1013 = vmatprep.subr.bf16.mxu0 %v725
      %1014 = vmatpush1.bf16.msra.mxu0 %v724
      %1015 = vmatprep.subr.bf16.mxu0 %v717
      %1016 = vmatpush1.bf16.msra.mxu0 %v716
      %1017 = vmatprep.subr.bf16.mxu0 %v709
      %1018 = vmatpush1.bf16.msra.mxu0 %v708
      %1019 = vmatprep.subr.bf16.mxu0 %v829
      %1020 = vmatpush2.bf16.msra.mxu0 %v828
      %1021 = vmatprep.subr.bf16.mxu0 %v821
      %1022 = vmatpush2.bf16.msra.mxu0 %v820
      %1023 = vmatprep.subr.bf16.mxu0 %v813
      %1024 = vmatpush2.bf16.msra.mxu0 %v812
      %1025 = vmatprep.subr.bf16.mxu0 %v805
      %1026 = vmatpush2.bf16.msra.mxu0 %v804
      %1027 = vmatprep.subr.bf16.mxu0 %v797
      %1028 = vmatpush2.bf16.msra.mxu0 %v796
      %1029 = vmatprep.subr.bf16.mxu0 %v789
      %1030 = vmatpush2.bf16.msra.mxu0 %v788
      %1031 = vmatprep.subr.bf16.mxu0 %v781
      %1032 = vmatpush2.bf16.msra.mxu0 %v780
      %1033 = vmatprep.subr.bf16.mxu0 %v773
      %1034 = vmatpush2.bf16.msra.mxu0 %v772
      %1035 = vmatprep.mubr.bf16.mxu0 %v319
      %1036 = vmatmul.mubr.bf16.gmra.mxu0 %v318
      %v1037 = vpop.f32.mrf.mxu0
      %v1038 = vadd.f32 0.0, %v1037
      %v1039 = vpop.f32.mrf.mxu0
      %v1040 = vadd.f32 0.0, %v1039
      %v1041 = vpop.f32.mrf.mxu0
      %v1042 = vpop.f32.mrf.mxu0
      %1043 = vdwg.mxu0
      %1044 = vmatprep.subr.bf16.mxu0 %v767
      %1045 = vmatpush1.bf16.msra.mxu0 %v766
      %1046 = vmatprep.subr.bf16.mxu0 %v759
      %1047 = vmatpush1.bf16.msra.mxu0 %v758
      %1048 = vmatprep.subr.bf16.mxu0 %v751
      %1049 = vmatpush1.bf16.msra.mxu0 %v750
      %1050 = vmatprep.subr.bf16.mxu0 %v743
      %1051 = vmatpush1.bf16.msra.mxu0 %v742
      %1052 = vmatprep.subr.bf16.mxu0 %v735
      %1053 = vmatpush1.bf16.msra.mxu0 %v734
      %1054 = vmatprep.subr.bf16.mxu0 %v727
      %1055 = vmatpush1.bf16.msra.mxu0 %v726
      %1056 = vmatprep.subr.bf16.mxu0 %v719
      %1057 = vmatpush1.bf16.msra.mxu0 %v718
      %1058 = vmatprep.subr.bf16.mxu0 %v711
      %1059 = vmatpush1.bf16.msra.mxu0 %v710
      %1060 = vmatprep.subr.bf16.mxu0 %v831
      %1061 = vmatpush2.bf16.msra.mxu0 %v830
      %1062 = vmatprep.subr.bf16.mxu0 %v823
      %1063 = vmatpush2.bf16.msra.mxu0 %v822
      %1064 = vmatprep.subr.bf16.mxu0 %v815
      %1065 = vmatpush2.bf16.msra.mxu0 %v814
      %1066 = vmatprep.subr.bf16.mxu0 %v807
      %1067 = vmatpush2.bf16.msra.mxu0 %v806
      %1068 = vmatprep.subr.bf16.mxu0 %v799
      %1069 = vmatpush2.bf16.msra.mxu0 %v798
      %1070 = vmatprep.subr.bf16.mxu0 %v791
      %1071 = vmatpush2.bf16.msra.mxu0 %v790
      %1072 = vmatprep.subr.bf16.mxu0 %v783
      %1073 = vmatpush2.bf16.msra.mxu0 %v782
      %1074 = vmatprep.subr.bf16.mxu0 %v775
      %1075 = vmatpush2.bf16.msra.mxu0 %v774
      %1076 = vmatprep.mubr.bf16.mxu0 %v319
      %1077 = vmatmul.mubr.bf16.gmra.mxu0 %v318
      %v1078 = vpop.f32.mrf.mxu0
      %v1079 = vadd.f32 0.0, %v1078
      %v1080 = vpop.f32.mrf.mxu0
      %v1081 = vadd.f32 0.0, %v1080
      %v1082 = vpop.f32.mrf.mxu0
      %v1083 = vpop.f32.mrf.mxu0
      %1084 = vdwg.mxu0
      %1085 = vmatprep.subr.bf16.mxu0 %v769
      %1086 = vmatpush1.bf16.msra.mxu0 %v768
      %1087 = vmatprep.subr.bf16.mxu0 %v761
      %1088 = vmatpush1.bf16.msra.mxu0 %v760
      %1089 = vmatprep.subr.bf16.mxu0 %v753
      %1090 = vmatpush1.bf16.msra.mxu0 %v752
      %1091 = vmatprep.subr.bf16.mxu0 %v745
      %1092 = vmatpush1.bf16.msra.mxu0 %v744
      %1093 = vmatprep.subr.bf16.mxu0 %v737
      %1094 = vmatpush1.bf16.msra.mxu0 %v736
      %1095 = vmatprep.subr.bf16.mxu0 %v729
      %1096 = vmatpush1.bf16.msra.mxu0 %v728
      %1097 = vmatprep.subr.bf16.mxu0 %v721
      %1098 = vmatpush1.bf16.msra.mxu0 %v720
      %1099 = vmatprep.subr.bf16.mxu0 %v713
      %1100 = vmatpush1.bf16.msra.mxu0 %v712
      %1101 = vmatprep.subr.bf16.mxu0 %v833
      %1102 = vmatpush2.bf16.msra.mxu0 %v832
      %1103 = vmatprep.subr.bf16.mxu0 %v825
      %1104 = vmatpush2.bf16.msra.mxu0 %v824
      %1105 = vmatprep.subr.bf16.mxu0 %v817
      %1106 = vmatpush2.bf16.msra.mxu0 %v816
      %1107 = vmatprep.subr.bf16.mxu0 %v809
      %1108 = vmatpush2.bf16.msra.mxu0 %v808
      %1109 = vmatprep.subr.bf16.mxu0 %v801
      %1110 = vmatpush2.bf16.msra.mxu0 %v800
      %1111 = vmatprep.subr.bf16.mxu0 %v793
      %1112 = vmatpush2.bf16.msra.mxu0 %v792
      %1113 = vmatprep.subr.bf16.mxu0 %v785
      %1114 = vmatpush2.bf16.msra.mxu0 %v784
      %1115 = vmatprep.subr.bf16.mxu0 %v777
      %1116 = vmatpush2.bf16.msra.mxu0 %v776
      %1117 = vmatprep.mubr.bf16.mxu0 %v319
      %1118 = vmatmul.mubr.bf16.gmra.mxu0 %v318
      %v1119 = vpop.f32.mrf.mxu0
      %v1120 = vadd.f32 0.0, %v1119
      %v1121 = vpop.f32.mrf.mxu0
      %v1122 = vadd.f32 0.0, %v1121
      %v1123 = vpop.f32.mrf.mxu0
      %v1124 = vpop.f32.mrf.mxu0
      %1125 = vdwg.mxu0
      %v1134 = vcombine.low %v997, %v999
      %v1135 = vcombine.low %v1038, %v1040
      %v1136 = vcombine.low %v1079, %v1081
      %v1137 = vcombine.low %v1120, %v1122
      %1142 = vst [vmem:[%s177] sm:$0xff] %v1134
      %1143 = vst [vmem:[%s177 + $0x8] sm:$0xff] %v1135
      %1144 = vst [vmem:[%s177 + $0x10] sm:$0xff] %v1136
      %1145 = vst [vmem:[%s177 + $0x18] sm:$0xff] %v1137
      %vm1146 = vcmask 1043456
      %v1147 = vsel %vm1146, %v997, 0.0
      %v1148 = vsel %vm1146, %v999, 0.0
      %v1149 = vadd.f32 %v1147, %v1148
      %v1150 = vsel %vm1146, %v1038, 0.0
      %v1151 = vadd.f32 %v1149, %v1150
      %v1152 = vsel %vm1146, %v1040, 0.0
      %v1153 = vadd.f32 %v1151, %v1152
      %v1154 = vsel %vm1146, %v1079, 0.0
      %v1155 = vadd.f32 %v1153, %v1154
      %v1156 = vsel %vm1146, %v1081, 0.0
      %v1157 = vadd.f32 %v1155, %v1156
      %v1158 = vsel %vm1146, %v1120, 0.0
      %v1159 = vadd.f32 %v1157, %v1158
      %v1160 = vsel %vm1146, %v1122, 0.0
      %v1161 = vadd.f32 %v1159, %v1160
      %1162 = vadd.xlane.f32.xlu0 %v1161
      %v1163 = vpop.xlane.xlu0 %1162
      %vm1164 = vcmask 3072
      %1165 = vst.msk [vmem:[%s181] sm:$0xf] %vm1164, %v1163
      %v1166 = vmul.f32 %v997, %v997
      %v1167 = vmul.f32 %v999, %v999
      %v1168 = vmul.f32 %v1038, %v1038
      %v1169 = vmul.f32 %v1040, %v1040
      %v1170 = vmul.f32 %v1079, %v1079
      %v1171 = vmul.f32 %v1081, %v1081
      %v1172 = vmul.f32 %v1120, %v1120
      %v1173 = vmul.f32 %v1122, %v1122
      %v1174 = vsel %vm1146, %v1166, 0.0
      %v1175 = vsel %vm1146, %v1167, 0.0
      %v1176 = vadd.f32 %v1174, %v1175
      %v1177 = vsel %vm1146, %v1168, 0.0
      %v1178 = vadd.f32 %v1176, %v1177
      %v1179 = vsel %vm1146, %v1169, 0.0
      %v1180 = vadd.f32 %v1178, %v1179
      %v1181 = vsel %vm1146, %v1170, 0.0
      %v1182 = vadd.f32 %v1180, %v1181
      %v1183 = vsel %vm1146, %v1171, 0.0
      %v1184 = vadd.f32 %v1182, %v1183
      %v1185 = vsel %vm1146, %v1172, 0.0
      %v1186 = vadd.f32 %v1184, %v1185
      %v1187 = vsel %vm1146, %v1173, 0.0
      %v1188 = vadd.f32 %v1186, %v1187
      %1189 = vadd.xlane.f32.xlu0 %v1188
      %v1190 = vpop.xlane.xlu0 %1189
      %vm1191 = vcmask 11272
      %1192 = vst.msk [vmem:[%s181] sm:$0xf] %vm1191, %v1190
      %p1193 = scmp.lt.s32.totalorder %s15, 1
      %s1194 = scalar_select %p1193, %s15, 1
      %s1195 = smul.addr %s1194, 8
      %s1196 = smul.addr %s1195, 4
      %s1197 = scalar_lea.vmem %s2, %s1196
      %p1198 = scmp.lt.s32.totalorder %s15, 1
      %s1199 = scalar_select %p1198, %s15, 1
      %s1200 = smul.addr %s1199, 4
      %s1201 = scalar_lea.vmem %s3, %s1200
      // Predicated region
      $region29: #{upconv_forward.3} parent=27 // pred_check
        %p1202 = pneg %p80
      $region30: #{upconv_forward.3} parent=27 // pred_check_branch
        %1204 = sbr.rel (%p1202) target = $region32
      $region31: #{upconv_forward.3} parent=27 // pred_region
        _
      $region32: #{upconv_forward.3} parent=27 // pred_fallthru
        _
      // Predicated region
      $region33: #{upconv_forward.3} parent=27 // pred_check
        %p1205 = pneg %p106
      $region34: #{upconv_forward.3} parent=27 // pred_check_branch
        %1207 = sbr.rel (%p1205) target = $region36
      $region35: #{upconv_forward.3} parent=27 // pred_region
        _
      $region36: #{upconv_forward.3} parent=27 // pred_fallthru
        _
    $region28: #{upconv_forward.3} parent=5 // pred_fallthru
      _
    %p1208 = scmp.le.s32.totalorder 2, %s10
    // Predicated region
    $region37: #{upconv_forward.3} parent=5 // pred_check
      %p1209 = pneg %p1208
    $region38: #{upconv_forward.3} parent=5 // pred_check_branch
      %1211 = sbr.rel (%p1209) target = $region40
    $region39: #{upconv_forward.3} parent=5 // pred_region
      %s1212 = ssub.s32 %s10, 2
      // Predicated region
      $region41: #{upconv_forward.3} parent=39 // pred_check
        %p1213 = pneg %p86
      $region42: #{upconv_forward.3} parent=39 // pred_check_branch
        %1215 = sbr.rel (%p1213) target = $region44
      $region43: #{upconv_forward.3} parent=39 // pred_region
        %p1216 = scmp.lt.s32.totalorder %s16, 1
        %s1217 = scalar_select %p1216, %s16, 1
        %s1218 = smul.addr %s1217, 8
        %s1219 = smul.addr %s1218, 4
        %s1220 = scalar_lea.vmem %s2, %s1219
      $region44: #{upconv_forward.3} parent=39 // pred_fallthru
        _
      // Predicated region
      $region45: #{upconv_forward.3} parent=39 // pred_check
        %p1221 = pneg %p112
      $region46: #{upconv_forward.3} parent=39 // pred_check_branch
        %1223 = sbr.rel (%p1221) target = $region48
      $region47: #{upconv_forward.3} parent=39 // pred_region
        %p1224 = scmp.lt.s32.totalorder %s16, 1
        %s1225 = scalar_select %p1224, %s16, 1
        %s1226 = smul.addr %s1225, 4
        %s1227 = scalar_lea.vmem %s3, %s1226
      $region48: #{upconv_forward.3} parent=39 // pred_fallthru
        _
    $region40: #{upconv_forward.3} parent=5 // pred_fallthru
      _
  $region6: #{upconv_forward.3} parent=0 // loop_footer
    %s14 = sadd.s32 1, %s10
  $region7: #{upconv_forward.3} parent=0 // loop_footer_branch
    %9 = sbr.rel target = $region3
  $region8: #{upconv_forward.3} parent=0 // loop_exit
    _

// kernel: upconv_forward.4
$region0: #{upconv_forward.4}
  #allocation0 [shape = 'u32[]', space=smem, size = 0x4, offset = 0x4, fixed_abs, tag = 'smem constant byte address 0x4 - core index']
  #allocation1 [shape = 'u32[144,128]{1,0:T(1,128)}', space=vmem, size = 0x12000, scoped, tag = 'internal scratch']
  %s0 = inlined_call_operand.vmem [shape: f32[2,4,1024], index: 0, kind: input, shape index: {}]
  %s1 = inlined_call_operand.vmem [shape: f32[4,1], index: 1, kind: input, shape index: {}]
  %s2 = inlined_call_operand.vmem [shape: f32[4,1], index: 2, kind: input, shape index: {}]
  %s3 = inlined_call_operand.vmem [shape: f32[4,8,4], index: 3, kind: input, shape index: {}]
  %s4 = inlined_call_operand.vmem [shape: f32[2,8,1024], index: 4, kind: output, shape index: {0}]
  %s5 = inlined_call_operand.vmem [shape: f32[2,8,2], index: 5, kind: output, shape index: {1}]
  %6 = xla_tuple %s4, %s5
  %s7 = sld [smem:[#allocation0]]
  $region57: #{upconv_forward.4} parent=0
    _
  %s9 = ssub.s32 1, %s7
  %s10 = scalar_select 0, %s9, %s7
  loop: start=0, step=1, limit=4
  $region2: #{upconv_forward.4} parent=0 // loop_pre_header
    _
  $region3: #{upconv_forward.4} parent=0 // loop_header
    %s12 = sphi 0, %s16
    %p13 = scmp.ge.s32.totalorder %s12, 4
    %s22 = sphi 0, %s24
    %s25 = sphi 0, %s22
    %s26 = sphi 0, %s25
    %s42 = sphi 0, %s26
    %s46 = sphi 0, %s46
    %s48 = sphi 0, %s46
    %s49 = sphi 0, %s48
    %s63 = sphi 0, %s49
    %s67 = sphi 0, %s67
    %s69 = sphi 0, %s67
    %s70 = sphi 0, %s69
    %s84 = sphi 0, %s70
    %s88 = sphi 0, %s88
    %s90 = sphi 0, %s88
    %s91 = sphi 0, %s90
    %s105 = sphi 0, %s91
    %s111 = sphi 0, %s113
    %s114 = sphi 0, %s111
    %s115 = sphi 0, %s114
    %s131 = sphi 0, %s115
    %s137 = sphi 0, %s139
    %s140 = sphi 0, %s137
    %s141 = sphi 0, %s140
    %s157 = sphi 0, %s141
  $region4: #{upconv_forward.4} parent=0 // loop_header_branch
    %15 = sbr.rel (%p13) target = $region8
  $region5: #{upconv_forward.4} parent=0 // loop_body
    %s17 = ssub.s32 %s12, 1
    %s18 = ssub.s32 %s12, 2
    %s19 = sadd.s32 %s12, 1
    %s20 = ssub.s32 %s12, %s19
    %p21 = scmp.eq.s32.totalorder %s20, 0
    %s23 = sadd.s32 %s22, 1
    %s24 = scalar_select %p21, %s22, %s23
    %p27 = pneg %p21
    %p28 = scmp.eq.s32.totalorder %s12, 1
    %p29 = por %p27, %p28
    %p30 = scmp.ne.s32.totalorder %s22, %s25
    %p31 = scmp.eq.s32.totalorder %s12, 0
    %p32 = por %p30, %p31
    %p33 = scmp.ne.s32.totalorder %s22, %s25
    %p34 = scmp.eq.s32.totalorder %s17, 1
    %p35 = por %p33, %p34
    %p36 = scmp.ne.s32.totalorder %s25, %s26
    %p37 = scmp.eq.s32.totalorder %s17, 0
    %p38 = por %p36, %p37
    %p39 = scmp.ne.s32.totalorder %s25, %s26
    %p40 = scmp.eq.s32.totalorder %s18, 1
    %p41 = por %p39, %p40
    %p43 = scmp.ne.s32.totalorder %s26, %s42
    %p44 = scmp.eq.s32.totalorder %s18, 0
    %p45 = por %p43, %p44
    %s47 = sadd.s32 %s46, 1
    %p50 = scmp.eq.s32.totalorder %s12, 1
    %p51 = scmp.ne.s32.totalorder %s46, %s48
    %p52 = scmp.eq.s32.totalorder %s12, 0
    %p53 = por %p51, %p52
    %p54 = scmp.ne.s32.totalorder %s46, %s48
    %p55 = scmp.eq.s32.totalorder %s17, 1
    %p56 = por %p54, %p55
    %p57 = scmp.ne.s32.totalorder %s48, %s49
    %p58 = scmp.eq.s32.totalorder %s17, 0
    %p59 = por %p57, %p58
    %p60 = scmp.ne.s32.totalorder %s48, %s49
    %p61 = scmp.eq.s32.totalorder %s18, 1
    %p62 = por %p60, %p61
    %p64 = scmp.ne.s32.totalorder %s49, %s63
    %p65 = scmp.eq.s32.totalorder %s18, 0
    %p66 = por %p64, %p65
    %s68 = sadd.s32 %s67, 1
    %p71 = scmp.eq.s32.totalorder %s12, 1
    %p72 = scmp.ne.s32.totalorder %s67, %s69
    %p73 = scmp.eq.s32.totalorder %s12, 0
    %p74 = por %p72, %p73
    %p75 = scmp.ne.s32.totalorder %s67, %s69
    %p76 = scmp.eq.s32.totalorder %s17, 1
    %p77 = por %p75, %p76
    %p78 = scmp.ne.s32.totalorder %s69, %s70
    %p79 = scmp.eq.s32.totalorder %s17, 0
    %p80 = por %p78, %p79
    %p81 = scmp.ne.s32.totalorder %s69, %s70
    %p82 = scmp.eq.s32.totalorder %s18, 1
    %p83 = por %p81, %p82
    %p85 = scmp.ne.s32.totalorder %s70, %s84
    %p86 = scmp.eq.s32.totalorder %s18, 0
    %p87 = por %p85, %p86
    %s89 = sadd.s32 %s88, 1
    %p92 = scmp.eq.s32.totalorder %s12, 1
    %p93 = scmp.ne.s32.totalorder %s88, %s90
    %p94 = scmp.eq.s32.totalorder %s12, 0
    %p95 = por %p93, %p94
    %p96 = scmp.ne.s32.totalorder %s88, %s90
    %p97 = scmp.eq.s32.totalorder %s17, 1
    %p98 = por %p96, %p97
    %p99 = scmp.ne.s32.totalorder %s90, %s91
    %p100 = scmp.eq.s32.totalorder %s17, 0
    %p101 = por %p99, %p100
    %p102 = scmp.ne.s32.totalorder %s90, %s91
    %p103 = scmp.eq.s32.totalorder %s18, 1
    %p104 = por %p102, %p103
    %p106 = scmp.ne.s32.totalorder %s91, %s105
    %p107 = scmp.eq.s32.totalorder %s18, 0
    %p108 = por %p106, %p107
    %s109 = ssub.s32 %s12, %s19
    %p110 = scmp.eq.s32.totalorder %s109, 0
    %s112 = sadd.s32 %s111, 1
    %s113 = scalar_select %p110, %s111, %s112
    %p116 = pneg %p110
    %p117 = scmp.eq.s32.totalorder %s12, 1
    %p118 = por %p116, %p117
    %p119 = scmp.ne.s32.totalorder %s111, %s114
    %p120 = scmp.eq.s32.totalorder %s12, 0
    %p121 = por %p119, %p120
    %p122 = scmp.ne.s32.totalorder %s111, %s114
    %p123 = scmp.eq.s32.totalorder %s17, 1
    %p124 = por %p122, %p123
    %p125 = scmp.ne.s32.totalorder %s114, %s115
    %p126 = scmp.eq.s32.totalorder %s17, 0
    %p127 = por %p125, %p126
    %p128 = scmp.ne.s32.totalorder %s114, %s115
    %p129 = scmp.eq.s32.totalorder %s18, 1
    %p130 = por %p128, %p129
    %p132 = scmp.ne.s32.totalorder %s115, %s131
    %p133 = scmp.eq.s32.totalorder %s18, 0
    %p134 = por %p132, %p133
    %s135 = ssub.s32 %s12, %s19
    %p136 = scmp.eq.s32.totalorder %s135, 0
    %s138 = sadd.s32 %s137, 1
    %s139 = scalar_select %p136, %s137, %s138
    %p142 = pneg %p136
    %p143 = scmp.eq.s32.totalorder %s12, 1
    %p144 = por %p142, %p143
    %p145 = scmp.ne.s32.totalorder %s137, %s140
    %p146 = scmp.eq.s32.totalorder %s12, 0
    %p147 = por %p145, %p146
    %p148 = scmp.ne.s32.totalorder %s137, %s140
    %p149 = scmp.eq.s32.totalorder %s17, 1
    %p150 = por %p148, %p149
    %p151 = scmp.ne.s32.totalorder %s140, %s141
    %p152 = scmp.eq.s32.totalorder %s17, 0
    %p153 = por %p151, %p152
    %p154 = scmp.ne.s32.totalorder %s140, %s141
    %p155 = scmp.eq.s32.totalorder %s18, 1
    %p156 = por %p154, %p155
    %p158 = scmp.ne.s32.totalorder %s141, %s157
    %p159 = scmp.eq.s32.totalorder %s18, 0
    %p160 = por %p158, %p159
    %p161 = scmp.le.s32.totalorder 1, %s12
    %p162 = scmp.lt.s32.totalorder %s12, 3
    %p163 = pnand %p161, %p162
    %p164 = pneg %p163
    // Predicated region
    $region9: #{upconv_forward.4} parent=5 // pred_check
      _
    $region10: #{upconv_forward.4} parent=5 // pred_check_branch
      %166 = sbr.rel (%p163) target = $region12
    $region11: #{upconv_forward.4} parent=5 // pred_region
      %s167 = ssub.s32 %s12, 1
      // Predicated region
      $region13: #{upconv_forward.4} parent=11 // pred_check
        %p168 = pneg %p59
      $region14: #{upconv_forward.4} parent=11 // pred_check_branch
        %170 = sbr.rel (%p168) target = $region16
      $region15: #{upconv_forward.4} parent=11 // pred_region
        _
      $region16: #{upconv_forward.4} parent=11 // pred_fallthru
        _
      // Predicated region
      $region17: #{upconv_forward.4} parent=11 // pred_check
        %p171 = pneg %p80
      $region18: #{upconv_forward.4} parent=11 // pred_check_branch
        %173 = sbr.rel (%p171) target = $region20
      $region19: #{upconv_forward.4} parent=11 // pred_region
        _
      $region20: #{upconv_forward.4} parent=11 // pred_fallthru
        _
      // Predicated region
      $region21: #{upconv_forward.4} parent=11 // pred_check
        %p174 = pneg %p101
      $region22: #{upconv_forward.4} parent=11 // pred_check_branch
        %176 = sbr.rel (%p174) target = $region24
      $region23: #{upconv_forward.4} parent=11 // pred_region
        _
      $region24: #{upconv_forward.4} parent=11 // pred_fallthru
        _
    $region12: #{upconv_forward.4} parent=5 // pred_fallthru
      _
    %p177 = scmp.lt.s32.totalorder %s12, 2
    // Predicated region
    $region25: #{upconv_forward.4} parent=5 // pred_check
      %p178 = pneg %p177
    $region26: #{upconv_forward.4} parent=5 // pred_check_branch
      %180 = sbr.rel (%p178) target = $region28
    $region27: #{upconv_forward.4} parent=5 // pred_region
      // Predicated region
      $region29: #{upconv_forward.4} parent=27 // pred_check
        %p181 = pneg %p32
      $region30: #{upconv_forward.4} parent=27 // pred_check_branch
        %183 = sbr.rel (%p181) target = $region32
      $region31: #{upconv_forward.4} parent=27 // pred_region
        %p184 = scmp.lt.s32.totalorder %s12, 1
        %s185 = scalar_select %p184, %s12, 1
        %s186 = smul.addr %s185, 8
        %s187 = smul.addr %s186, 4
        %s188 = scalar_lea.vmem %s0, %s187
      $region32: #{upconv_forward.4} parent=27 // pred_fallthru
        _
    $region28: #{upconv_forward.4} parent=5 // pred_fallthru
      _
    %p189 = scmp.le.s32.totalorder 1, %s12
    %p190 = scmp.lt.s32.totalorder %s12, 3
    %p191 = pnand %p189, %p190
    %p192 = pneg %p191
    // Predicated region
    $region33: #{upconv_forward.4} parent=5 // pred_check
      _
    $region34: #{upconv_forward.4} parent=5 // pred_check_branch
      %194 = sbr.rel (%p191) target = $region36
    $region35: #{upconv_forward.4} parent=5 // pred_region
      %s195 = ssub.s32 %s12, 1
      %p196 = scmp.lt.s32.totalorder %s17, 1
      %s197 = scalar_select %p196, %s17, 1
      %s198 = smul.addr %s197, 8
      %s199 = smul.addr %s198, 4
      %s200 = scalar_lea.vmem %s0, %s199
      %p201 = pneg %p38
      %p202 = pneg %p35
      %p203 = pneg %p59
      %p204 = pneg %p56
      %p205 = pneg %p80
      %p206 = pneg %p77
      %p207 = pneg %p101
      %p208 = pneg %p98
      %p209 = pneg %p127
      %p210 = pneg %p124
      %p211 = scmp.lt.s32.totalorder %s17, 1
      %s212 = scalar_select %p211, %s17, 1
      %s213 = smul.addr %s212, 8
      %s214 = smul.addr %s213, 8
      %s215 = scalar_lea.vmem %s4, %s214
      %p216 = pneg %p153
      %p217 = pneg %p150
      %p218 = scmp.lt.s32.totalorder %s17, 1
      %s219 = scalar_select %p218, %s17, 1
      %s220 = smul.addr %s219, 8
      %s221 = scalar_lea.vmem %s5, %s220
      %p222 = scmp.lt.s32.totalorder %s17, 1
      %s223 = scalar_select %p222, %s17, 1
      %s224 = smul.addr %s223, 8
      %s225 = smul.addr %s224, 4
      %s226 = scalar_lea.vmem %s0, %s225
      %p227 = scmp.lt.s32.totalorder %s17, 1
      %s228 = scalar_select %p227, %s17, 1
      %s229 = smul.addr %s228, 8
      %s230 = smul.addr %s229, 8
      %s231 = scalar_lea.vmem %s4, %s230
      %p232 = scmp.lt.s32.totalorder %s17, 1
      %s233 = scalar_select %p232, %s17, 1
      %s234 = smul.addr %s233, 8
      %s235 = scalar_lea.vmem %s5, %s234
      %v236 = vld [vmem:[%s226] sm:$0xff]
      %v237 = vld [vmem:[%s226 + $0x8] sm:$0xff]
      %v238 = vld [vmem:[%s226 + $0x10] sm:$0xff]
      %v239 = vld [vmem:[%s226 + $0x18] sm:$0xff]
      %v240 = vld [vmem:[%s1] sm:$0xf]
      %242 = vset.pattern.permute.xlu0 0
      %243 = vperm.xlu0 %242, %v240
      %v244 = vpop.permute.xlu0 %243
      %v246 = vunpack.c.l.s4 839922192
      %v247 = vunpack.c.0.s8 %v246
      %v248 = vlaneseq
      %v249 = vshrl.u32 %v248, 7
      %v250 = vsub.s32 %v247, %v249
      %v251 = vrot.slane %v244, %v250
      %v253 = vmul.f32 %v236, %v251
      %v254 = vmul.f32 %v237, %v251
      %v255 = vmul.f32 %v238, %v251
      %v256 = vmul.f32 %v239, %v251
      %v257 = vld [vmem:[%s2] sm:$0xf]
      %259 = vset.pattern.permute.xlu0 0
      %260 = vperm.xlu0 %259, %v257
      %v261 = vpop.permute.xlu0 %260
      %v263 = vunpack.c.l.s4 839922192
      %v264 = vunpack.c.0.s8 %v263
      %v265 = vlaneseq
      %v266 = vshrl.u32 %v265, 7
      %v267 = vsub.s32 %v264, %v266
      %v268 = vrot.slane %v261, %v267
      %v270 = vadd.f32 %v253, %v268
      %v271 = vadd.f32 %v254, %v268
      %v272 = vadd.f32 %v255, %v268
      %v273 = vadd.f32 %v256, %v268
      %v274 = vlaneseq
      %v275 = vand.u32 %v274, 127
      %v276 = vadd.s32 %v275, 128
      %v277 = vadd.s32 %v275, 256
      %v278 = vadd.s32 %v275, 384
      %v279 = vadd.s32 %v275, 512
      %v280 = vadd.s32 %v275, 640
      %v281 = vadd.s32 %v275, 768
      %v282 = vadd.s32 %v275, 896
      %vm283 = vcmp.lt.s32.totalorder %v275, 0
      %v284 = vsub.s32 0, %v275
      %v285 = vsel %vm283, %v284, %v275
      %v286 = vshrl.u32 %v285, 5
      %v287 = vand.u32 %v285, 31
      %v288 = vsub.s32 0, %v287
      %v289 = vsel %vm283, %v288, %v287
      %vm290 = vcmp.lt.s32.totalorder %v276, 0
      %v291 = vsub.s32 0, %v276
      %v292 = vsel %vm290, %v291, %v276
      %v293 = vshrl.u32 %v292, 5
      %v294 = vand.u32 %v292, 31
      %v295 = vsub.s32 0, %v294
      %v296 = vsel %vm290, %v295, %v294
      %vm297 = vcmp.lt.s32.totalorder %v277, 0
      %v298 = vsub.s32 0, %v277
      %v299 = vsel %vm297, %v298, %v277
      %v300 = vshrl.u32 %v299, 5
      %v301 = vand.u32 %v299, 31
      %v302 = vsub.s32 0, %v301
      %v303 = vsel %vm297, %v302, %v301
      %vm304 = vcmp.lt.s32.totalorder %v278, 0
      %v305 = vsub.s32 0, %v278
      %v306 = vsel %vm304, %v305, %v278
      %v307 = vshrl.u32 %v306, 5
      %v308 = vand.u32 %v306, 31
      %v309 = vsub.s32 0, %v308
      %v310 = vsel %vm304, %v309, %v308
      %vm311 = vcmp.lt.s32.totalorder %v279, 0
      %v312 = vsub.s32 0, %v279
      %v313 = vsel %vm311, %v312, %v279
      %v314 = vshrl.u32 %v313, 5
      %v315 = vand.u32 %v313, 31
      %v316 = vsub.s32 0, %v315
      %v317 = vsel %vm311, %v316, %v315
      %vm318 = vcmp.lt.s32.totalorder %v280, 0
      %v319 = vsub.s32 0, %v280
      %v320 = vsel %vm318, %v319, %v280
      %v321 = vshrl.u32 %v320, 5
      %v322 = vand.u32 %v320, 31
      %v323 = vsub.s32 0, %v322
      %v324 = vsel %vm318, %v323, %v322
      %vm325 = vcmp.lt.s32.totalorder %v281, 0
      %v326 = vsub.s32 0, %v281
      %v327 = vsel %vm325, %v326, %v281
      %v328 = vshrl.u32 %v327, 5
      %v329 = vand.u32 %v327, 31
      %v330 = vsub.s32 0, %v329
      %v331 = vsel %vm325, %v330, %v329
      %vm332 = vcmp.lt.s32.totalorder %v282, 0
      %v333 = vsub.s32 0, %v282
      %v334 = vsel %vm332, %v333, %v282
      %v335 = vshrl.u32 %v334, 5
      %v336 = vand.u32 %v334, 31
      %v337 = vsub.s32 0, %v336
      %v338 = vsel %vm332, %v337, %v336
      %vm339 = vcmp.ne.s32.totalorder %v289, 0
      %vm340 = vcmp.ne.s32.totalorder %v296, 0
      %vm341 = vcmp.ne.s32.totalorder %v303, 0
      %vm342 = vcmp.ne.s32.totalorder %v310, 0
      %vm343 = vcmp.ne.s32.totalorder %v317, 0
      %vm344 = vcmp.ne.s32.totalorder %v324, 0
      %vm345 = vcmp.ne.s32.totalorder %v331, 0
      %vm346 = vcmp.ne.s32.totalorder %v338, 0
      %vm347 = vcmp.lt.s32.totalorder %v289, 0
      %vm348 = vcmp.lt.s32.totalorder %v296, 0
      %vm349 = vcmp.lt.s32.totalorder %v303, 0
      %vm350 = vcmp.lt.s32.totalorder %v310, 0
      %vm351 = vcmp.lt.s32.totalorder %v317, 0
      %vm352 = vcmp.lt.s32.totalorder %v324, 0
      %vm353 = vcmp.lt.s32.totalorder %v331, 0
      %vm354 = vcmp.lt.s32.totalorder %v338, 0
      %vm355 = vmand %vm347, %vm339
      %vm356 = vmand %vm348, %vm340
      %vm357 = vmand %vm349, %vm341
      %vm358 = vmand %vm350, %vm342
      %vm359 = vmand %vm351, %vm343
      %vm360 = vmand %vm352, %vm344
      %vm361 = vmand %vm353, %vm345
      %vm362 = vmand %vm354, %vm346
      %v363 = vadd.s32 %v289, 32
      %v364 = vadd.s32 %v296, 32
      %v365 = vadd.s32 %v303, 32
      %v366 = vadd.s32 %v310, 32
      %v367 = vadd.s32 %v317, 32
      %v368 = vadd.s32 %v324, 32
      %v369 = vadd.s32 %v331, 32
      %v370 = vadd.s32 %v338, 32
      %v371 = vsel %vm355, %v363, %v289
      %v372 = vsel %vm356, %v364, %v296
      %v373 = vsel %vm357, %v365, %v303
      %v374 = vsel %vm358, %v366, %v310
      %v375 = vsel %vm359, %v367, %v317
      %v376 = vsel %vm360, %v368, %v324
      %v377 = vsel %vm361, %v369, %v331
      %v378 = vsel %vm362, %v370, %v338
      %vm379 = vcmp.ne.s32.totalorder %v371, 31
      %vm380 = vcmp.ne.s32.totalorder %v372, 31
      %vm381 = vcmp.ne.s32.totalorder %v373, 31
      %vm382 = vcmp.ne.s32.totalorder %v374, 31
      %vm383 = vcmp.ne.s32.totalorder %v375, 31
      %vm384 = vcmp.ne.s32.totalorder %v376, 31
      %vm385 = vcmp.ne.s32.totalorder %v377, 31
      %vm386 = vcmp.ne.s32.totalorder %v378, 31
      %vm387 = vcmp.lt.s32.totalorder %v275, 992
      %vm388 = vcmp.lt.s32.totalorder %v276, 992
      %vm389 = vcmp.lt.s32.totalorder %v277, 992
      %vm390 = vcmp.lt.s32.totalorder %v278, 992
      %vm391 = vcmp.lt.s32.totalorder %v279, 992
      %vm392 = vcmp.lt.s32.totalorder %v280, 992
      %vm393 = vcmp.lt.s32.totalorder %v281, 992
      %vm394 = vcmp.lt.s32.totalorder %v282, 992
      %v399 = vcombine.high %v270, %v270
      %v400 = vcombine.high %v271, %v271
      %v401 = vcombine.high %v272, %v272
      %v402 = vcombine.high %v273, %v273
      %407 = vrot.lane.b32.xlu0 %v270, 127
      %v408 = vpop.permute.xlu0 %407
      %409 = vrot.lane.b32.xlu0 %v399, 127
      %v410 = vpop.permute.xlu0 %409
      %411 = vrot.lane.b32.xlu0 %v271, 127
      %v412 = vpop.permute.xlu0 %411
      %413 = vrot.lane.b32.xlu0 %v400, 127
      %v414 = vpop.permute.xlu0 %413
      %415 = vrot.lane.b32.xlu0 %v272, 127
      %v416 = vpop.permute.xlu0 %415
      %417 = vrot.lane.b32.xlu0 %v401, 127
      %v418 = vpop.permute.xlu0 %417
      %419 = vrot.lane.b32.xlu0 %v273, 127
      %v420 = vpop.permute.xlu0 %419
      %421 = vrot.lane.b32.xlu0 %v402, 127
      %v422 = vpop.permute.xlu0 %421
      %vm423 = vcmp.lt.s32.totalorder %v275, 127
      %v424 = vsel %vm423, %v420, %v422
      %v425 = vsel %vm423, %v418, %v420
      %v426 = vsel %vm423, %v416, %v418
      %v427 = vsel %vm423, %v414, %v416
      %v428 = vsel %vm423, %v412, %v414
      %v429 = vsel %vm423, %v410, %v412
      %v430 = vsel %vm423, %v408, %v410
      %v431 = vsel %vm423, %v422, %v408
      %v432 = vsel %vm379, %v430, 0.0
      %v433 = vsel %vm380, %v429, 0.0
      %v434 = vsel %vm381, %v428, 0.0
      %v435 = vsel %vm382, %v427, 0.0
      %v436 = vsel %vm383, %v426, 0.0
      %v437 = vsel %vm384, %v425, 0.0
      %v438 = vsel %vm385, %v424, 0.0
      %v439 = vsel %vm386, %v431, 0.0
      %440 = vrot.lane.b32.xlu0 %v270, 96
      %v441 = vpop.permute.xlu0 %440
      %442 = vrot.lane.b32.xlu0 %v399, 96
      %v443 = vpop.permute.xlu0 %442
      %444 = vrot.lane.b32.xlu0 %v271, 96
      %v445 = vpop.permute.xlu0 %444
      %446 = vrot.lane.b32.xlu0 %v400, 96
      %v447 = vpop.permute.xlu0 %446
      %448 = vrot.lane.b32.xlu0 %v272, 96
      %v449 = vpop.permute.xlu0 %448
      %450 = vrot.lane.b32.xlu0 %v401, 96
      %v451 = vpop.permute.xlu0 %450
      %452 = vrot.lane.b32.xlu0 %v273, 96
      %v453 = vpop.permute.xlu0 %452
      %454 = vrot.lane.b32.xlu0 %v402, 96
      %v455 = vpop.permute.xlu0 %454
      %vm456 = vcmp.lt.s32.totalorder %v275, 96
      %v457 = vsel %vm456, %v453, %v455
      %v458 = vsel %vm456, %v451, %v453
      %v459 = vsel %vm456, %v449, %v451
      %v460 = vsel %vm456, %v447, %v449
      %v461 = vsel %vm456, %v445, %v447
      %v462 = vsel %vm456, %v443, %v445
      %v463 = vsel %vm456, %v441, %v443
      %v464 = vsel %vm456, %v455, %v441
      %v465 = vsel %vm387, %v463, 0.0
      %v466 = vsel %vm388, %v462, 0.0
      %v467 = vsel %vm389, %v461, 0.0
      %v468 = vsel %vm390, %v460, 0.0
      %v469 = vsel %vm391, %v459, 0.0
      %v470 = vsel %vm392, %v458, 0.0
      %v471 = vsel %vm393, %v457, 0.0
      %v472 = vsel %vm394, %v464, 0.0
      %vm473 = vmand %vm379, %vm387
      %vm474 = vmand %vm380, %vm388
      %vm475 = vmand %vm381, %vm389
      %vm476 = vmand %vm382, %vm390
      %vm477 = vmand %vm383, %vm391
      %vm478 = vmand %vm384, %vm392
      %vm479 = vmand %vm385, %vm393
      %vm480 = vmand %vm386, %vm394
      %481 = vrot.lane.b32.xlu0 %v270, 95
      %v482 = vpop.permute.xlu0 %481
      %483 = vrot.lane.b32.xlu0 %v399, 95
      %v484 = vpop.permute.xlu0 %483
      %485 = vrot.lane.b32.xlu0 %v271, 95
      %v486 = vpop.permute.xlu0 %485
      %487 = vrot.lane.b32.xlu0 %v400, 95
      %v488 = vpop.permute.xlu0 %487
      %489 = vrot.lane.b32.xlu0 %v272, 95
      %v490 = vpop.permute.xlu0 %489
      %491 = vrot.lane.b32.xlu0 %v401, 95
      %v492 = vpop.permute.xlu0 %491
      %493 = vrot.lane.b32.xlu0 %v273, 95
      %v494 = vpop.permute.xlu0 %493
      %495 = vrot.lane.b32.xlu0 %v402, 95
      %v496 = vpop.permute.xlu0 %495
      %vm497 = vcmp.lt.s32.totalorder %v275, 95
      %v498 = vsel %vm497, %v494, %v496
      %v499 = vsel %vm497, %v492, %v494
      %v500 = vsel %vm497, %v490, %v492
      %v501 = vsel %vm497, %v488, %v490
      %v502 = vsel %vm497, %v486, %v488
      %v503 = vsel %vm497, %v484, %v486
      %v504 = vsel %vm497, %v482, %v484
      %v505 = vsel %vm497, %v496, %v482
      %v506 = vsel %vm473, %v504, 0.0
      %v507 = vsel %vm474, %v503, 0.0
      %v508 = vsel %vm475, %v502, 0.0
      %v509 = vsel %vm476, %v501, 0.0
      %v510 = vsel %vm477, %v500, 0.0
      %v511 = vsel %vm478, %v499, 0.0
      %v512 = vsel %vm479, %v498, 0.0
      %v513 = vsel %vm480, %v505, 0.0
      %v514 = vld [vmem:[%s3] sm:$0xff]
      %s515 = scalar_lea.vmem %s3, 8
      %v516 = vld [vmem:[%s515] sm:$0xff]
      %vm517 = vcmask 31744
      %v519 = vsel %vm517, %v516, 0
      %vm521 = vcmask 1043456
      %v523 = vsel %vm521, %v432, 0
      %v526 = vsel %vm521, %v433, 0
      %v529 = vsel %vm521, %v434, 0
      %v532 = vsel %vm521, %v435, 0
      %v535 = vsel %vm521, %v436, 0
      %v538 = vsel %vm521, %v437, 0
      %v541 = vsel %vm521, %v438, 0
      %v544 = vsel %vm521, %v439, 0
      %546 = vmatprep.subr.mxu0 0.0
      %547 = vmatpush1.msra.mxu0 0.0
      %548 = vmatprep.subr.mxu0 0.0
      %549 = vmatpush1.msra.mxu0 0.0
      %550 = vmatprep.subr.mxu0 0.0
      %551 = vmatpush1.msra.mxu0 0.0
      %552 = vmatprep.subr.mxu0 0.0
      %553 = vmatpush1.msra.mxu0 0.0
      %554 = vmatprep.subr.mxu0 0.0
      %555 = vmatpush1.msra.mxu0 0.0
      %556 = vmatprep.subr.mxu0 0.0
      %557 = vmatpush1.msra.mxu0 0.0
      %558 = vmatprep.subr.mxu0 0.0
      %559 = vmatpush1.msra.mxu0 0.0
      %560 = vmatprep.subr.mxu0 0.0
      %561 = vmatpush1.msra.mxu0 0.0
      %562 = vmatprep.subr.mxu0 0.0
      %563 = vmatpush1.msra.mxu0 0.0
      %564 = vmatprep.subr.mxu0 0.0
      %565 = vmatpush1.msra.mxu0 0.0
      %566 = vmatprep.subr.mxu0 0.0
      %567 = vmatpush1.msra.mxu0 0.0
      %568 = vmatprep.subr.mxu0 0.0
      %569 = vmatpush1.msra.mxu0 0.0
      %570 = vmatprep.subr.mxu0 0.0
      %571 = vmatpush1.msra.mxu0 0.0
      %572 = vmatprep.subr.mxu0 0.0
      %573 = vmatpush1.msra.mxu0 0.0
      %574 = vmatprep.subr.mxu0 0.0
      %575 = vmatpush1.msra.mxu0 0.0
      %576 = vmatprep.subr.mxu0 %v526
      %577 = vmatpush1.msra.mxu0 %v523
      %578 = vmatprep.subr.mxu0 0.0
      %579 = vmatpush2.msra.mxu0 0.0
      %580 = vmatprep.subr.mxu0 0.0
      %581 = vmatpush2.msra.mxu0 0.0
      %582 = vmatprep.subr.mxu0 0.0
      %583 = vmatpush2.msra.mxu0 0.0
      %584 = vmatprep.subr.mxu0 0.0
      %585 = vmatpush2.msra.mxu0 0.0
      %586 = vmatprep.subr.mxu0 0.0
      %587 = vmatpush2.msra.mxu0 0.0
      %588 = vmatprep.subr.mxu0 0.0
      %589 = vmatpush2.msra.mxu0 0.0
      %590 = vmatprep.subr.mxu0 0.0
      %591 = vmatpush2.msra.mxu0 0.0
      %592 = vmatprep.subr.mxu0 0.0
      %593 = vmatpush2.msra.mxu0 0.0
      %594 = vmatprep.subr.mxu0 0.0
      %595 = vmatpush2.msra.mxu0 0.0
      %596 = vmatprep.subr.mxu0 0.0
      %597 = vmatpush2.msra.mxu0 0.0
      %598 = vmatprep.subr.mxu0 0.0
      %599 = vmatpush2.msra.mxu0 0.0
      %600 = vmatprep.subr.mxu0 0.0
      %601 = vmatpush2.msra.mxu0 0.0
      %602 = vmatprep.subr.mxu0 0.0
      %603 = vmatpush2.msra.mxu0 0.0
      %604 = vmatprep.subr.mxu0 0.0
      %605 = vmatpush2.msra.mxu0 0.0
      %606 = vmatprep.subr.mxu0 0.0
      %607 = vmatpush2.msra.mxu0 0.0
      %608 = vmatprep.subr.mxu0 0.0
      %609 = vmatpush2.msra.mxu0 0.0
      %610 = vmatprep.mubr.f32.mxu0 0.0
      %611 = vmatmul.mubr.f32.gmra.mxu0 %v519
      %v612 = vpop.f32.mrf.mxu0
      %v613 = vadd.f32 0.0, %v612
      %v614 = vpop.f32.mrf.mxu0
      %v615 = vadd.f32 0.0, %v614
      %616 = vdwg.mxu0
      %617 = vmatprep.subr.mxu0 0.0
      %618 = vmatpush1.msra.mxu0 0.0
      %619 = vmatprep.subr.mxu0 0.0
      %620 = vmatpush1.msra.mxu0 0.0
      %621 = vmatprep.subr.mxu0 0.0
      %622 = vmatpush1.msra.mxu0 0.0
      %623 = vmatprep.subr.mxu0 0.0
      %624 = vmatpush1.msra.mxu0 0.0
      %625 = vmatprep.subr.mxu0 0.0
      %626 = vmatpush1.msra.mxu0 0.0
      %627 = vmatprep.subr.mxu0 0.0
      %628 = vmatpush1.msra.mxu0 0.0
      %629 = vmatprep.subr.mxu0 0.0
      %630 = vmatpush1.msra.mxu0 0.0
      %631 = vmatprep.subr.mxu0 0.0
      %632 = vmatpush1.msra.mxu0 0.0
      %633 = vmatprep.subr.mxu0 0.0
      %634 = vmatpush1.msra.mxu0 0.0
      %635 = vmatprep.subr.mxu0 0.0
      %636 = vmatpush1.msra.mxu0 0.0
      %637 = vmatprep.subr.mxu0 0.0
      %638 = vmatpush1.msra.mxu0 0.0
      %639 = vmatprep.subr.mxu0 0.0
      %640 = vmatpush1.msra.mxu0 0.0
      %641 = vmatprep.subr.mxu0 0.0
      %642 = vmatpush1.msra.mxu0 0.0
      %643 = vmatprep.subr.mxu0 0.0
      %644 = vmatpush1.msra.mxu0 0.0
      %645 = vmatprep.subr.mxu0 0.0
      %646 = vmatpush1.msra.mxu0 0.0
      %647 = vmatprep.subr.mxu0 %v532
      %648 = vmatpush1.msra.mxu0 %v529
      %649 = vmatprep.subr.mxu0 0.0
      %650 = vmatpush2.msra.mxu0 0.0
      %651 = vmatprep.subr.mxu0 0.0
      %652 = vmatpush2.msra.mxu0 0.0
      %653 = vmatprep.subr.mxu0 0.0
      %654 = vmatpush2.msra.mxu0 0.0
      %655 = vmatprep.subr.mxu0 0.0
      %656 = vmatpush2.msra.mxu0 0.0
      %657 = vmatprep.subr.mxu0 0.0
      %658 = vmatpush2.msra.mxu0 0.0
      %659 = vmatprep.subr.mxu0 0.0
      %660 = vmatpush2.msra.mxu0 0.0
      %661 = vmatprep.subr.mxu0 0.0
      %662 = vmatpush2.msra.mxu0 0.0
      %663 = vmatprep.subr.mxu0 0.0
      %664 = vmatpush2.msra.mxu0 0.0
      %665 = vmatprep.subr.mxu0 0.0
      %666 = vmatpush2.msra.mxu0 0.0
      %667 = vmatprep.subr.mxu0 0.0
      %668 = vmatpush2.msra.mxu0 0.0
      %669 = vmatprep.subr.mxu0 0.0
      %670 = vmatpush2.msra.mxu0 0.0
      %671 = vmatprep.subr.mxu0 0.0
      %672 = vmatpush2.msra.mxu0 0.0
      %673 = vmatprep.subr.mxu0 0.0
      %674 = vmatpush2.msra.mxu0 0.0
      %675 = vmatprep.subr.mxu0 0.0
      %676 = vmatpush2.msra.mxu0 0.0
      %677 = vmatprep.subr.mxu0 0.0
      %678 = vmatpush2.msra.mxu0 0.0
      %679 = vmatprep.subr.mxu0 0.0
      %680 = vmatpush2.msra.mxu0 0.0
      %681 = vmatprep.mubr.f32.mxu0 0.0
      %682 = vmatmul.mubr.f32.gmra.mxu0 %v519
      %v683 = vpop.f32.mrf.mxu0
      %v684 = vadd.f32 0.0, %v683
      %v685 = vpop.f32.mrf.mxu0
      %v686 = vadd.f32 0.0, %v685
      %687 = vdwg.mxu0
      %688 = vmatprep.subr.mxu0 0.0
      %689 = vmatpush1.msra.mxu0 0.0
      %690 = vmatprep.subr.mxu0 0.0
      %691 = vmatpush1.msra.mxu0 0.0
      %692 = vmatprep.subr.mxu0 0.0
      %693 = vmatpush1.msra.mxu0 0.0
      %694 = vmatprep.subr.mxu0 0.0
      %695 = vmatpush1.msra.mxu0 0.0
      %696 = vmatprep.subr.mxu0 0.0
      %697 = vmatpush1.msra.mxu0 0.0
      %698 = vmatprep.subr.mxu0 0.0
      %699 = vmatpush1.msra.mxu0 0.0
      %700 = vmatprep.subr.mxu0 0.0
      %701 = vmatpush1.msra.mxu0 0.0
      %702 = vmatprep.subr.mxu0 0.0
      %703 = vmatpush1.msra.mxu0 0.0
      %704 = vmatprep.subr.mxu0 0.0
      %705 = vmatpush1.msra.mxu0 0.0
      %706 = vmatprep.subr.mxu0 0.0
      %707 = vmatpush1.msra.mxu0 0.0
      %708 = vmatprep.subr.mxu0 0.0
      %709 = vmatpush1.msra.mxu0 0.0
      %710 = vmatprep.subr.mxu0 0.0
      %711 = vmatpush1.msra.mxu0 0.0
      %712 = vmatprep.subr.mxu0 0.0
      %713 = vmatpush1.msra.mxu0 0.0
      %714 = vmatprep.subr.mxu0 0.0
      %715 = vmatpush1.msra.mxu0 0.0
      %716 = vmatprep.subr.mxu0 0.0
      %717 = vmatpush1.msra.mxu0 0.0
      %718 = vmatprep.subr.mxu0 %v538
      %719 = vmatpush1.msra.mxu0 %v535
      %720 = vmatprep.subr.mxu0 0.0
      %721 = vmatpush2.msra.mxu0 0.0
      %722 = vmatprep.subr.mxu0 0.0
      %723 = vmatpush2.msra.mxu0 0.0
      %724 = vmatprep.subr.mxu0 0.0
      %725 = vmatpush2.msra.mxu0 0.0
      %726 = vmatprep.subr.mxu0 0.0
      %727 = vmatpush2.msra.mxu0 0.0
      %728 = vmatprep.subr.mxu0 0.0
      %729 = vmatpush2.msra.mxu0 0.0
      %730 = vmatprep.subr.mxu0 0.0
      %731 = vmatpush2.msra.mxu0 0.0
      %732 = vmatprep.subr.mxu0 0.0
      %733 = vmatpush2.msra.mxu0 0.0
      %734 = vmatprep.subr.mxu0 0.0
      %735 = vmatpush2.msra.mxu0 0.0
      %736 = vmatprep.subr.mxu0 0.0
      %737 = vmatpush2.msra.mxu0 0.0
      %738 = vmatprep.subr.mxu0 0.0
      %739 = vmatpush2.msra.mxu0 0.0
      %740 = vmatprep.subr.mxu0 0.0
      %741 = vmatpush2.msra.mxu0 0.0
      %742 = vmatprep.subr.mxu0 0.0
      %743 = vmatpush2.msra.mxu0 0.0
      %744 = vmatprep.subr.mxu0 0.0
      %745 = vmatpush2.msra.mxu0 0.0
      %746 = vmatprep.subr.mxu0 0.0
      %747 = vmatpush2.msra.mxu0 0.0
      %748 = vmatprep.subr.mxu0 0.0
      %749 = vmatpush2.msra.mxu0 0.0
      %750 = vmatprep.subr.mxu0 0.0
      %751 = vmatpush2.msra.mxu0 0.0
      %752 = vmatprep.mubr.f32.mxu0 0.0
      %753 = vmatmul.mubr.f32.gmra.mxu0 %v519
      %v754 = vpop.f32.mrf.mxu0
      %v755 = vadd.f32 0.0, %v754
      %v756 = vpop.f32.mrf.mxu0
      %v757 = vadd.f32 0.0, %v756
      %758 = vdwg.mxu0
      %759 = vmatprep.subr.mxu0 0.0
      %760 = vmatpush1.msra.mxu0 0.0
      %761 = vmatprep.subr.mxu0 0.0
      %762 = vmatpush1.msra.mxu0 0.0
      %763 = vmatprep.subr.mxu0 0.0
      %764 = vmatpush1.msra.mxu0 0.0
      %765 = vmatprep.subr.mxu0 0.0
      %766 = vmatpush1.msra.mxu0 0.0
      %767 = vmatprep.subr.mxu0 0.0
      %768 = vmatpush1.msra.mxu0 0.0
      %769 = vmatprep.subr.mxu0 0.0
      %770 = vmatpush1.msra.mxu0 0.0
      %771 = vmatprep.subr.mxu0 0.0
      %772 = vmatpush1.msra.mxu0 0.0
      %773 = vmatprep.subr.mxu0 0.0
      %774 = vmatpush1.msra.mxu0 0.0
      %775 = vmatprep.subr.mxu0 0.0
      %776 = vmatpush1.msra.mxu0 0.0
      %777 = vmatprep.subr.mxu0 0.0
      %778 = vmatpush1.msra.mxu0 0.0
      %779 = vmatprep.subr.mxu0 0.0
      %780 = vmatpush1.msra.mxu0 0.0
      %781 = vmatprep.subr.mxu0 0.0
      %782 = vmatpush1.msra.mxu0 0.0
      %783 = vmatprep.subr.mxu0 0.0
      %784 = vmatpush1.msra.mxu0 0.0
      %785 = vmatprep.subr.mxu0 0.0
      %786 = vmatpush1.msra.mxu0 0.0
      %787 = vmatprep.subr.mxu0 0.0
      %788 = vmatpush1.msra.mxu0 0.0
      %789 = vmatprep.subr.mxu0 %v544
      %790 = vmatpush1.msra.mxu0 %v541
      %791 = vmatprep.subr.mxu0 0.0
      %792 = vmatpush2.msra.mxu0 0.0
      %793 = vmatprep.subr.mxu0 0.0
      %794 = vmatpush2.msra.mxu0 0.0
      %795 = vmatprep.subr.mxu0 0.0
      %796 = vmatpush2.msra.mxu0 0.0
      %797 = vmatprep.subr.mxu0 0.0
      %798 = vmatpush2.msra.mxu0 0.0
      %799 = vmatprep.subr.mxu0 0.0
      %800 = vmatpush2.msra.mxu0 0.0
      %801 = vmatprep.subr.mxu0 0.0
      %802 = vmatpush2.msra.mxu0 0.0
      %803 = vmatprep.subr.mxu0 0.0
      %804 = vmatpush2.msra.mxu0 0.0
      %805 = vmatprep.subr.mxu0 0.0
      %806 = vmatpush2.msra.mxu0 0.0
      %807 = vmatprep.subr.mxu0 0.0
      %808 = vmatpush2.msra.mxu0 0.0
      %809 = vmatprep.subr.mxu0 0.0
      %810 = vmatpush2.msra.mxu0 0.0
      %811 = vmatprep.subr.mxu0 0.0
      %812 = vmatpush2.msra.mxu0 0.0
      %813 = vmatprep.subr.mxu0 0.0
      %814 = vmatpush2.msra.mxu0 0.0
      %815 = vmatprep.subr.mxu0 0.0
      %816 = vmatpush2.msra.mxu0 0.0
      %817 = vmatprep.subr.mxu0 0.0
      %818 = vmatpush2.msra.mxu0 0.0
      %819 = vmatprep.subr.mxu0 0.0
      %820 = vmatpush2.msra.mxu0 0.0
      %821 = vmatprep.subr.mxu0 0.0
      %822 = vmatpush2.msra.mxu0 0.0
      %823 = vmatprep.mubr.f32.mxu0 0.0
      %824 = vmatmul.mubr.f32.gmra.mxu0 %v519
      %v825 = vpop.f32.mrf.mxu0
      %v826 = vadd.f32 0.0, %v825
      %v827 = vpop.f32.mrf.mxu0
      %v828 = vadd.f32 0.0, %v827
      %829 = vdwg.mxu0
      %v831 = vsel %vm517, %v514, 0
      %v833 = vsel %vm521, %v270, 0
      %v835 = vsel %vm521, %v399, 0
      %v837 = vsel %vm521, %v271, 0
      %v839 = vsel %vm521, %v400, 0
      %v841 = vsel %vm521, %v272, 0
      %v843 = vsel %vm521, %v401, 0
      %v845 = vsel %vm521, %v273, 0
      %v847 = vsel %vm521, %v402, 0
      %849 = vmatprep.subr.mxu0 0.0
      %850 = vmatpush1.msra.mxu0 0.0
      %851 = vmatprep.subr.mxu0 0.0
      %852 = vmatpush1.msra.mxu0 0.0
      %853 = vmatprep.subr.mxu0 0.0
      %854 = vmatpush1.msra.mxu0 0.0
      %855 = vmatprep.subr.mxu0 0.0
      %856 = vmatpush1.msra.mxu0 0.0
      %857 = vmatprep.subr.mxu0 0.0
      %858 = vmatpush1.msra.mxu0 0.0
      %859 = vmatprep.subr.mxu0 0.0
      %860 = vmatpush1.msra.mxu0 0.0
      %861 = vmatprep.subr.mxu0 0.0
      %862 = vmatpush1.msra.mxu0 0.0
      %863 = vmatprep.subr.mxu0 0.0
      %864 = vmatpush1.msra.mxu0 0.0
      %865 = vmatprep.subr.mxu0 0.0
      %866 = vmatpush1.msra.mxu0 0.0
      %867 = vmatprep.subr.mxu0 0.0
      %868 = vmatpush1.msra.mxu0 0.0
      %869 = vmatprep.subr.mxu0 0.0
      %870 = vmatpush1.msra.mxu0 0.0
      %871 = vmatprep.subr.mxu0 0.0
      %872 = vmatpush1.msra.mxu0 0.0
      %873 = vmatprep.subr.mxu0 0.0
      %874 = vmatpush1.msra.mxu0 0.0
      %875 = vmatprep.subr.mxu0 0.0
      %876 = vmatpush1.msra.mxu0 0.0
      %877 = vmatprep.subr.mxu0 0.0
      %878 = vmatpush1.msra.mxu0 0.0
      %879 = vmatprep.subr.mxu0 %v835
      %880 = vmatpush1.msra.mxu0 %v833
      %881 = vmatprep.subr.mxu0 0.0
      %882 = vmatpush2.msra.mxu0 0.0
      %883 = vmatprep.subr.mxu0 0.0
      %884 = vmatpush2.msra.mxu0 0.0
      %885 = vmatprep.subr.mxu0 0.0
      %886 = vmatpush2.msra.mxu0 0.0
      %887 = vmatprep.subr.mxu0 0.0
      %888 = vmatpush2.msra.mxu0 0.0
      %889 = vmatprep.subr.mxu0 0.0
      %890 = vmatpush2.msra.mxu0 0.0
      %891 = vmatprep.subr.mxu0 0.0
      %892 = vmatpush2.msra.mxu0 0.0
      %893 = vmatprep.subr.mxu0 0.0
      %894 = vmatpush2.msra.mxu0 0.0
      %895 = vmatprep.subr.mxu0 0.0
      %896 = vmatpush2.msra.mxu0 0.0
      %897 = vmatprep.subr.mxu0 0.0
      %898 = vmatpush2.msra.mxu0 0.0
      %899 = vmatprep.subr.mxu0 0.0
      %900 = vmatpush2.msra.mxu0 0.0
      %901 = vmatprep.subr.mxu0 0.0
      %902 = vmatpush2.msra.mxu0 0.0
      %903 = vmatprep.subr.mxu0 0.0
      %904 = vmatpush2.msra.mxu0 0.0
      %905 = vmatprep.subr.mxu0 0.0
      %906 = vmatpush2.msra.mxu0 0.0
      %907 = vmatprep.subr.mxu0 0.0
      %908 = vmatpush2.msra.mxu0 0.0
      %909 = vmatprep.subr.mxu0 0.0
      %910 = vmatpush2.msra.mxu0 0.0
      %911 = vmatprep.subr.mxu0 0.0
      %912 = vmatpush2.msra.mxu0 0.0
      %913 = vmatprep.mubr.f32.mxu0 0.0
      %914 = vmatmul.mubr.f32.gmra.mxu0 %v831
      %v915 = vpop.f32.mrf.mxu0
      %v916 = vadd.f32 %v613, %v915
      %v917 = vpop.f32.mrf.mxu0
      %v918 = vadd.f32 %v615, %v917
      %919 = vdwg.mxu0
      %920 = vmatprep.subr.mxu0 0.0
      %921 = vmatpush1.msra.mxu0 0.0
      %922 = vmatprep.subr.mxu0 0.0
      %923 = vmatpush1.msra.mxu0 0.0
      %924 = vmatprep.subr.mxu0 0.0
      %925 = vmatpush1.msra.mxu0 0.0
      %926 = vmatprep.subr.mxu0 0.0
      %927 = vmatpush1.msra.mxu0 0.0
      %928 = vmatprep.subr.mxu0 0.0
      %929 = vmatpush1.msra.mxu0 0.0
      %930 = vmatprep.subr.mxu0 0.0
      %931 = vmatpush1.msra.mxu0 0.0
      %932 = vmatprep.subr.mxu0 0.0
      %933 = vmatpush1.msra.mxu0 0.0
      %934 = vmatprep.subr.mxu0 0.0
      %935 = vmatpush1.msra.mxu0 0.0
      %936 = vmatprep.subr.mxu0 0.0
      %937 = vmatpush1.msra.mxu0 0.0
      %938 = vmatprep.subr.mxu0 0.0
      %939 = vmatpush1.msra.mxu0 0.0
      %940 = vmatprep.subr.mxu0 0.0
      %941 = vmatpush1.msra.mxu0 0.0
      %942 = vmatprep.subr.mxu0 0.0
      %943 = vmatpush1.msra.mxu0 0.0
      %944 = vmatprep.subr.mxu0 0.0
      %945 = vmatpush1.msra.mxu0 0.0
      %946 = vmatprep.subr.mxu0 0.0
      %947 = vmatpush1.msra.mxu0 0.0
      %948 = vmatprep.subr.mxu0 0.0
      %949 = vmatpush1.msra.mxu0 0.0
      %950 = vmatprep.subr.mxu0 %v839
      %951 = vmatpush1.msra.mxu0 %v837
      %952 = vmatprep.subr.mxu0 0.0
      %953 = vmatpush2.msra.mxu0 0.0
      %954 = vmatprep.subr.mxu0 0.0
      %955 = vmatpush2.msra.mxu0 0.0
      %956 = vmatprep.subr.mxu0 0.0
      %957 = vmatpush2.msra.mxu0 0.0
      %958 = vmatprep.subr.mxu0 0.0
      %959 = vmatpush2.msra.mxu0 0.0
      %960 = vmatprep.subr.mxu0 0.0
      %961 = vmatpush2.msra.mxu0 0.0
      %962 = vmatprep.subr.mxu0 0.0
      %963 = vmatpush2.msra.mxu0 0.0
      %964 = vmatprep.subr.mxu0 0.0
      %965 = vmatpush2.msra.mxu0 0.0
      %966 = vmatprep.subr.mxu0 0.0
      %967 = vmatpush2.msra.mxu0 0.0
      %968 = vmatprep.subr.mxu0 0.0
      %969 = vmatpush2.msra.mxu0 0.0
      %970 = vmatprep.subr.mxu0 0.0
      %971 = vmatpush2.msra.mxu0 0.0
      %972 = vmatprep.subr.mxu0 0.0
      %973 = vmatpush2.msra.mxu0 0.0
      %974 = vmatprep.subr.mxu0 0.0
      %975 = vmatpush2.msra.mxu0 0.0
      %976 = vmatprep.subr.mxu0 0.0
      %977 = vmatpush2.msra.mxu0 0.0
      %978 = vmatprep.subr.mxu0 0.0
      %979 = vmatpush2.msra.mxu0 0.0
      %980 = vmatprep.subr.mxu0 0.0
      %981 = vmatpush2.msra.mxu0 0.0
      %982 = vmatprep.subr.mxu0 0.0
      %983 = vmatpush2.msra.mxu0 0.0
      %984 = vmatprep.mubr.f32.mxu0 0.0
      %985 = vmatmul.mubr.f32.gmra.mxu0 %v831
      %v986 = vpop.f32.mrf.mxu0
      %v987 = vadd.f32 %v684, %v986
      %v988 = vpop.f32.mrf.mxu0
      %v989 = vadd.f32 %v686, %v988
      %990 = vdwg.mxu0
      %991 = vmatprep.subr.mxu0 0.0
      %992 = vmatpush1.msra.mxu0 0.0
      %993 = vmatprep.subr.mxu0 0.0
      %994 = vmatpush1.msra.mxu0 0.0
      %995 = vmatprep.subr.mxu0 0.0
      %996 = vmatpush1.msra.mxu0 0.0
      %997 = vmatprep.subr.mxu0 0.0
      %998 = vmatpush1.msra.mxu0 0.0
      %999 = vmatprep.subr.mxu0 0.0
      %1000 = vmatpush1.msra.mxu0 0.0
      %1001 = vmatprep.subr.mxu0 0.0
      %1002 = vmatpush1.msra.mxu0 0.0
      %1003 = vmatprep.subr.mxu0 0.0
      %1004 = vmatpush1.msra.mxu0 0.0
      %1005 = vmatprep.subr.mxu0 0.0
      %1006 = vmatpush1.msra.mxu0 0.0
      %1007 = vmatprep.subr.mxu0 0.0
      %1008 = vmatpush1.msra.mxu0 0.0
      %1009 = vmatprep.subr.mxu0 0.0
      %1010 = vmatpush1.msra.mxu0 0.0
      %1011 = vmatprep.subr.mxu0 0.0
      %1012 = vmatpush1.msra.mxu0 0.0
      %1013 = vmatprep.subr.mxu0 0.0
      %1014 = vmatpush1.msra.mxu0 0.0
      %1015 = vmatprep.subr.mxu0 0.0
      %1016 = vmatpush1.msra.mxu0 0.0
      %1017 = vmatprep.subr.mxu0 0.0
      %1018 = vmatpush1.msra.mxu0 0.0
      %1019 = vmatprep.subr.mxu0 0.0
      %1020 = vmatpush1.msra.mxu0 0.0
      %1021 = vmatprep.subr.mxu0 %v843
      %1022 = vmatpush1.msra.mxu0 %v841
      %1023 = vmatprep.subr.mxu0 0.0
      %1024 = vmatpush2.msra.mxu0 0.0
      %1025 = vmatprep.subr.mxu0 0.0
      %1026 = vmatpush2.msra.mxu0 0.0
      %1027 = vmatprep.subr.mxu0 0.0
      %1028 = vmatpush2.msra.mxu0 0.0
      %1029 = vmatprep.subr.mxu0 0.0
      %1030 = vmatpush2.msra.mxu0 0.0
      %1031 = vmatprep.subr.mxu0 0.0
      %1032 = vmatpush2.msra.mxu0 0.0
      %1033 = vmatprep.subr.mxu0 0.0
      %1034 = vmatpush2.msra.mxu0 0.0
      %1035 = vmatprep.subr.mxu0 0.0
      %1036 = vmatpush2.msra.mxu0 0.0
      %1037 = vmatprep.subr.mxu0 0.0
      %1038 = vmatpush2.msra.mxu0 0.0
      %1039 = vmatprep.subr.mxu0 0.0
      %1040 = vmatpush2.msra.mxu0 0.0
      %1041 = vmatprep.subr.mxu0 0.0
      %1042 = vmatpush2.msra.mxu0 0.0
      %1043 = vmatprep.subr.mxu0 0.0
      %1044 = vmatpush2.msra.mxu0 0.0
      %1045 = vmatprep.subr.mxu0 0.0
      %1046 = vmatpush2.msra.mxu0 0.0
      %1047 = vmatprep.subr.mxu0 0.0
      %1048 = vmatpush2.msra.mxu0 0.0
      %1049 = vmatprep.subr.mxu0 0.0
      %1050 = vmatpush2.msra.mxu0 0.0
      %1051 = vmatprep.subr.mxu0 0.0
      %1052 = vmatpush2.msra.mxu0 0.0
      %1053 = vmatprep.subr.mxu0 0.0
      %1054 = vmatpush2.msra.mxu0 0.0
      %1055 = vmatprep.mubr.f32.mxu0 0.0
      %1056 = vmatmul.mubr.f32.gmra.mxu0 %v831
      %v1057 = vpop.f32.mrf.mxu0
      %v1058 = vadd.f32 %v755, %v1057
      %v1059 = vpop.f32.mrf.mxu0
      %v1060 = vadd.f32 %v757, %v1059
      %1061 = vdwg.mxu0
      %1062 = vmatprep.subr.mxu0 0.0
      %1063 = vmatpush1.msra.mxu0 0.0
      %1064 = vmatprep.subr.mxu0 0.0
      %1065 = vmatpush1.msra.mxu0 0.0
      %1066 = vmatprep.subr.mxu0 0.0
      %1067 = vmatpush1.msra.mxu0 0.0
      %1068 = vmatprep.subr.mxu0 0.0
      %1069 = vmatpush1.msra.mxu0 0.0
      %1070 = vmatprep.subr.mxu0 0.0
      %1071 = vmatpush1.msra.mxu0 0.0
      %1072 = vmatprep.subr.mxu0 0.0
      %1073 = vmatpush1.msra.mxu0 0.0
      %1074 = vmatprep.subr.mxu0 0.0
      %1075 = vmatpush1.msra.mxu0 0.0
      %1076 = vmatprep.subr.mxu0 0.0
      %1077 = vmatpush1.msra.mxu0 0.0
      %1078 = vmatprep.subr.mxu0 0.0
      %1079 = vmatpush1.msra.mxu0 0.0
      %1080 = vmatprep.subr.mxu0 0.0
      %1081 = vmatpush1.msra.mxu0 0.0
      %1082 = vmatprep.subr.mxu0 0.0
      %1083 = vmatpush1.msra.mxu0 0.0
      %1084 = vmatprep.subr.mxu0 0.0
      %1085 = vmatpush1.msra.mxu0 0.0
      %1086 = vmatprep.subr.mxu0 0.0
      %1087 = vmatpush1.msra.mxu0 0.0
      %1088 = vmatprep.subr.mxu0 0.0
      %1089 = vmatpush1.msra.mxu0 0.0
      %1090 = vmatprep.subr.mxu0 0.0
      %1091 = vmatpush1.msra.mxu0 0.0
      %1092 = vmatprep.subr.mxu0 %v847
      %1093 = vmatpush1.msra.mxu0 %v845
      %1094 = vmatprep.subr.mxu0 0.0
      %1095 = vmatpush2.msra.mxu0 0.0
      %1096 = vmatprep.subr.mxu0 0.0
      %1097 = vmatpush2.msra.mxu0 0.0
      %1098 = vmatprep.subr.mxu0 0.0
      %1099 = vmatpush2.msra.mxu0 0.0
      %1100 = vmatprep.subr.mxu0 0.0
      %1101 = vmatpush2.msra.mxu0 0.0
      %1102 = vmatprep.subr.mxu0 0.0
      %1103 = vmatpush2.msra.mxu0 0.0
      %1104 = vmatprep.subr.mxu0 0.0
      %1105 = vmatpush2.msra.mxu0 0.0
      %1106 = vmatprep.subr.mxu0 0.0
      %1107 = vmatpush2.msra.mxu0 0.0
      %1108 = vmatprep.subr.mxu0 0.0
      %1109 = vmatpush2.msra.mxu0 0.0
      %1110 = vmatprep.subr.mxu0 0.0
      %1111 = vmatpush2.msra.mxu0 0.0
      %1112 = vmatprep.subr.mxu0 0.0
      %1113 = vmatpush2.msra.mxu0 0.0
      %1114 = vmatprep.subr.mxu0 0.0
      %1115 = vmatpush2.msra.mxu0 0.0
      %1116 = vmatprep.subr.mxu0 0.0
      %1117 = vmatpush2.msra.mxu0 0.0
      %1118 = vmatprep.subr.mxu0 0.0
      %1119 = vmatpush2.msra.mxu0 0.0
      %1120 = vmatprep.subr.mxu0 0.0
      %1121 = vmatpush2.msra.mxu0 0.0
      %1122 = vmatprep.subr.mxu0 0.0
      %1123 = vmatpush2.msra.mxu0 0.0
      %1124 = vmatprep.subr.mxu0 0.0
      %1125 = vmatpush2.msra.mxu0 0.0
      %1126 = vmatprep.mubr.f32.mxu0 0.0
      %1127 = vmatmul.mubr.f32.gmra.mxu0 %v831
      %v1128 = vpop.f32.mrf.mxu0
      %v1129 = vadd.f32 %v826, %v1128
      %v1130 = vpop.f32.mrf.mxu0
      %v1131 = vadd.f32 %v828, %v1130
      %1132 = vdwg.mxu0
      %s1133 = scalar_lea.vmem %s3, 16
      %v1134 = vld [vmem:[%s1133] sm:$0xff]
      %v1136 = vsel %vm517, %v1134, 0
      %v1139 = vsel %vm521, %v465, 0
      %v1142 = vsel %vm521, %v466, 0
      %v1145 = vsel %vm521, %v467, 0
      %v1148 = vsel %vm521, %v468, 0
      %v1151 = vsel %vm521, %v469, 0
      %v1154 = vsel %vm521, %v470, 0
      %v1157 = vsel %vm521, %v471, 0
      %v1160 = vsel %vm521, %v472, 0
      %1162 = vmatprep.subr.mxu0 0.0
      %1163 = vmatpush1.msra.mxu0 0.0
      %1164 = vmatprep.subr.mxu0 0.0
      %1165 = vmatpush1.msra.mxu0 0.0
      %1166 = vmatprep.subr.mxu0 0.0
      %1167 = vmatpush1.msra.mxu0 0.0
      %1168 = vmatprep.subr.mxu0 0.0
      %1169 = vmatpush1.msra.mxu0 0.0
      %1170 = vmatprep.subr.mxu0 0.0
      %1171 = vmatpush1.msra.mxu0 0.0
      %1172 = vmatprep.subr.mxu0 0.0
      %1173 = vmatpush1.msra.mxu0 0.0
      %1174 = vmatprep.subr.mxu0 0.0
      %1175 = vmatpush1.msra.mxu0 0.0
      %1176 = vmatprep.subr.mxu0 0.0
      %1177 = vmatpush1.msra.mxu0 0.0
      %1178 = vmatprep.subr.mxu0 0.0
      %1179 = vmatpush1.msra.mxu0 0.0
      %1180 = vmatprep.subr.mxu0 0.0
      %1181 = vmatpush1.msra.mxu0 0.0
      %1182 = vmatprep.subr.mxu0 0.0
      %1183 = vmatpush1.msra.mxu0 0.0
      %1184 = vmatprep.subr.mxu0 0.0
      %1185 = vmatpush1.msra.mxu0 0.0
      %1186 = vmatprep.subr.mxu0 0.0
      %1187 = vmatpush1.msra.mxu0 0.0
      %1188 = vmatprep.subr.mxu0 0.0
      %1189 = vmatpush1.msra.mxu0 0.0
      %1190 = vmatprep.subr.mxu0 0.0
      %1191 = vmatpush1.msra.mxu0 0.0
      %1192 = vmatprep.subr.mxu0 %v1142
      %1193 = vmatpush1.msra.mxu0 %v1139
      %1194 = vmatprep.subr.mxu0 0.0
      %1195 = vmatpush2.msra.mxu0 0.0
      %1196 = vmatprep.subr.mxu0 0.0
      %1197 = vmatpush2.msra.mxu0 0.0
      %1198 = vmatprep.subr.mxu0 0.0
      %1199 = vmatpush2.msra.mxu0 0.0
      %1200 = vmatprep.subr.mxu0 0.0
      %1201 = vmatpush2.msra.mxu0 0.0
      %1202 = vmatprep.subr.mxu0 0.0
      %1203 = vmatpush2.msra.mxu0 0.0
      %1204 = vmatprep.subr.mxu0 0.0
      %1205 = vmatpush2.msra.mxu0 0.0
      %1206 = vmatprep.subr.mxu0 0.0
      %1207 = vmatpush2.msra.mxu0 0.0
      %1208 = vmatprep.subr.mxu0 0.0
      %1209 = vmatpush2.msra.mxu0 0.0
      %1210 = vmatprep.subr.mxu0 0.0
      %1211 = vmatpush2.msra.mxu0 0.0
      %1212 = vmatprep.subr.mxu0 0.0
      %1213 = vmatpush2.msra.mxu0 0.0
      %1214 = vmatprep.subr.mxu0 0.0
      %1215 = vmatpush2.msra.mxu0 0.0
      %1216 = vmatprep.subr.mxu0 0.0
      %1217 = vmatpush2.msra.mxu0 0.0
      %1218 = vmatprep.subr.mxu0 0.0
      %1219 = vmatpush2.msra.mxu0 0.0
      %1220 = vmatprep.subr.mxu0 0.0
      %1221 = vmatpush2.msra.mxu0 0.0
      %1222 = vmatprep.subr.mxu0 0.0
      %1223 = vmatpush2.msra.mxu0 0.0
      %1224 = vmatprep.subr.mxu0 0.0
      %1225 = vmatpush2.msra.mxu0 0.0
      %1226 = vmatprep.mubr.f32.mxu0 0.0
      %1227 = vmatmul.mubr.f32.gmra.mxu0 %v1136
      %v1228 = vpop.f32.mrf.mxu0
      %v1229 = vadd.f32 0.0, %v1228
      %v1230 = vpop.f32.mrf.mxu0
      %v1231 = vadd.f32 0.0, %v1230
      %1232 = vdwg.mxu0
      %1233 = vmatprep.subr.mxu0 0.0
      %1234 = vmatpush1.msra.mxu0 0.0
      %1235 = vmatprep.subr.mxu0 0.0
      %1236 = vmatpush1.msra.mxu0 0.0
      %1237 = vmatprep.subr.mxu0 0.0
      %1238 = vmatpush1.msra.mxu0 0.0
      %1239 = vmatprep.subr.mxu0 0.0
      %1240 = vmatpush1.msra.mxu0 0.0
      %1241 = vmatprep.subr.mxu0 0.0
      %1242 = vmatpush1.msra.mxu0 0.0
      %1243 = vmatprep.subr.mxu0 0.0
      %1244 = vmatpush1.msra.mxu0 0.0
      %1245 = vmatprep.subr.mxu0 0.0
      %1246 = vmatpush1.msra.mxu0 0.0
      %1247 = vmatprep.subr.mxu0 0.0
      %1248 = vmatpush1.msra.mxu0 0.0
      %1249 = vmatprep.subr.mxu0 0.0
      %1250 = vmatpush1.msra.mxu0 0.0
      %1251 = vmatprep.subr.mxu0 0.0
      %1252 = vmatpush1.msra.mxu0 0.0
      %1253 = vmatprep.subr.mxu0 0.0
      %1254 = vmatpush1.msra.mxu0 0.0
      %1255 = vmatprep.subr.mxu0 0.0
      %1256 = vmatpush1.msra.mxu0 0.0
      %1257 = vmatprep.subr.mxu0 0.0
      %1258 = vmatpush1.msra.mxu0 0.0
      %1259 = vmatprep.subr.mxu0 0.0
      %1260 = vmatpush1.msra.mxu0 0.0
      %1261 = vmatprep.subr.mxu0 0.0
      %1262 = vmatpush1.msra.mxu0 0.0
      %1263 = vmatprep.subr.mxu0 %v1148
      %1264 = vmatpush1.msra.mxu0 %v1145
      %1265 = vmatprep.subr.mxu0 0.0
      %1266 = vmatpush2.msra.mxu0 0.0
      %1267 = vmatprep.subr.mxu0 0.0
      %1268 = vmatpush2.msra.mxu0 0.0
      %1269 = vmatprep.subr.mxu0 0.0
      %1270 = vmatpush2.msra.mxu0 0.0
      %1271 = vmatprep.subr.mxu0 0.0
      %1272 = vmatpush2.msra.mxu0 0.0
      %1273 = vmatprep.subr.mxu0 0.0
      %1274 = vmatpush2.msra.mxu0 0.0
      %1275 = vmatprep.subr.mxu0 0.0
      %1276 = vmatpush2.msra.mxu0 0.0
      %1277 = vmatprep.subr.mxu0 0.0
      %1278 = vmatpush2.msra.mxu0 0.0
      %1279 = vmatprep.subr.mxu0 0.0
      %1280 = vmatpush2.msra.mxu0 0.0
      %1281 = vmatprep.subr.mxu0 0.0
      %1282 = vmatpush2.msra.mxu0 0.0
      %1283 = vmatprep.subr.mxu0 0.0
      %1284 = vmatpush2.msra.mxu0 0.0
      %1285 = vmatprep.subr.mxu0 0.0
      %1286 = vmatpush2.msra.mxu0 0.0
      %1287 = vmatprep.subr.mxu0 0.0
      %1288 = vmatpush2.msra.mxu0 0.0
      %1289 = vmatprep.subr.mxu0 0.0
      %1290 = vmatpush2.msra.mxu0 0.0
      %1291 = vmatprep.subr.mxu0 0.0
      %1292 = vmatpush2.msra.mxu0 0.0
      %1293 = vmatprep.subr.mxu0 0.0
      %1294 = vmatpush2.msra.mxu0 0.0
      %1295 = vmatprep.subr.mxu0 0.0
      %1296 = vmatpush2.msra.mxu0 0.0
      %1297 = vmatprep.mubr.f32.mxu0 0.0
      %1298 = vmatmul.mubr.f32.gmra.mxu0 %v1136
      %v1299 = vpop.f32.mrf.mxu0
      %v1300 = vadd.f32 0.0, %v1299
      %v1301 = vpop.f32.mrf.mxu0
      %v1302 = vadd.f32 0.0, %v1301
      %1303 = vdwg.mxu0
      %1304 = vmatprep.subr.mxu0 0.0
      %1305 = vmatpush1.msra.mxu0 0.0
      %1306 = vmatprep.subr.mxu0 0.0
      %1307 = vmatpush1.msra.mxu0 0.0
      %1308 = vmatprep.subr.mxu0 0.0
      %1309 = vmatpush1.msra.mxu0 0.0
      %1310 = vmatprep.subr.mxu0 0.0
      %1311 = vmatpush1.msra.mxu0 0.0
      %1312 = vmatprep.subr.mxu0 0.0
      %1313 = vmatpush1.msra.mxu0 0.0
      %1314 = vmatprep.subr.mxu0 0.0
      %1315 = vmatpush1.msra.mxu0 0.0
      %1316 = vmatprep.subr.mxu0 0.0
      %1317 = vmatpush1.msra.mxu0 0.0
      %1318 = vmatprep.subr.mxu0 0.0
      %1319 = vmatpush1.msra.mxu0 0.0
      %1320 = vmatprep.subr.mxu0 0.0
      %1321 = vmatpush1.msra.mxu0 0.0
      %1322 = vmatprep.subr.mxu0 0.0
      %1323 = vmatpush1.msra.mxu0 0.0
      %1324 = vmatprep.subr.mxu0 0.0
      %1325 = vmatpush1.msra.mxu0 0.0
      %1326 = vmatprep.subr.mxu0 0.0
      %1327 = vmatpush1.msra.mxu0 0.0
      %1328 = vmatprep.subr.mxu0 0.0
      %1329 = vmatpush1.msra.mxu0 0.0
      %1330 = vmatprep.subr.mxu0 0.0
      %1331 = vmatpush1.msra.mxu0 0.0
      %1332 = vmatprep.subr.mxu0 0.0
      %1333 = vmatpush1.msra.mxu0 0.0
      %1334 = vmatprep.subr.mxu0 %v1154
      %1335 = vmatpush1.msra.mxu0 %v1151
      %1336 = vmatprep.subr.mxu0 0.0
      %1337 = vmatpush2.msra.mxu0 0.0
      %1338 = vmatprep.subr.mxu0 0.0
      %1339 = vmatpush2.msra.mxu0 0.0
      %1340 = vmatprep.subr.mxu0 0.0
      %1341 = vmatpush2.msra.mxu0 0.0
      %1342 = vmatprep.subr.mxu0 0.0
      %1343 = vmatpush2.msra.mxu0 0.0
      %1344 = vmatprep.subr.mxu0 0.0
      %1345 = vmatpush2.msra.mxu0 0.0
      %1346 = vmatprep.subr.mxu0 0.0
      %1347 = vmatpush2.msra.mxu0 0.0
      %1348 = vmatprep.subr.mxu0 0.0
      %1349 = vmatpush2.msra.mxu0 0.0
      %1350 = vmatprep.subr.mxu0 0.0
      %1351 = vmatpush2.msra.mxu0 0.0
      %1352 = vmatprep.subr.mxu0 0.0
      %1353 = vmatpush2.msra.mxu0 0.0
      %1354 = vmatprep.subr.mxu0 0.0
      %1355 = vmatpush2.msra.mxu0 0.0
      %1356 = vmatprep.subr.mxu0 0.0
      %1357 = vmatpush2.msra.mxu0 0.0
      %1358 = vmatprep.subr.mxu0 0.0
      %1359 = vmatpush2.msra.mxu0 0.0
      %1360 = vmatprep.subr.mxu0 0.0
      %1361 = vmatpush2.msra.mxu0 0.0
      %1362 = vmatprep.subr.mxu0 0.0
      %1363 = vmatpush2.msra.mxu0 0.0
      %1364 = vmatprep.subr.mxu0 0.0
      %1365 = vmatpush2.msra.mxu0 0.0
      %1366 = vmatprep.subr.mxu0 0.0
      %1367 = vmatpush2.msra.mxu0 0.0
      %1368 = vmatprep.mubr.f32.mxu0 0.0
      %1369 = vmatmul.mubr.f32.gmra.mxu0 %v1136
      %v1370 = vpop.f32.mrf.mxu0
      %v1371 = vadd.f32 0.0, %v1370
      %v1372 = vpop.f32.mrf.mxu0
      %v1373 = vadd.f32 0.0, %v1372
      %1374 = vdwg.mxu0
      %1375 = vmatprep.subr.mxu0 0.0
      %1376 = vmatpush1.msra.mxu0 0.0
      %1377 = vmatprep.subr.mxu0 0.0
      %1378 = vmatpush1.msra.mxu0 0.0
      %1379 = vmatprep.subr.mxu0 0.0
      %1380 = vmatpush1.msra.mxu0 0.0
      %1381 = vmatprep.subr.mxu0 0.0
      %1382 = vmatpush1.msra.mxu0 0.0
      %1383 = vmatprep.subr.mxu0 0.0
      %1384 = vmatpush1.msra.mxu0 0.0
      %1385 = vmatprep.subr.mxu0 0.0
      %1386 = vmatpush1.msra.mxu0 0.0
      %1387 = vmatprep.subr.mxu0 0.0
      %1388 = vmatpush1.msra.mxu0 0.0
      %1389 = vmatprep.subr.mxu0 0.0
      %1390 = vmatpush1.msra.mxu0 0.0
      %1391 = vmatprep.subr.mxu0 0.0
      %1392 = vmatpush1.msra.mxu0 0.0
      %1393 = vmatprep.subr.mxu0 0.0
      %1394 = vmatpush1.msra.mxu0 0.0
      %1395 = vmatprep.subr.mxu0 0.0
      %1396 = vmatpush1.msra.mxu0 0.0
      %1397 = vmatprep.subr.mxu0 0.0
      %1398 = vmatpush1.msra.mxu0 0.0
      %1399 = vmatprep.subr.mxu0 0.0
      %1400 = vmatpush1.msra.mxu0 0.0
      %1401 = vmatprep.subr.mxu0 0.0
      %1402 = vmatpush1.msra.mxu0 0.0
      %1403 = vmatprep.subr.mxu0 0.0
      %1404 = vmatpush1.msra.mxu0 0.0
      %1405 = vmatprep.subr.mxu0 %v1160
      %1406 = vmatpush1.msra.mxu0 %v1157
      %1407 = vmatprep.subr.mxu0 0.0
      %1408 = vmatpush2.msra.mxu0 0.0
      %1409 = vmatprep.subr.mxu0 0.0
      %1410 = vmatpush2.msra.mxu0 0.0
      %1411 = vmatprep.subr.mxu0 0.0
      %1412 = vmatpush2.msra.mxu0 0.0
      %1413 = vmatprep.subr.mxu0 0.0
      %1414 = vmatpush2.msra.mxu0 0.0
      %1415 = vmatprep.subr.mxu0 0.0
      %1416 = vmatpush2.msra.mxu0 0.0
      %1417 = vmatprep.subr.mxu0 0.0
      %1418 = vmatpush2.msra.mxu0 0.0
      %1419 = vmatprep.subr.mxu0 0.0
      %1420 = vmatpush2.msra.mxu0 0.0
      %1421 = vmatprep.subr.mxu0 0.0
      %1422 = vmatpush2.msra.mxu0 0.0
      %1423 = vmatprep.subr.mxu0 0.0
      %1424 = vmatpush2.msra.mxu0 0.0
      %1425 = vmatprep.subr.mxu0 0.0
      %1426 = vmatpush2.msra.mxu0 0.0
      %1427 = vmatprep.subr.mxu0 0.0
      %1428 = vmatpush2.msra.mxu0 0.0
      %1429 = vmatprep.subr.mxu0 0.0
      %1430 = vmatpush2.msra.mxu0 0.0
      %1431 = vmatprep.subr.mxu0 0.0
      %1432 = vmatpush2.msra.mxu0 0.0
      %1433 = vmatprep.subr.mxu0 0.0
      %1434 = vmatpush2.msra.mxu0 0.0
      %1435 = vmatprep.subr.mxu0 0.0
      %1436 = vmatpush2.msra.mxu0 0.0
      %1437 = vmatprep.subr.mxu0 0.0
      %1438 = vmatpush2.msra.mxu0 0.0
      %1439 = vmatprep.mubr.f32.mxu0 0.0
      %1440 = vmatmul.mubr.f32.gmra.mxu0 %v1136
      %v1441 = vpop.f32.mrf.mxu0
      %v1442 = vadd.f32 0.0, %v1441
      %v1443 = vpop.f32.mrf.mxu0
      %v1444 = vadd.f32 0.0, %v1443
      %1445 = vdwg.mxu0
      %v1446 = vadd.f32 %v916, %v1229
      %v1447 = vadd.f32 %v918, %v1231
      %v1448 = vadd.f32 %v987, %v1300
      %v1449 = vadd.f32 %v989, %v1302
      %v1450 = vadd.f32 %v1058, %v1371
      %v1451 = vadd.f32 %v1060, %v1373
      %v1452 = vadd.f32 %v1129, %v1442
      %v1453 = vadd.f32 %v1131, %v1444
      %s1454 = scalar_lea.vmem %s3, 24
      %v1455 = vld [vmem:[%s1454] sm:$0xff]
      %v1457 = vsel %vm517, %v1455, 0
      %v1460 = vsel %vm521, %v506, 0
      %v1463 = vsel %vm521, %v507, 0
      %v1466 = vsel %vm521, %v508, 0
      %v1469 = vsel %vm521, %v509, 0
      %v1472 = vsel %vm521, %v510, 0
      %v1475 = vsel %vm521, %v511, 0
      %v1478 = vsel %vm521, %v512, 0
      %v1481 = vsel %vm521, %v513, 0
      %1483 = vmatprep.subr.mxu0 0.0
      %1484 = vmatpush1.msra.mxu0 0.0
      %1485 = vmatprep.subr.mxu0 0.0
      %1486 = vmatpush1.msra.mxu0 0.0
      %1487 = vmatprep.subr.mxu0 0.0
      %1488 = vmatpush1.msra.mxu0 0.0
      %1489 = vmatprep.subr.mxu0 0.0
      %1490 = vmatpush1.msra.mxu0 0.0
      %1491 = vmatprep.subr.mxu0 0.0
      %1492 = vmatpush1.msra.mxu0 0.0
      %1493 = vmatprep.subr.mxu0 0.0
      %1494 = vmatpush1.msra.mxu0 0.0
      %1495 = vmatprep.subr.mxu0 0.0
      %1496 = vmatpush1.msra.mxu0 0.0
      %1497 = vmatprep.subr.mxu0 0.0
      %1498 = vmatpush1.msra.mxu0 0.0
      %1499 = vmatprep.subr.mxu0 0.0
      %1500 = vmatpush1.msra.mxu0 0.0
      %1501 = vmatprep.subr.mxu0 0.0
      %1502 = vmatpush1.msra.mxu0 0.0
      %1503 = vmatprep.subr.mxu0 0.0
      %1504 = vmatpush1.msra.mxu0 0.0
      %1505 = vmatprep.subr.mxu0 0.0
      %1506 = vmatpush1.msra.mxu0 0.0
      %1507 = vmatprep.subr.mxu0 0.0
      %1508 = vmatpush1.msra.mxu0 0.0
      %1509 = vmatprep.subr.mxu0 0.0
      %1510 = vmatpush1.msra.mxu0 0.0
      %1511 = vmatprep.subr.mxu0 0.0
      %1512 = vmatpush1.msra.mxu0 0.0
      %1513 = vmatprep.subr.mxu0 %v1463
      %1514 = vmatpush1.msra.mxu0 %v1460
      %1515 = vmatprep.subr.mxu0 0.0
      %1516 = vmatpush2.msra.mxu0 0.0
      %1517 = vmatprep.subr.mxu0 0.0
      %1518 = vmatpush2.msra.mxu0 0.0
      %1519 = vmatprep.subr.mxu0 0.0
      %1520 = vmatpush2.msra.mxu0 0.0
      %1521 = vmatprep.subr.mxu0 0.0
      %1522 = vmatpush2.msra.mxu0 0.0
      %1523 = vmatprep.subr.mxu0 0.0
      %1524 = vmatpush2.msra.mxu0 0.0
      %1525 = vmatprep.subr.mxu0 0.0
      %1526 = vmatpush2.msra.mxu0 0.0
      %1527 = vmatprep.subr.mxu0 0.0
      %1528 = vmatpush2.msra.mxu0 0.0
      %1529 = vmatprep.subr.mxu0 0.0
      %1530 = vmatpush2.msra.mxu0 0.0
      %1531 = vmatprep.subr.mxu0 0.0
      %1532 = vmatpush2.msra.mxu0 0.0
      %1533 = vmatprep.subr.mxu0 0.0
      %1534 = vmatpush2.msra.mxu0 0.0
      %1535 = vmatprep.subr.mxu0 0.0
      %1536 = vmatpush2.msra.mxu0 0.0
      %1537 = vmatprep.subr.mxu0 0.0
      %1538 = vmatpush2.msra.mxu0 0.0
      %1539 = vmatprep.subr.mxu0 0.0
      %1540 = vmatpush2.msra.mxu0 0.0
      %1541 = vmatprep.subr.mxu0 0.0
      %1542 = vmatpush2.msra.mxu0 0.0
      %1543 = vmatprep.subr.mxu0 0.0
      %1544 = vmatpush2.msra.mxu0 0.0
      %1545 = vmatprep.subr.mxu0 0.0
      %1546 = vmatpush2.msra.mxu0 0.0
      %1547 = vmatprep.mubr.f32.mxu0 0.0
      %1548 = vmatmul.mubr.f32.gmra.mxu0 %v1457
      %v1549 = vpop.f32.mrf.mxu0
      %v1550 = vadd.f32 0.0, %v1549
      %v1551 = vpop.f32.mrf.mxu0
      %v1552 = vadd.f32 0.0, %v1551
      %1553 = vdwg.mxu0
      %1554 = vmatprep.subr.mxu0 0.0
      %1555 = vmatpush1.msra.mxu0 0.0
      %1556 = vmatprep.subr.mxu0 0.0
      %1557 = vmatpush1.msra.mxu0 0.0
      %1558 = vmatprep.subr.mxu0 0.0
      %1559 = vmatpush1.msra.mxu0 0.0
      %1560 = vmatprep.subr.mxu0 0.0
      %1561 = vmatpush1.msra.mxu0 0.0
      %1562 = vmatprep.subr.mxu0 0.0
      %1563 = vmatpush1.msra.mxu0 0.0
      %1564 = vmatprep.subr.mxu0 0.0
      %1565 = vmatpush1.msra.mxu0 0.0
      %1566 = vmatprep.subr.mxu0 0.0
      %1567 = vmatpush1.msra.mxu0 0.0
      %1568 = vmatprep.subr.mxu0 0.0
      %1569 = vmatpush1.msra.mxu0 0.0
      %1570 = vmatprep.subr.mxu0 0.0
      %1571 = vmatpush1.msra.mxu0 0.0
      %1572 = vmatprep.subr.mxu0 0.0
      %1573 = vmatpush1.msra.mxu0 0.0
      %1574 = vmatprep.subr.mxu0 0.0
      %1575 = vmatpush1.msra.mxu0 0.0
      %1576 = vmatprep.subr.mxu0 0.0
      %1577 = vmatpush1.msra.mxu0 0.0
      %1578 = vmatprep.subr.mxu0 0.0
      %1579 = vmatpush1.msra.mxu0 0.0
      %1580 = vmatprep.subr.mxu0 0.0
      %1581 = vmatpush1.msra.mxu0 0.0
      %1582 = vmatprep.subr.mxu0 0.0
      %1583 = vmatpush1.msra.mxu0 0.0
      %1584 = vmatprep.subr.mxu0 %v1469
      %1585 = vmatpush1.msra.mxu0 %v1466
      %1586 = vmatprep.subr.mxu0 0.0
      %1587 = vmatpush2.msra.mxu0 0.0
      %1588 = vmatprep.subr.mxu0 0.0
      %1589 = vmatpush2.msra.mxu0 0.0
      %1590 = vmatprep.subr.mxu0 0.0
      %1591 = vmatpush2.msra.mxu0 0.0
      %1592 = vmatprep.subr.mxu0 0.0
      %1593 = vmatpush2.msra.mxu0 0.0
      %1594 = vmatprep.subr.mxu0 0.0
      %1595 = vmatpush2.msra.mxu0 0.0
      %1596 = vmatprep.subr.mxu0 0.0
      %1597 = vmatpush2.msra.mxu0 0.0
      %1598 = vmatprep.subr.mxu0 0.0
      %1599 = vmatpush2.msra.mxu0 0.0
      %1600 = vmatprep.subr.mxu0 0.0
      %1601 = vmatpush2.msra.mxu0 0.0
      %1602 = vmatprep.subr.mxu0 0.0
      %1603 = vmatpush2.msra.mxu0 0.0
      %1604 = vmatprep.subr.mxu0 0.0
      %1605 = vmatpush2.msra.mxu0 0.0
      %1606 = vmatprep.subr.mxu0 0.0
      %1607 = vmatpush2.msra.mxu0 0.0
      %1608 = vmatprep.subr.mxu0 0.0
      %1609 = vmatpush2.msra.mxu0 0.0
      %1610 = vmatprep.subr.mxu0 0.0
      %1611 = vmatpush2.msra.mxu0 0.0
      %1612 = vmatprep.subr.mxu0 0.0
      %1613 = vmatpush2.msra.mxu0 0.0
      %1614 = vmatprep.subr.mxu0 0.0
      %1615 = vmatpush2.msra.mxu0 0.0
      %1616 = vmatprep.subr.mxu0 0.0
      %1617 = vmatpush2.msra.mxu0 0.0
      %1618 = vmatprep.mubr.f32.mxu0 0.0
      %1619 = vmatmul.mubr.f32.gmra.mxu0 %v1457
      %v1620 = vpop.f32.mrf.mxu0
      %v1621 = vadd.f32 0.0, %v1620
      %v1622 = vpop.f32.mrf.mxu0
      %v1623 = vadd.f32 0.0, %v1622
      %1624 = vdwg.mxu0
      %1625 = vmatprep.subr.mxu0 0.0
      %1626 = vmatpush1.msra.mxu0 0.0
      %1627 = vmatprep.subr.mxu0 0.0
      %1628 = vmatpush1.msra.mxu0 0.0
      %1629 = vmatprep.subr.mxu0 0.0
      %1630 = vmatpush1.msra.mxu0 0.0
      %1631 = vmatprep.subr.mxu0 0.0
      %1632 = vmatpush1.msra.mxu0 0.0
      %1633 = vmatprep.subr.mxu0 0.0
      %1634 = vmatpush1.msra.mxu0 0.0
      %1635 = vmatprep.subr.mxu0 0.0
      %1636 = vmatpush1.msra.mxu0 0.0
      %1637 = vmatprep.subr.mxu0 0.0
      %1638 = vmatpush1.msra.mxu0 0.0
      %1639 = vmatprep.subr.mxu0 0.0
      %1640 = vmatpush1.msra.mxu0 0.0
      %1641 = vmatprep.subr.mxu0 0.0
      %1642 = vmatpush1.msra.mxu0 0.0
      %1643 = vmatprep.subr.mxu0 0.0
      %1644 = vmatpush1.msra.mxu0 0.0
      %1645 = vmatprep.subr.mxu0 0.0
      %1646 = vmatpush1.msra.mxu0 0.0
      %1647 = vmatprep.subr.mxu0 0.0
      %1648 = vmatpush1.msra.mxu0 0.0
      %1649 = vmatprep.subr.mxu0 0.0
      %1650 = vmatpush1.msra.mxu0 0.0
      %1651 = vmatprep.subr.mxu0 0.0
      %1652 = vmatpush1.msra.mxu0 0.0
      %1653 = vmatprep.subr.mxu0 0.0
      %1654 = vmatpush1.msra.mxu0 0.0
      %1655 = vmatprep.subr.mxu0 %v1475
      %1656 = vmatpush1.msra.mxu0 %v1472
      %1657 = vmatprep.subr.mxu0 0.0
      %1658 = vmatpush2.msra.mxu0 0.0
      %1659 = vmatprep.subr.mxu0 0.0
      %1660 = vmatpush2.msra.mxu0 0.0
      %1661 = vmatprep.subr.mxu0 0.0
      %1662 = vmatpush2.msra.mxu0 0.0
      %1663 = vmatprep.subr.mxu0 0.0
      %1664 = vmatpush2.msra.mxu0 0.0
      %1665 = vmatprep.subr.mxu0 0.0
      %1666 = vmatpush2.msra.mxu0 0.0
      %1667 = vmatprep.subr.mxu0 0.0
      %1668 = vmatpush2.msra.mxu0 0.0
      %1669 = vmatprep.subr.mxu0 0.0
      %1670 = vmatpush2.msra.mxu0 0.0
      %1671 = vmatprep.subr.mxu0 0.0
      %1672 = vmatpush2.msra.mxu0 0.0
      %1673 = vmatprep.subr.mxu0 0.0
      %1674 = vmatpush2.msra.mxu0 0.0
      %1675 = vmatprep.subr.mxu0 0.0
      %1676 = vmatpush2.msra.mxu0 0.0
      %1677 = vmatprep.subr.mxu0 0.0
      %1678 = vmatpush2.msra.mxu0 0.0
      %1679 = vmatprep.subr.mxu0 0.0
      %1680 = vmatpush2.msra.mxu0 0.0
      %1681 = vmatprep.subr.mxu0 0.0
      %1682 = vmatpush2.msra.mxu0 0.0
      %1683 = vmatprep.subr.mxu0 0.0
      %1684 = vmatpush2.msra.mxu0 0.0
      %1685 = vmatprep.subr.mxu0 0.0
      %1686 = vmatpush2.msra.mxu0 0.0
      %1687 = vmatprep.subr.mxu0 0.0
      %1688 = vmatpush2.msra.mxu0 0.0
      %1689 = vmatprep.mubr.f32.mxu0 0.0
      %1690 = vmatmul.mubr.f32.gmra.mxu0 %v1457
      %v1691 = vpop.f32.mrf.mxu0
      %v1692 = vadd.f32 0.0, %v1691
      %v1693 = vpop.f32.mrf.mxu0
      %v1694 = vadd.f32 0.0, %v1693
      %1695 = vdwg.mxu0
      %1696 = vmatprep.subr.mxu0 0.0
      %1697 = vmatpush1.msra.mxu0 0.0
      %1698 = vmatprep.subr.mxu0 0.0
      %1699 = vmatpush1.msra.mxu0 0.0
      %1700 = vmatprep.subr.mxu0 0.0
      %1701 = vmatpush1.msra.mxu0 0.0
      %1702 = vmatprep.subr.mxu0 0.0
      %1703 = vmatpush1.msra.mxu0 0.0
      %1704 = vmatprep.subr.mxu0 0.0
      %1705 = vmatpush1.msra.mxu0 0.0
      %1706 = vmatprep.subr.mxu0 0.0
      %1707 = vmatpush1.msra.mxu0 0.0
      %1708 = vmatprep.subr.mxu0 0.0
      %1709 = vmatpush1.msra.mxu0 0.0
      %1710 = vmatprep.subr.mxu0 0.0
      %1711 = vmatpush1.msra.mxu0 0.0
      %1712 = vmatprep.subr.mxu0 0.0
      %1713 = vmatpush1.msra.mxu0 0.0
      %1714 = vmatprep.subr.mxu0 0.0
      %1715 = vmatpush1.msra.mxu0 0.0
      %1716 = vmatprep.subr.mxu0 0.0
      %1717 = vmatpush1.msra.mxu0 0.0
      %1718 = vmatprep.subr.mxu0 0.0
      %1719 = vmatpush1.msra.mxu0 0.0
      %1720 = vmatprep.subr.mxu0 0.0
      %1721 = vmatpush1.msra.mxu0 0.0
      %1722 = vmatprep.subr.mxu0 0.0
      %1723 = vmatpush1.msra.mxu0 0.0
      %1724 = vmatprep.subr.mxu0 0.0
      %1725 = vmatpush1.msra.mxu0 0.0
      %1726 = vmatprep.subr.mxu0 %v1481
      %1727 = vmatpush1.msra.mxu0 %v1478
      %1728 = vmatprep.subr.mxu0 0.0
      %1729 = vmatpush2.msra.mxu0 0.0
      %1730 = vmatprep.subr.mxu0 0.0
      %1731 = vmatpush2.msra.mxu0 0.0
      %1732 = vmatprep.subr.mxu0 0.0
      %1733 = vmatpush2.msra.mxu0 0.0
      %1734 = vmatprep.subr.mxu0 0.0
      %1735 = vmatpush2.msra.mxu0 0.0
      %1736 = vmatprep.subr.mxu0 0.0
      %1737 = vmatpush2.msra.mxu0 0.0
      %1738 = vmatprep.subr.mxu0 0.0
      %1739 = vmatpush2.msra.mxu0 0.0
      %1740 = vmatprep.subr.mxu0 0.0
      %1741 = vmatpush2.msra.mxu0 0.0
      %1742 = vmatprep.subr.mxu0 0.0
      %1743 = vmatpush2.msra.mxu0 0.0
      %1744 = vmatprep.subr.mxu0 0.0
      %1745 = vmatpush2.msra.mxu0 0.0
      %1746 = vmatprep.subr.mxu0 0.0
      %1747 = vmatpush2.msra.mxu0 0.0
      %1748 = vmatprep.subr.mxu0 0.0
      %1749 = vmatpush2.msra.mxu0 0.0
      %1750 = vmatprep.subr.mxu0 0.0
      %1751 = vmatpush2.msra.mxu0 0.0
      %1752 = vmatprep.subr.mxu0 0.0
      %1753 = vmatpush2.msra.mxu0 0.0
      %1754 = vmatprep.subr.mxu0 0.0
      %1755 = vmatpush2.msra.mxu0 0.0
      %1756 = vmatprep.subr.mxu0 0.0
      %1757 = vmatpush2.msra.mxu0 0.0
      %1758 = vmatprep.subr.mxu0 0.0
      %1759 = vmatpush2.msra.mxu0 0.0
      %1760 = vmatprep.mubr.f32.mxu0 0.0
      %1761 = vmatmul.mubr.f32.gmra.mxu0 %v1457
      %v1762 = vpop.f32.mrf.mxu0
      %v1763 = vadd.f32 0.0, %v1762
      %v1764 = vpop.f32.mrf.mxu0
      %v1765 = vadd.f32 0.0, %v1764
      %1766 = vdwg.mxu0
      %v1767 = vadd.f32 %v1446, %v1550
      %v1768 = vadd.f32 %v1447, %v1552
      %v1769 = vadd.f32 %v1448, %v1621
      %v1770 = vadd.f32 %v1449, %v1623
      %v1771 = vadd.f32 %v1450, %v1692
      %v1772 = vadd.f32 %v1451, %v1694
      %v1773 = vadd.f32 %v1452, %v1763
      %v1774 = vadd.f32 %v1453, %v1765
      %1775 = vst [vmem:[%s231] sm:$0xff] %v1767
      %1776 = vst [vmem:[%s231 + $0x8] sm:$0xff] %v1768
      %1777 = vst [vmem:[%s231 + $0x10] sm:$0xff] %v1769
      %1778 = vst [vmem:[%s231 + $0x18] sm:$0xff] %v1770
      %1779 = vst [vmem:[%s231 + $0x20] sm:$0xff] %v1771
      %1780 = vst [vmem:[%s231 + $0x28] sm:$0xff] %v1772
      %1781 = vst [vmem:[%s231 + $0x30] sm:$0xff] %v1773
      %1782 = vst [vmem:[%s231 + $0x38] sm:$0xff] %v1774
      %v1783 = vadd.f32 %v1767, %v1768
      %v1784 = vadd.f32 %v1783, %v1769
      %v1785 = vadd.f32 %v1784, %v1770
      %v1786 = vadd.f32 %v1785, %v1771
      %v1787 = vadd.f32 %v1786, %v1772
      %v1788 = vadd.f32 %v1787, %v1773
      %v1789 = vadd.f32 %v1788, %v1774
      %1790 = vadd.xlane.f32.xlu0 %v1789
      %v1791 = vpop.xlane.xlu0 %1790
      %vm1792 = vcmask 7168
      %1793 = vst.msk [vmem:[%s235] sm:$0xff] %vm1792, %v1791
      %v1794 = vmul.f32 %v1767, %v1767
      %v1795 = vmul.f32 %v1768, %v1768
      %v1796 = vmul.f32 %v1769, %v1769
      %v1797 = vmul.f32 %v1770, %v1770
      %v1798 = vmul.f32 %v1771, %v1771
      %v1799 = vmul.f32 %v1772, %v1772
      %v1800 = vmul.f32 %v1773, %v1773
      %v1801 = vmul.f32 %v1774, %v1774
      %v1802 = vadd.f32 %v1794, %v1795
      %v1803 = vadd.f32 %v1802, %v1796
      %v1804 = vadd.f32 %v1803, %v1797
      %v1805 = vadd.f32 %v1804, %v1798
      %v1806 = vadd.f32 %v1805, %v1799
      %v1807 = vadd.f32 %v1806, %v1800
      %v1808 = vadd.f32 %v1807, %v1801
      %1809 = vadd.xlane.f32.xlu0 %v1808
      %v1810 = vpop.xlane.xlu0 %1809
      %vm1811 = vcmask 15368
      %1812 = vst.msk [vmem:[%s235] sm:$0xff] %vm1811, %v1810
      %p1813 = scmp.lt.s32.totalorder %s17, 1
      %s1814 = scalar_select %p1813, %s17, 1
      %s1815 = smul.addr %s1814, 8
      %s1816 = smul.addr %s1815, 8
      %s1817 = scalar_lea.vmem %s4, %s1816
      %p1818 = scmp.lt.s32.totalorder %s17, 1
      %s1819 = scalar_select %p1818, %s17, 1
      %s1820 = smul.addr %s1819, 8
      %s1821 = scalar_lea.vmem %s5, %s1820
      // Predicated region
      $region37: #{upconv_forward.4} parent=35 // pred_check
        %p1822 = pneg %p124
      $region38: #{upconv_forward.4} parent=35 // pred_check_branch
        %1824 = sbr.rel (%p1822) target = $region40
      $region39: #{upconv_forward.4} parent=35 // pred_region
        _
      $region40: #{upconv_forward.4} parent=35 // pred_fallthru
        _
      // Predicated region
      $region41: #{upconv_forward.4} parent=35 // pred_check
        %p1825 = pneg %p150
      $region42: #{upconv_forward.4} parent=35 // pred_check_branch
        %1827 = sbr.rel (%p1825) target = $region44
      $region43: #{upconv_forward.4} parent=35 // pred_region
        _
      $region44: #{upconv_forward.4} parent=35 // pred_fallthru
        _
    $region36: #{upconv_forward.4} parent=5 // pred_fallthru
      _
    %p1828 = scmp.le.s32.totalorder 2, %s12
    // Predicated region
    $region45: #{upconv_forward.4} parent=5 // pred_check
      %p1829 = pneg %p1828
    $region46: #{upconv_forward.4} parent=5 // pred_check_branch
      %1831 = sbr.rel (%p1829) target = $region48
    $region47: #{upconv_forward.4} parent=5 // pred_region
      %s1832 = ssub.s32 %s12, 2
      // Predicated region
      $region49: #{upconv_forward.4} parent=47 // pred_check
        %p1833 = pneg %p130
      $region50: #{upconv_forward.4} parent=47 // pred_check_branch
        %1835 = sbr.rel (%p1833) target = $region52
      $region51: #{upconv_forward.4} parent=47 // pred_region
        %p1836 = scmp.lt.s32.totalorder %s18, 1
        %s1837 = scalar_select %p1836, %s18, 1
        %s1838 = smul.addr %s1837, 8
        %s1839 = smul.addr %s1838, 8
        %s1840 = scalar_lea.vmem %s4, %s1839
      $region52: #{upconv_forward.4} parent=47 // pred_fallthru
        _
      // Predicated region
      $region53: #{upconv_forward.4} parent=47 // pred_check
        %p1841 = pneg %p156
      $region54: #{upconv_forward.4} parent=47 // pred_check_branch
        %1843 = sbr.rel (%p1841) target = $region56
      $region55: #{upconv_forward.4} parent=47 // pred_region
        %p1844 = scmp.lt.s32.totalorder %s18, 1
        %s1845 = scalar_select %p1844, %s18, 1
        %s1846 = smul.addr %s1845, 8
        %s1847 = scalar_lea.vmem %s5, %s1846
      $region56: #{upconv_forward.4} parent=47 // pred_fallthru
        _
    $region48: #{upconv_forward.4} parent=5 // pred_fallthru
      _
  $region6: #{upconv_forward.4} parent=0 // loop_footer
    %s16 = sadd.s32 1, %s12
  $region7: #{upconv_forward.4} parent=0 // loop_footer_branch
    %11 = sbr.rel target = $region3
  $region8: #{upconv_forward.4} parent=0 // loop_exit
    _

</llo_original>
